<compile_context>
chip_gen: v7x
topology: tpu7x:2x2x1
jax: 0.10.0
libtpu: 0.0.40
codegen_flags: <defaults>
</compile_context>

<pallas_src>
import jax
import jax.numpy as jnp
from jax import lax
from jax.experimental import pallas as pl
from jax.experimental.pallas import tpu as pltpu

INPUT_SIZE = 9
HIDDEN = 128
NUM_LAYERS = 2
IN_PAD = 128          # layer-0 input features zero-padded to the lane width (exact)
NUM_CLASSES = 2
NC_PAD = 128          # fc output padded to a lane-dense width
NEG = -1e30           # "minus infinity" that stays NaN-free through exp()


# ----------------------------------------------------------------------------
# Fused kernel: stacked LSTM + online-softmax attention + fc head.
# Grid: (num_time_chunks,)  -- sequential ("arbitrary") recurrence over time.
# ----------------------------------------------------------------------------
def _make_fused_kernel(T, Tc, nc, BP, H):
    G = 4 * H
    masked = (nc * Tc) > T   # whether padded timesteps exist

    def kernel(x_ref, wih0_ref, whh0_ref, b0_ref, w1_ref, b1_ref,
               wa_ref, ba_ref, wfc_ref, bfc_ref,
               out_ref, attn_ref,
               g0_scr, h_scr, c_scr, m_scr, l_scr, acc_scr, sc_scr):
        c_idx = pl.program_id(0)

        @pl.when(c_idx == 0)
        def _init():
            h_scr[...] = jnp.zeros_like(h_scr)
            c_scr[...] = jnp.zeros_like(c_scr)
            m_scr[...] = jnp.full_like(m_scr, NEG)
            l_scr[...] = jnp.zeros_like(l_scr)
            acc_scr[...] = jnp.zeros_like(acc_scr)

        # ---- hoisted layer-0 input projection for the whole chunk: one MXU gemm.
        g0_scr[...] = (jnp.dot(x_ref[...], wih0_ref[...],
                               preferred_element_type=jnp.float32)
                       + b0_ref[...])

        whh0 = whh0_ref[...]      # (H, 4H)
        w1 = w1_ref[...]          # (2H, 4H)  -- [W_ih_l1; W_hh_l1] stacked
        b1 = b1_ref[...]          # (1, 4H)
        wa = wa_ref[...]          # (1, H)
        ba = ba_ref[...]          # (1, 1)

        # load carried state into values (kept in vregs across the unrolled loop)
        h0 = h_scr[0]
        c0 = c_scr[0]
        h1 = h_scr[1]
        c1 = c_scr[1]
        m_run = m_scr[...]
        l_run = l_scr[...]
        acc = acc_scr[...]

        lane_ids = lax.broadcasted_iota(jnp.int32, (BP, Tc), 1)
        scores_chunk = jnp.full((BP, Tc), NEG, jnp.float32)

        def gates(pre):
            ii = jax.nn.sigmoid(pre[:, 0:H])
            ff = jax.nn.sigmoid(pre[:, H:2 * H])
            gg = jnp.tanh(pre[:, 2 * H:3 * H])
            oo = jax.nn.sigmoid(pre[:, 3 * H:4 * H])
            return ii, ff, gg, oo

        # static unroll over the (small) time chunk: all indices are compile-time.
        for s in range(Tc):
            # ---- layer 0 (input gemm already hoisted above)
            pre0 = (g0_scr[s * BP:(s + 1) * BP, :]
                    + jnp.dot(h0, whh0, preferred_element_type=jnp.float32))
            i0, f0, gg0, o0 = gates(pre0)
            c0 = f0 * c0 + i0 * gg0
            h0 = o0 * jnp.tanh(c0)
            # ---- layer 1: single fused gemm on the concatenated hidden states
            h01 = jnp.concatenate([h0, h1], axis=-1)                 # (BP, 2H)
            pre1 = jnp.dot(h01, w1, preferred_element_type=jnp.float32) + b1
            i1, f1, gg1, o1 = gates(pre1)
            c1 = f1 * c1 + i1 * gg1
            h1 = o1 * jnp.tanh(c1)
            # ---- attention score for this timestep (softmax over time is online)
            s_t = jnp.sum(h1 * wa, axis=-1, keepdims=True) + ba      # (BP, 1)
            if masked:
                t_global = c_idx * Tc + s
                s_t = jnp.where(t_global < T, s_t, NEG)
            m_new = jnp.maximum(m_run, s_t)
            alpha = jnp.exp(m_run - m_new)
            p = jnp.exp(s_t - m_new)
            l_run = alpha * l_run + p
            acc = alpha * acc + p * h1
            m_run = m_new
            scores_chunk = jnp.where(lane_ids == s, s_t, scores_chunk)

        # ---- carry state to the next chunk
        h_scr[0] = h0
        c_scr[0] = c0
        h_scr[1] = h1
        c_scr[1] = c1
        m_scr[...] = m_run
        l_scr[...] = l_run
        acc_scr[...] = acc
        sc_scr[c_idx] = scores_chunk                                  # (BP, Tc)

        # ---- finalize: softmax-normalized attention weights + fc head
        @pl.when(c_idx == nc - 1)
        def _finalize():
            inv_l = 1.0 / l_run                                       # (BP, 1) exact
            context = acc * inv_l                                     # (BP, H)
            out_ref[...] = (jnp.dot(context, wfc_ref[...],
                                    preferred_element_type=jnp.float32)
                            + bfc_ref[...])                           # (BP, NC_PAD)
            attn_ref[...] = jnp.exp(sc_scr[...] - m_run) * inv_l      # (nc, BP, Tc)

    return kernel


# ----------------------------------------------------------------------------
# Wrapper
# ----------------------------------------------------------------------------
def attention_lstm_forward(x, p, *, time_chunk=32):
    """x: (B, T, INPUT_SIZE) float32.  Returns (output (B,2), attn_weights (B,T,1))."""
    B, T, F = x.shape
    H = HIDDEN
    BP = max(8, ((B + 7) // 8) * 8)            # pad batch to full sublanes
    Tc = max(1, min(T, time_chunk))            # timesteps handled per grid step
    nc = -(-T // Tc)                           # number of time chunks
    T_grid = nc * Tc

    # time-major, batch/feature/time padded, flattened to (T_grid*BP, IN_PAD)
    x_tm = jnp.transpose(x.astype(jnp.float32), (1, 0, 2))           # (T, B, F)
    x_tm = jnp.pad(x_tm, ((0, T_grid - T), (0, BP - B), (0, IN_PAD - F)))
    x_flat = x_tm.reshape(T_grid * BP, IN_PAD)

    # weights (zero-padded where needed -> results stay exact)
    wih0 = jnp.pad(p["w_ih_l0"].T, ((0, IN_PAD - F), (0, 0)))        # (IN_PAD, 4H)
    whh0 = p["w_hh_l0"].T                                            # (H, 4H)
    b0 = (p["b_ih_l0"] + p["b_hh_l0"]).reshape(1, 4 * H)
    w1 = jnp.concatenate([p["w_ih_l1"].T, p["w_hh_l1"].T], axis=0)   # (2H, 4H)
    b1 = (p["b_ih_l1"] + p["b_hh_l1"]).reshape(1, 4 * H)
    wa = p["attn_w"].reshape(1, H)
    ba = p["attn_b"].reshape(1, 1)
    wfc = jnp.pad(p["fc_w"].T, ((0, 0), (0, NC_PAD - NUM_CLASSES)))  # (H, NC_PAD)
    bfc = jnp.pad(p["fc_b"].reshape(1, NUM_CLASSES),
                  ((0, 0), (0, NC_PAD - NUM_CLASSES)))               # (1, NC_PAD)

    kernel = _make_fused_kernel(T, Tc, nc, BP, H)
    const = lambda c: (0, 0)

    out_pad, attn_chunks = pl.pallas_call(
        kernel,
        out_shape=(jax.ShapeDtypeStruct((BP, NC_PAD), jnp.float32),
                   jax.ShapeDtypeStruct((nc, BP, Tc), jnp.float32)),
        grid=(nc,),
        in_specs=[
            pl.BlockSpec((Tc * BP, IN_PAD), lambda c: (c, 0)),   # x (per time chunk)
            pl.BlockSpec((IN_PAD, 4 * H), const),                # wih0
            pl.BlockSpec((H, 4 * H), const),                     # whh0
            pl.BlockSpec((1, 4 * H), const),                     # b0
            pl.BlockSpec((2 * H, 4 * H), const),                 # w1 = [wih1; whh1]
            pl.BlockSpec((1, 4 * H), const),                     # b1
            pl.BlockSpec((1, H), const),                         # wa
            pl.BlockSpec((1, 1), const),                         # ba
            pl.BlockSpec((H, NC_PAD), const),                    # wfc
            pl.BlockSpec((1, NC_PAD), const),                    # bfc
        ],
        out_specs=(pl.BlockSpec((BP, NC_PAD), lambda c: (0, 0)),
                   pl.BlockSpec((nc, BP, Tc), lambda c: (0, 0, 0))),
        scratch_shapes=[
            pltpu.VMEM((Tc * BP, 4 * H), jnp.float32),           # hoisted layer-0 gates
            pltpu.VMEM((NUM_LAYERS, BP, H), jnp.float32),        # h carry
            pltpu.VMEM((NUM_LAYERS, BP, H), jnp.float32),        # c carry
            pltpu.VMEM((BP, 1), jnp.float32),                    # running max
            pltpu.VMEM((BP, 1), jnp.float32),                    # running denom
            pltpu.VMEM((BP, H), jnp.float32),                    # running context
            pltpu.VMEM((nc, BP, Tc), jnp.float32),               # raw scores
        ],
        compiler_params=pltpu.CompilerParams(
            dimension_semantics=("arbitrary",)),                 # time recurrence
    )(x_flat, wih0, whh0, b0, w1, b1, wa, ba, wfc, bfc)

    out = out_pad[:B, :NUM_CLASSES]
    attn = jnp.transpose(attn_chunks, (1, 0, 2)).reshape(BP, T_grid)[:B, :T]
    return out, attn[:, :, None]                                 # match torch (B,T,1)


# ----------------------------------------------------------------------------
# Pure-JAX reference (mirrors the PyTorch forward exactly)
# ----------------------------------------------------------------------------
def reference_forward(x, p):
    def layer(x_seq, wih, whh, bih, bhh):
        B = x_seq.shape[0]
        H = whh.shape[1]

        def step(carry, x_t):
            h, c = carry
            g = x_t @ wih.T + h @ whh.T + bih + bhh
            i, f, gg, o = jnp.split(g, 4, axis=-1)
            i, f, o = jax.nn.sigmoid(i), jax.nn.sigmoid(f), jax.nn.sigmoid(o)
            gg = jnp.tanh(gg)
            c = f * c + i * gg
            h = o * jnp.tanh(c)
            return (h, c), h

        init = (jnp.zeros((B, H), jnp.float32), jnp.zeros((B, H), jnp.float32))
        _, hs = lax.scan(step, init, jnp.transpose(x_seq, (1, 0, 2)))
        return jnp.transpose(hs, (1, 0, 2))

    y = layer(x, p["w_ih_l0"], p["w_hh_l0"], p["b_ih_l0"], p["b_hh_l0"])
    y = layer(y, p["w_ih_l1"], p["w_hh_l1"], p["b_ih_l1"], p["b_hh_l1"])
    scores = y @ p["attn_w"].T + p["attn_b"]                      # (B, T, 1)
    attn = jax.nn.softmax(scores, axis=1)
    context = jnp.sum(y * attn, axis=1)
    out = context @ p["fc_w"].T + p["fc_b"]
    return out, attn


# ----------------------------------------------------------------------------
def init_params(key):
    H = HIDDEN
    bound = 1.0 / jnp.sqrt(H)
    ks = jax.random.split(key, 12)
    u = lambda k, shape: jax.random.uniform(k, shape, jnp.float32, -bound, bound)
    return {
        "w_ih_l0": u(ks[0], (4 * H, INPUT_SIZE)),
        "w_hh_l0": u(ks[1], (4 * H, H)),
        "b_ih_l0": u(ks[2], (4 * H,)),
        "b_hh_l0": u(ks[3], (4 * H,)),
        "w_ih_l1": u(ks[4], (4 * H, H)),
        "w_hh_l1": u(ks[5], (4 * H, H)),
        "b_ih_l1": u(ks[6], (4 * H,)),
        "b_hh_l1": u(ks[7], (4 * H,)),
        "attn_w": u(ks[8], (1, H)),
        "attn_b": u(ks[9], (1,)),
        "fc_w": u(ks[10], (NUM_CLASSES, H)),
        "fc_b": u(ks[11], (NUM_CLASSES,)),
    }


if __name__ == "__main__":
    key = jax.random.PRNGKey(0)
    k_param, k_x, k_x2 = jax.random.split(key, 3)
    params = init_params(k_param)

    # primary small-shape check (single time chunk)
    B, T = 2, 8
    x = jax.random.normal(k_x, (B, T, INPUT_SIZE), jnp.float32)
    out, attn = jax.block_until_ready(attention_lstm_forward(x, params))
    ref_out, ref_attn = jax.block_until_ready(reference_forward(x, params))
    assert out.shape == (B, NUM_CLASSES) and attn.shape == (B, T, 1)
    assert jnp.allclose(out, ref_out, rtol=1e-4, atol=1e-4)
    assert jnp.allclose(attn, ref_attn, rtol=1e-4, atol=1e-4)

    # secondary check: multiple time chunks + time/batch padding paths
    B2, T2 = 3, 40
    x2 = jax.random.normal(k_x2, (B2, T2, INPUT_SIZE), jnp.float32)
    out2, attn2 = jax.block_until_ready(attention_lstm_forward(x2, params))
    ref_out2, ref_attn2 = jax.block_until_ready(reference_forward(x2, params))
    assert out2.shape == (B2, NUM_CLASSES) and attn2.shape == (B2, T2, 1)
    assert jnp.allclose(out2, ref_out2, rtol=1e-4, atol=1e-4)
    assert jnp.allclose(attn2, ref_attn2, rtol=1e-4, atol=1e-4)

    print("KERNEL_OK")
</pallas_src>

<mosaic_0001>
module attributes {stable_mosaic.version = 11 : i64} {
  func.func @kernel(%arg0: i32, %arg1: memref<64x128xf32, #tpu.memory_space<vmem>>, %arg2: memref<128x512xf32, #tpu.memory_space<vmem>>, %arg3: memref<128x512xf32, #tpu.memory_space<vmem>>, %arg4: memref<1x512xf32, #tpu.memory_space<vmem>>, %arg5: memref<256x512xf32, #tpu.memory_space<vmem>>, %arg6: memref<1x512xf32, #tpu.memory_space<vmem>>, %arg7: memref<1x128xf32, #tpu.memory_space<vmem>>, %arg8: memref<1x1xf32, #tpu.memory_space<vmem>>, %arg9: memref<128x128xf32, #tpu.memory_space<vmem>>, %arg10: memref<1x128xf32, #tpu.memory_space<vmem>>, %arg11: memref<8x128xf32, #tpu.memory_space<vmem>>, %arg12: memref<1x8x8xf32, #tpu.memory_space<vmem>>, %arg13: memref<64x512xf32, #tpu.memory_space<vmem>>, %arg14: memref<2x8x128xf32, #tpu.memory_space<vmem>>, %arg15: memref<2x8x128xf32, #tpu.memory_space<vmem>>, %arg16: memref<8x1xf32, #tpu.memory_space<vmem>>, %arg17: memref<8x1xf32, #tpu.memory_space<vmem>>, %arg18: memref<8x128xf32, #tpu.memory_space<vmem>>, %arg19: memref<1x8x8xf32, #tpu.memory_space<vmem>>) attributes {dimension_semantics = [#tpu.dimension_semantics<arbitrary>], iteration_bounds = array<i64: 1>, scalar_prefetch = 0 : i64, scratch_operands = 7 : i64, tpu.core_type = #tpu.core_type<tc>, window_params = [{transform_indices = @transform_0, window_bounds = array<i64: 64, 128>}, {pipeline_mode = #tpu.pipeline_mode<synchronous>, transform_indices = @transform_1, window_bounds = array<i64: 128, 512>}, {pipeline_mode = #tpu.pipeline_mode<synchronous>, transform_indices = @transform_2, window_bounds = array<i64: 128, 512>}, {pipeline_mode = #tpu.pipeline_mode<synchronous>, transform_indices = @transform_3, window_bounds = array<i64: 1, 512>}, {pipeline_mode = #tpu.pipeline_mode<synchronous>, transform_indices = @transform_4, window_bounds = array<i64: 256, 512>}, {pipeline_mode = #tpu.pipeline_mode<synchronous>, transform_indices = @transform_5, window_bounds = array<i64: 1, 512>}, {pipeline_mode = #tpu.pipeline_mode<synchronous>, transform_indices = @transform_6, window_bounds = array<i64: 1, 128>}, {pipeline_mode = #tpu.pipeline_mode<synchronous>, transform_indices = @transform_7, window_bounds = array<i64: 1, 1>}, {pipeline_mode = #tpu.pipeline_mode<synchronous>, transform_indices = @transform_8, window_bounds = array<i64: 128, 128>}, {pipeline_mode = #tpu.pipeline_mode<synchronous>, transform_indices = @transform_9, window_bounds = array<i64: 1, 128>}, {pipeline_mode = #tpu.pipeline_mode<synchronous>, transform_indices = @transform_10, window_bounds = array<i64: 8, 128>}, {pipeline_mode = #tpu.pipeline_mode<synchronous>, transform_indices = @transform_11, window_bounds = array<i64: 1, 8, 8>}]} {
    %c0_i32 = arith.constant 0 : i32
    %0 = arith.cmpi eq, %arg0, %c0_i32 : i32
    %1 = arith.extui %0 : i1 to i32
    %c0_i32_0 = arith.constant 0 : i32
    %2 = arith.cmpi ne, %1, %c0_i32_0 : i32
    scf.if %2 {
      %cst_140 = arith.constant 0.000000e+00 : f32
      %690 = vector.broadcast %cst_140 : f32 to vector<2x8x128xf32>
      %c0_141 = arith.constant 0 : index
      %c0_142 = arith.constant 0 : index
      %c0_143 = arith.constant 0 : index
      %691 = vector.load %arg14[%c0_141, %c0_142, %c0_143] : memref<2x8x128xf32, #tpu.memory_space<vmem>>, vector<2x8x128xf32>
      tpu.vector_store %arg14[%c0_141, %c0_142, %c0_143], %690 {strides = array<i32>} : memref<2x8x128xf32, #tpu.memory_space<vmem>>, vector<2x8x128xf32>,
      %cst_144 = arith.constant 0.000000e+00 : f32
      %692 = vector.broadcast %cst_144 : f32 to vector<2x8x128xf32>
      %c0_145 = arith.constant 0 : index
      %c0_146 = arith.constant 0 : index
      %c0_147 = arith.constant 0 : index
      %693 = vector.load %arg15[%c0_145, %c0_146, %c0_147] : memref<2x8x128xf32, #tpu.memory_space<vmem>>, vector<2x8x128xf32>
      tpu.vector_store %arg15[%c0_145, %c0_146, %c0_147], %692 {strides = array<i32>} : memref<2x8x128xf32, #tpu.memory_space<vmem>>, vector<2x8x128xf32>,
      %cst_148 = arith.constant -1.000000e+30 : f32
      %694 = vector.broadcast %cst_148 : f32 to vector<8x1xf32>
      %c0_149 = arith.constant 0 : index
      %c0_150 = arith.constant 0 : index
      %695 = vector.load %arg16[%c0_149, %c0_150] : memref<8x1xf32, #tpu.memory_space<vmem>>, vector<8x1xf32>
      tpu.vector_store %arg16[%c0_149, %c0_150], %694 {strides = array<i32>} : memref<8x1xf32, #tpu.memory_space<vmem>>, vector<8x1xf32>,
      %cst_151 = arith.constant 0.000000e+00 : f32
      %696 = vector.broadcast %cst_151 : f32 to vector<8x1xf32>
      %c0_152 = arith.constant 0 : index
      %c0_153 = arith.constant 0 : index
      %697 = vector.load %arg17[%c0_152, %c0_153] : memref<8x1xf32, #tpu.memory_space<vmem>>, vector<8x1xf32>
      tpu.vector_store %arg17[%c0_152, %c0_153], %696 {strides = array<i32>} : memref<8x1xf32, #tpu.memory_space<vmem>>, vector<8x1xf32>,
      %cst_154 = arith.constant 0.000000e+00 : f32
      %698 = vector.broadcast %cst_154 : f32 to vector<8x128xf32>
      %c0_155 = arith.constant 0 : index
      %c0_156 = arith.constant 0 : index
      %699 = vector.load %arg18[%c0_155, %c0_156] : memref<8x128xf32, #tpu.memory_space<vmem>>, vector<8x128xf32>
      tpu.vector_store %arg18[%c0_155, %c0_156], %698 {strides = array<i32>} : memref<8x128xf32, #tpu.memory_space<vmem>>, vector<8x128xf32>,
    } else {
    }
    %c0 = arith.constant 0 : index
    %c0_1 = arith.constant 0 : index
    %3 = vector.load %arg1[%c0, %c0_1] : memref<64x128xf32, #tpu.memory_space<vmem>>, vector<64x128xf32>
    %c0_2 = arith.constant 0 : index
    %c0_3 = arith.constant 0 : index
    %4 = vector.load %arg2[%c0_2, %c0_3] : memref<128x512xf32, #tpu.memory_space<vmem>>, vector<128x512xf32>
    %cst = arith.constant dense<0.000000e+00> : vector<64x512xf32>
    %5 = tpu.matmul %3, %4, %cst {dimension_numbers = #tpu.dot_dimension_numbers<[1], [0], [0], [1], [0, 0, 1, 1], [], []>} : vector<64x128xf32>, vector<128x512xf32>, vector<64x512xf32> -> vector<64x512xf32>
    %c0_4 = arith.constant 0 : index
    %c0_5 = arith.constant 0 : index
    %6 = vector.load %arg4[%c0_4, %c0_5] : memref<1x512xf32, #tpu.memory_space<vmem>>, vector<1x512xf32>
    %7 = vector.broadcast %6 : vector<1x512xf32> to vector<64x512xf32>
    %8 = arith.addf %5, %7 : vector<64x512xf32>
    %c0_6 = arith.constant 0 : index
    %c0_7 = arith.constant 0 : index
    %9 = vector.load %arg13[%c0_6, %c0_7] : memref<64x512xf32, #tpu.memory_space<vmem>>, vector<64x512xf32>
    tpu.vector_store %arg13[%c0_6, %c0_7], %8 {strides = array<i32>} : memref<64x512xf32, #tpu.memory_space<vmem>>, vector<64x512xf32>,
    %c0_8 = arith.constant 0 : index
    %c0_9 = arith.constant 0 : index
    %10 = vector.load %arg3[%c0_8, %c0_9] : memref<128x512xf32, #tpu.memory_space<vmem>>, vector<128x512xf32>
    %c0_10 = arith.constant 0 : index
    %c0_11 = arith.constant 0 : index
    %11 = vector.load %arg5[%c0_10, %c0_11] : memref<256x512xf32, #tpu.memory_space<vmem>>, vector<256x512xf32>
    %c0_12 = arith.constant 0 : index
    %c0_13 = arith.constant 0 : index
    %12 = vector.load %arg6[%c0_12, %c0_13] : memref<1x512xf32, #tpu.memory_space<vmem>>, vector<1x512xf32>
    %c0_14 = arith.constant 0 : index
    %c0_15 = arith.constant 0 : index
    %13 = vector.load %arg7[%c0_14, %c0_15] : memref<1x128xf32, #tpu.memory_space<vmem>>, vector<1x128xf32>
    %c0_16 = arith.constant 0 : index
    %c0_17 = arith.constant 0 : index
    %14 = vector.load %arg8[%c0_16, %c0_17] : memref<1x1xf32, #tpu.memory_space<vmem>>, vector<1x1xf32>
    %c0_18 = arith.constant 0 : index
    %c0_19 = arith.constant 0 : index
    %c0_20 = arith.constant 0 : index
    %15 = vector.load %arg14[%c0_18, %c0_19, %c0_20] : memref<2x8x128xf32, #tpu.memory_space<vmem>>, vector<1x8x128xf32>
    %16 = vector.shape_cast %15 : vector<1x8x128xf32> to vector<8x128xf32>
    %c0_21 = arith.constant 0 : index
    %c0_22 = arith.constant 0 : index
    %c0_23 = arith.constant 0 : index
    %17 = vector.load %arg15[%c0_21, %c0_22, %c0_23] : memref<2x8x128xf32, #tpu.memory_space<vmem>>, vector<1x8x128xf32>
    %18 = vector.shape_cast %17 : vector<1x8x128xf32> to vector<8x128xf32>
    %c1 = arith.constant 1 : index
    %c0_24 = arith.constant 0 : index
    %c0_25 = arith.constant 0 : index
    %19 = vector.load %arg14[%c1, %c0_24, %c0_25] : memref<2x8x128xf32, #tpu.memory_space<vmem>>, vector<1x8x128xf32>
    %20 = vector.shape_cast %19 : vector<1x8x128xf32> to vector<8x128xf32>
    %c1_26 = arith.constant 1 : index
    %c0_27 = arith.constant 0 : index
    %c0_28 = arith.constant 0 : index
    %21 = vector.load %arg15[%c1_26, %c0_27, %c0_28] : memref<2x8x128xf32, #tpu.memory_space<vmem>>, vector<1x8x128xf32>
    %22 = vector.shape_cast %21 : vector<1x8x128xf32> to vector<8x128xf32>
    %c0_29 = arith.constant 0 : index
    %c0_30 = arith.constant 0 : index
    %23 = vector.load %arg16[%c0_29, %c0_30] : memref<8x1xf32, #tpu.memory_space<vmem>>, vector<8x1xf32>
    %c0_31 = arith.constant 0 : index
    %c0_32 = arith.constant 0 : index
    %24 = vector.load %arg17[%c0_31, %c0_32] : memref<8x1xf32, #tpu.memory_space<vmem>>, vector<8x1xf32>
    %c0_33 = arith.constant 0 : index
    %c0_34 = arith.constant 0 : index
    %25 = vector.load %arg18[%c0_33, %c0_34] : memref<8x128xf32, #tpu.memory_space<vmem>>, vector<8x128xf32>
    %26 = tpu.iota {dimensions = array<i32: 1>} : vector<8x8xi32>
    %cst_35 = arith.constant -1.000000e+30 : f32
    %27 = vector.broadcast %cst_35 : f32 to vector<8x8xf32>
    %c0_36 = arith.constant 0 : index
    %c0_37 = arith.constant 0 : index
    %28 = vector.load %arg13[%c0_36, %c0_37] : memref<64x512xf32, #tpu.memory_space<vmem>>, vector<8x512xf32>
    %cst_38 = arith.constant dense<0.000000e+00> : vector<8x512xf32>
    %29 = tpu.matmul %16, %10, %cst_38 {dimension_numbers = #tpu.dot_dimension_numbers<[1], [0], [0], [1], [0, 0, 1, 1], [], []>} : vector<8x128xf32>, vector<128x512xf32>, vector<8x512xf32> -> vector<8x512xf32>
    %30 = arith.addf %28, %29 : vector<8x512xf32>
    %31 = vector.extract_strided_slice %30 {offsets = [0, 0], sizes = [8, 128], strides = [1, 1]} : vector<8x512xf32> to vector<8x128xf32>
    %32 = arith.negf %31 : vector<8x128xf32>
    %33 = math.exp %32 : vector<8x128xf32>
    %cst_39 = arith.constant 1.000000e+00 : f32
    %34 = vector.broadcast %cst_39 : f32 to vector<8x128xf32>
    %35 = arith.addf %34, %33 : vector<8x128xf32>
    %36 = arith.divf %34, %35 : vector<8x128xf32>
    %37 = vector.extract_strided_slice %30 {offsets = [0, 128], sizes = [8, 128], strides = [1, 1]} : vector<8x512xf32> to vector<8x128xf32>
    %38 = arith.negf %37 : vector<8x128xf32>
    %39 = math.exp %38 : vector<8x128xf32>
    %cst_40 = arith.constant 1.000000e+00 : f32
    %40 = vector.broadcast %cst_40 : f32 to vector<8x128xf32>
    %41 = arith.addf %40, %39 : vector<8x128xf32>
    %42 = arith.divf %40, %41 : vector<8x128xf32>
    %43 = vector.extract_strided_slice %30 {offsets = [0, 256], sizes = [8, 128], strides = [1, 1]} : vector<8x512xf32> to vector<8x128xf32>
    %44 = math.tanh %43 : vector<8x128xf32>
    %45 = vector.extract_strided_slice %30 {offsets = [0, 384], sizes = [8, 128], strides = [1, 1]} : vector<8x512xf32> to vector<8x128xf32>
    %46 = arith.negf %45 : vector<8x128xf32>
    %47 = math.exp %46 : vector<8x128xf32>
    %cst_41 = arith.constant 1.000000e+00 : f32
    %48 = vector.broadcast %cst_41 : f32 to vector<8x128xf32>
    %49 = arith.addf %48, %47 : vector<8x128xf32>
    %50 = arith.divf %48, %49 : vector<8x128xf32>
    %51 = arith.mulf %42, %18 : vector<8x128xf32>
    %52 = arith.mulf %36, %44 : vector<8x128xf32>
    %53 = arith.addf %51, %52 : vector<8x128xf32>
    %54 = math.tanh %53 : vector<8x128xf32>
    %55 = arith.mulf %50, %54 : vector<8x128xf32>
    %56 = tpu.concatenate %55, %20 in 1 : vector<8x128xf32>, vector<8x128xf32> -> vector<8x256xf32>
    %cst_42 = arith.constant dense<0.000000e+00> : vector<8x512xf32>
    %57 = tpu.matmul %56, %11, %cst_42 {dimension_numbers = #tpu.dot_dimension_numbers<[1], [0], [0], [1], [0, 0, 1, 1], [], []>} : vector<8x256xf32>, vector<256x512xf32>, vector<8x512xf32> -> vector<8x512xf32>
    %58 = vector.broadcast %12 : vector<1x512xf32> to vector<8x512xf32>
    %59 = arith.addf %57, %58 : vector<8x512xf32>
    %60 = vector.extract_strided_slice %59 {offsets = [0, 0], sizes = [8, 128], strides = [1, 1]} : vector<8x512xf32> to vector<8x128xf32>
    %61 = arith.negf %60 : vector<8x128xf32>
    %62 = math.exp %61 : vector<8x128xf32>
    %cst_43 = arith.constant 1.000000e+00 : f32
    %63 = vector.broadcast %cst_43 : f32 to vector<8x128xf32>
    %64 = arith.addf %63, %62 : vector<8x128xf32>
    %65 = arith.divf %63, %64 : vector<8x128xf32>
    %66 = vector.extract_strided_slice %59 {offsets = [0, 128], sizes = [8, 128], strides = [1, 1]} : vector<8x512xf32> to vector<8x128xf32>
    %67 = arith.negf %66 : vector<8x128xf32>
    %68 = math.exp %67 : vector<8x128xf32>
    %cst_44 = arith.constant 1.000000e+00 : f32
    %69 = vector.broadcast %cst_44 : f32 to vector<8x128xf32>
    %70 = arith.addf %69, %68 : vector<8x128xf32>
    %71 = arith.divf %69, %70 : vector<8x128xf32>
    %72 = vector.extract_strided_slice %59 {offsets = [0, 256], sizes = [8, 128], strides = [1, 1]} : vector<8x512xf32> to vector<8x128xf32>
    %73 = math.tanh %72 : vector<8x128xf32>
    %74 = vector.extract_strided_slice %59 {offsets = [0, 384], sizes = [8, 128], strides = [1, 1]} : vector<8x512xf32> to vector<8x128xf32>
    %75 = arith.negf %74 : vector<8x128xf32>
    %76 = math.exp %75 : vector<8x128xf32>
    %cst_45 = arith.constant 1.000000e+00 : f32
    %77 = vector.broadcast %cst_45 : f32 to vector<8x128xf32>
    %78 = arith.addf %77, %76 : vector<8x128xf32>
    %79 = arith.divf %77, %78 : vector<8x128xf32>
    %80 = arith.mulf %71, %22 : vector<8x128xf32>
    %81 = arith.mulf %65, %73 : vector<8x128xf32>
    %82 = arith.addf %80, %81 : vector<8x128xf32>
    %83 = math.tanh %82 : vector<8x128xf32>
    %84 = arith.mulf %79, %83 : vector<8x128xf32>
    %85 = vector.broadcast %13 : vector<1x128xf32> to vector<8x128xf32>
    %86 = arith.mulf %84, %85 : vector<8x128xf32>
    %cst_46 = arith.constant dense<0.000000e+00> : vector<8xf32>
    %87 = vector.multi_reduction <add>, %86, %cst_46 [1] : vector<8x128xf32> to vector<8xf32>
    %88 = vector.shape_cast %87 : vector<8xf32> to vector<8x1xf32>
    %89 = vector.broadcast %14 : vector<1x1xf32> to vector<8x1xf32>
    %90 = arith.addf %88, %89 : vector<8x1xf32>
    %91 = arith.maximumf %23, %90 : vector<8x1xf32>
    %92 = arith.subf %23, %91 : vector<8x1xf32>
    %93 = math.exp %92 : vector<8x1xf32>
    %94 = arith.subf %90, %91 : vector<8x1xf32>
    %95 = math.exp %94 : vector<8x1xf32>
    %96 = arith.mulf %93, %24 : vector<8x1xf32>
    %97 = arith.addf %96, %95 : vector<8x1xf32>
    %98 = vector.broadcast %93 : vector<8x1xf32> to vector<8x128xf32>
    %99 = arith.mulf %98, %25 : vector<8x128xf32>
    %100 = vector.broadcast %95 : vector<8x1xf32> to vector<8x128xf32>
    %101 = arith.mulf %100, %84 : vector<8x128xf32>
    %102 = arith.addf %99, %101 : vector<8x128xf32>
    %c0_i32_47 = arith.constant 0 : i32
    %103 = vector.broadcast %c0_i32_47 : i32 to vector<8x8xi32>
    %104 = arith.cmpi eq, %26, %103 : vector<8x8xi32>
    %105 = vector.shape_cast %90 : vector<8x1xf32> to vector<8x1xf32>
    %106 = vector.broadcast %105 : vector<8x1xf32> to vector<8x8xf32>
    %107 = arith.select %104, %106, %27 : vector<8x8xi1>, vector<8x8xf32>
    %c8 = arith.constant 8 : index
    %c0_48 = arith.constant 0 : index
    %108 = vector.load %arg13[%c8, %c0_48] : memref<64x512xf32, #tpu.memory_space<vmem>>, vector<8x512xf32>
    %cst_49 = arith.constant dense<0.000000e+00> : vector<8x512xf32>
    %109 = tpu.matmul %55, %10, %cst_49 {dimension_numbers = #tpu.dot_dimension_numbers<[1], [0], [0], [1], [0, 0, 1, 1], [], []>} : vector<8x128xf32>, vector<128x512xf32>, vector<8x512xf32> -> vector<8x512xf32>
    %110 = arith.addf %108, %109 : vector<8x512xf32>
    %111 = vector.extract_strided_slice %110 {offsets = [0, 0], sizes = [8, 128], strides = [1, 1]} : vector<8x512xf32> to vector<8x128xf32>
    %112 = arith.negf %111 : vector<8x128xf32>
    %113 = math.exp %112 : vector<8x128xf32>
    %cst_50 = arith.constant 1.000000e+00 : f32
    %114 = vector.broadcast %cst_50 : f32 to vector<8x128xf32>
    %115 = arith.addf %114, %113 : vector<8x128xf32>
    %116 = arith.divf %114, %115 : vector<8x128xf32>
    %117 = vector.extract_strided_slice %110 {offsets = [0, 128], sizes = [8, 128], strides = [1, 1]} : vector<8x512xf32> to vector<8x128xf32>
    %118 = arith.negf %117 : vector<8x128xf32>
    %119 = math.exp %118 : vector<8x128xf32>
    %cst_51 = arith.constant 1.000000e+00 : f32
    %120 = vector.broadcast %cst_51 : f32 to vector<8x128xf32>
    %121 = arith.addf %120, %119 : vector<8x128xf32>
    %122 = arith.divf %120, %121 : vector<8x128xf32>
    %123 = vector.extract_strided_slice %110 {offsets = [0, 256], sizes = [8, 128], strides = [1, 1]} : vector<8x512xf32> to vector<8x128xf32>
    %124 = math.tanh %123 : vector<8x128xf32>
    %125 = vector.extract_strided_slice %110 {offsets = [0, 384], sizes = [8, 128], strides = [1, 1]} : vector<8x512xf32> to vector<8x128xf32>
    %126 = arith.negf %125 : vector<8x128xf32>
    %127 = math.exp %126 : vector<8x128xf32>
    %cst_52 = arith.constant 1.000000e+00 : f32
    %128 = vector.broadcast %cst_52 : f32 to vector<8x128xf32>
    %129 = arith.addf %128, %127 : vector<8x128xf32>
    %130 = arith.divf %128, %129 : vector<8x128xf32>
    %131 = arith.mulf %122, %53 : vector<8x128xf32>
    %132 = arith.mulf %116, %124 : vector<8x128xf32>
    %133 = arith.addf %131, %132 : vector<8x128xf32>
    %134 = math.tanh %133 : vector<8x128xf32>
    %135 = arith.mulf %130, %134 : vector<8x128xf32>
    %136 = tpu.concatenate %135, %84 in 1 : vector<8x128xf32>, vector<8x128xf32> -> vector<8x256xf32>
    %cst_53 = arith.constant dense<0.000000e+00> : vector<8x512xf32>
    %137 = tpu.matmul %136, %11, %cst_53 {dimension_numbers = #tpu.dot_dimension_numbers<[1], [0], [0], [1], [0, 0, 1, 1], [], []>} : vector<8x256xf32>, vector<256x512xf32>, vector<8x512xf32> -> vector<8x512xf32>
    %138 = vector.broadcast %12 : vector<1x512xf32> to vector<8x512xf32>
    %139 = arith.addf %137, %138 : vector<8x512xf32>
    %140 = vector.extract_strided_slice %139 {offsets = [0, 0], sizes = [8, 128], strides = [1, 1]} : vector<8x512xf32> to vector<8x128xf32>
    %141 = arith.negf %140 : vector<8x128xf32>
    %142 = math.exp %141 : vector<8x128xf32>
    %cst_54 = arith.constant 1.000000e+00 : f32
    %143 = vector.broadcast %cst_54 : f32 to vector<8x128xf32>
    %144 = arith.addf %143, %142 : vector<8x128xf32>
    %145 = arith.divf %143, %144 : vector<8x128xf32>
    %146 = vector.extract_strided_slice %139 {offsets = [0, 128], sizes = [8, 128], strides = [1, 1]} : vector<8x512xf32> to vector<8x128xf32>
    %147 = arith.negf %146 : vector<8x128xf32>
    %148 = math.exp %147 : vector<8x128xf32>
    %cst_55 = arith.constant 1.000000e+00 : f32
    %149 = vector.broadcast %cst_55 : f32 to vector<8x128xf32>
    %150 = arith.addf %149, %148 : vector<8x128xf32>
    %151 = arith.divf %149, %150 : vector<8x128xf32>
    %152 = vector.extract_strided_slice %139 {offsets = [0, 256], sizes = [8, 128], strides = [1, 1]} : vector<8x512xf32> to vector<8x128xf32>
    %153 = math.tanh %152 : vector<8x128xf32>
    %154 = vector.extract_strided_slice %139 {offsets = [0, 384], sizes = [8, 128], strides = [1, 1]} : vector<8x512xf32> to vector<8x128xf32>
    %155 = arith.negf %154 : vector<8x128xf32>
    %156 = math.exp %155 : vector<8x128xf32>
    %cst_56 = arith.constant 1.000000e+00 : f32
    %157 = vector.broadcast %cst_56 : f32 to vector<8x128xf32>
    %158 = arith.addf %157, %156 : vector<8x128xf32>
    %159 = arith.divf %157, %158 : vector<8x128xf32>
    %160 = arith.mulf %151, %82 : vector<8x128xf32>
    %161 = arith.mulf %145, %153 : vector<8x128xf32>
    %162 = arith.addf %160, %161 : vector<8x128xf32>
    %163 = math.tanh %162 : vector<8x128xf32>
    %164 = arith.mulf %159, %163 : vector<8x128xf32>
    %165 = vector.broadcast %13 : vector<1x128xf32> to vector<8x128xf32>
    %166 = arith.mulf %164, %165 : vector<8x128xf32>
    %cst_57 = arith.constant dense<0.000000e+00> : vector<8xf32>
    %167 = vector.multi_reduction <add>, %166, %cst_57 [1] : vector<8x128xf32> to vector<8xf32>
    %168 = vector.shape_cast %167 : vector<8xf32> to vector<8x1xf32>
    %169 = vector.broadcast %14 : vector<1x1xf32> to vector<8x1xf32>
    %170 = arith.addf %168, %169 : vector<8x1xf32>
    %171 = arith.maximumf %91, %170 : vector<8x1xf32>
    %172 = arith.subf %91, %171 : vector<8x1xf32>
    %173 = math.exp %172 : vector<8x1xf32>
    %174 = arith.subf %170, %171 : vector<8x1xf32>
    %175 = math.exp %174 : vector<8x1xf32>
    %176 = arith.mulf %173, %97 : vector<8x1xf32>
    %177 = arith.addf %176, %175 : vector<8x1xf32>
    %178 = vector.broadcast %173 : vector<8x1xf32> to vector<8x128xf32>
    %179 = arith.mulf %178, %102 : vector<8x128xf32>
    %180 = vector.broadcast %175 : vector<8x1xf32> to vector<8x128xf32>
    %181 = arith.mulf %180, %164 : vector<8x128xf32>
    %182 = arith.addf %179, %181 : vector<8x128xf32>
    %c1_i32 = arith.constant 1 : i32
    %183 = vector.broadcast %c1_i32 : i32 to vector<8x8xi32>
    %184 = arith.cmpi eq, %26, %183 : vector<8x8xi32>
    %185 = vector.shape_cast %170 : vector<8x1xf32> to vector<8x1xf32>
    %186 = vector.broadcast %185 : vector<8x1xf32> to vector<8x8xf32>
    %187 = arith.select %184, %186, %107 : vector<8x8xi1>, vector<8x8xf32>
    %c16 = arith.constant 16 : index
    %c0_58 = arith.constant 0 : index
    %188 = vector.load %arg13[%c16, %c0_58] : memref<64x512xf32, #tpu.memory_space<vmem>>, vector<8x512xf32>
    %cst_59 = arith.constant dense<0.000000e+00> : vector<8x512xf32>
    %189 = tpu.matmul %135, %10, %cst_59 {dimension_numbers = #tpu.dot_dimension_numbers<[1], [0], [0], [1], [0, 0, 1, 1], [], []>} : vector<8x128xf32>, vector<128x512xf32>, vector<8x512xf32> -> vector<8x512xf32>
    %190 = arith.addf %188, %189 : vector<8x512xf32>
    %191 = vector.extract_strided_slice %190 {offsets = [0, 0], sizes = [8, 128], strides = [1, 1]} : vector<8x512xf32> to vector<8x128xf32>
    %192 = arith.negf %191 : vector<8x128xf32>
    %193 = math.exp %192 : vector<8x128xf32>
    %cst_60 = arith.constant 1.000000e+00 : f32
    %194 = vector.broadcast %cst_60 : f32 to vector<8x128xf32>
    %195 = arith.addf %194, %193 : vector<8x128xf32>
    %196 = arith.divf %194, %195 : vector<8x128xf32>
    %197 = vector.extract_strided_slice %190 {offsets = [0, 128], sizes = [8, 128], strides = [1, 1]} : vector<8x512xf32> to vector<8x128xf32>
    %198 = arith.negf %197 : vector<8x128xf32>
    %199 = math.exp %198 : vector<8x128xf32>
    %cst_61 = arith.constant 1.000000e+00 : f32
    %200 = vector.broadcast %cst_61 : f32 to vector<8x128xf32>
    %201 = arith.addf %200, %199 : vector<8x128xf32>
    %202 = arith.divf %200, %201 : vector<8x128xf32>
    %203 = vector.extract_strided_slice %190 {offsets = [0, 256], sizes = [8, 128], strides = [1, 1]} : vector<8x512xf32> to vector<8x128xf32>
    %204 = math.tanh %203 : vector<8x128xf32>
    %205 = vector.extract_strided_slice %190 {offsets = [0, 384], sizes = [8, 128], strides = [1, 1]} : vector<8x512xf32> to vector<8x128xf32>
    %206 = arith.negf %205 : vector<8x128xf32>
    %207 = math.exp %206 : vector<8x128xf32>
    %cst_62 = arith.constant 1.000000e+00 : f32
    %208 = vector.broadcast %cst_62 : f32 to vector<8x128xf32>
    %209 = arith.addf %208, %207 : vector<8x128xf32>
    %210 = arith.divf %208, %209 : vector<8x128xf32>
    %211 = arith.mulf %202, %133 : vector<8x128xf32>
    %212 = arith.mulf %196, %204 : vector<8x128xf32>
    %213 = arith.addf %211, %212 : vector<8x128xf32>
    %214 = math.tanh %213 : vector<8x128xf32>
    %215 = arith.mulf %210, %214 : vector<8x128xf32>
    %216 = tpu.concatenate %215, %164 in 1 : vector<8x128xf32>, vector<8x128xf32> -> vector<8x256xf32>
    %cst_63 = arith.constant dense<0.000000e+00> : vector<8x512xf32>
    %217 = tpu.matmul %216, %11, %cst_63 {dimension_numbers = #tpu.dot_dimension_numbers<[1], [0], [0], [1], [0, 0, 1, 1], [], []>} : vector<8x256xf32>, vector<256x512xf32>, vector<8x512xf32> -> vector<8x512xf32>
    %218 = vector.broadcast %12 : vector<1x512xf32> to vector<8x512xf32>
    %219 = arith.addf %217, %218 : vector<8x512xf32>
    %220 = vector.extract_strided_slice %219 {offsets = [0, 0], sizes = [8, 128], strides = [1, 1]} : vector<8x512xf32> to vector<8x128xf32>
    %221 = arith.negf %220 : vector<8x128xf32>
    %222 = math.exp %221 : vector<8x128xf32>
    %cst_64 = arith.constant 1.000000e+00 : f32
    %223 = vector.broadcast %cst_64 : f32 to vector<8x128xf32>
    %224 = arith.addf %223, %222 : vector<8x128xf32>
    %225 = arith.divf %223, %224 : vector<8x128xf32>
    %226 = vector.extract_strided_slice %219 {offsets = [0, 128], sizes = [8, 128], strides = [1, 1]} : vector<8x512xf32> to vector<8x128xf32>
    %227 = arith.negf %226 : vector<8x128xf32>
    %228 = math.exp %227 : vector<8x128xf32>
    %cst_65 = arith.constant 1.000000e+00 : f32
    %229 = vector.broadcast %cst_65 : f32 to vector<8x128xf32>
    %230 = arith.addf %229, %228 : vector<8x128xf32>
    %231 = arith.divf %229, %230 : vector<8x128xf32>
    %232 = vector.extract_strided_slice %219 {offsets = [0, 256], sizes = [8, 128], strides = [1, 1]} : vector<8x512xf32> to vector<8x128xf32>
    %233 = math.tanh %232 : vector<8x128xf32>
    %234 = vector.extract_strided_slice %219 {offsets = [0, 384], sizes = [8, 128], strides = [1, 1]} : vector<8x512xf32> to vector<8x128xf32>
    %235 = arith.negf %234 : vector<8x128xf32>
    %236 = math.exp %235 : vector<8x128xf32>
    %cst_66 = arith.constant 1.000000e+00 : f32
    %237 = vector.broadcast %cst_66 : f32 to vector<8x128xf32>
    %238 = arith.addf %237, %236 : vector<8x128xf32>
    %239 = arith.divf %237, %238 : vector<8x128xf32>
    %240 = arith.mulf %231, %162 : vector<8x128xf32>
    %241 = arith.mulf %225, %233 : vector<8x128xf32>
    %242 = arith.addf %240, %241 : vector<8x128xf32>
    %243 = math.tanh %242 : vector<8x128xf32>
    %244 = arith.mulf %239, %243 : vector<8x128xf32>
    %245 = vector.broadcast %13 : vector<1x128xf32> to vector<8x128xf32>
    %246 = arith.mulf %244, %245 : vector<8x128xf32>
    %cst_67 = arith.constant dense<0.000000e+00> : vector<8xf32>
    %247 = vector.multi_reduction <add>, %246, %cst_67 [1] : vector<8x128xf32> to vector<8xf32>
    %248 = vector.shape_cast %247 : vector<8xf32> to vector<8x1xf32>
    %249 = vector.broadcast %14 : vector<1x1xf32> to vector<8x1xf32>
    %250 = arith.addf %248, %249 : vector<8x1xf32>
    %251 = arith.maximumf %171, %250 : vector<8x1xf32>
    %252 = arith.subf %171, %251 : vector<8x1xf32>
    %253 = math.exp %252 : vector<8x1xf32>
    %254 = arith.subf %250, %251 : vector<8x1xf32>
    %255 = math.exp %254 : vector<8x1xf32>
    %256 = arith.mulf %253, %177 : vector<8x1xf32>
    %257 = arith.addf %256, %255 : vector<8x1xf32>
    %258 = vector.broadcast %253 : vector<8x1xf32> to vector<8x128xf32>
    %259 = arith.mulf %258, %182 : vector<8x128xf32>
    %260 = vector.broadcast %255 : vector<8x1xf32> to vector<8x128xf32>
    %261 = arith.mulf %260, %244 : vector<8x128xf32>
    %262 = arith.addf %259, %261 : vector<8x128xf32>
    %c2_i32 = arith.constant 2 : i32
    %263 = vector.broadcast %c2_i32 : i32 to vector<8x8xi32>
    %264 = arith.cmpi eq, %26, %263 : vector<8x8xi32>
    %265 = vector.shape_cast %250 : vector<8x1xf32> to vector<8x1xf32>
    %266 = vector.broadcast %265 : vector<8x1xf32> to vector<8x8xf32>
    %267 = arith.select %264, %266, %187 : vector<8x8xi1>, vector<8x8xf32>
    %c24 = arith.constant 24 : index
    %c0_68 = arith.constant 0 : index
    %268 = vector.load %arg13[%c24, %c0_68] : memref<64x512xf32, #tpu.memory_space<vmem>>, vector<8x512xf32>
    %cst_69 = arith.constant dense<0.000000e+00> : vector<8x512xf32>
    %269 = tpu.matmul %215, %10, %cst_69 {dimension_numbers = #tpu.dot_dimension_numbers<[1], [0], [0], [1], [0, 0, 1, 1], [], []>} : vector<8x128xf32>, vector<128x512xf32>, vector<8x512xf32> -> vector<8x512xf32>
    %270 = arith.addf %268, %269 : vector<8x512xf32>
    %271 = vector.extract_strided_slice %270 {offsets = [0, 0], sizes = [8, 128], strides = [1, 1]} : vector<8x512xf32> to vector<8x128xf32>
    %272 = arith.negf %271 : vector<8x128xf32>
    %273 = math.exp %272 : vector<8x128xf32>
    %cst_70 = arith.constant 1.000000e+00 : f32
    %274 = vector.broadcast %cst_70 : f32 to vector<8x128xf32>
    %275 = arith.addf %274, %273 : vector<8x128xf32>
    %276 = arith.divf %274, %275 : vector<8x128xf32>
    %277 = vector.extract_strided_slice %270 {offsets = [0, 128], sizes = [8, 128], strides = [1, 1]} : vector<8x512xf32> to vector<8x128xf32>
    %278 = arith.negf %277 : vector<8x128xf32>
    %279 = math.exp %278 : vector<8x128xf32>
    %cst_71 = arith.constant 1.000000e+00 : f32
    %280 = vector.broadcast %cst_71 : f32 to vector<8x128xf32>
    %281 = arith.addf %280, %279 : vector<8x128xf32>
    %282 = arith.divf %280, %281 : vector<8x128xf32>
    %283 = vector.extract_strided_slice %270 {offsets = [0, 256], sizes = [8, 128], strides = [1, 1]} : vector<8x512xf32> to vector<8x128xf32>
    %284 = math.tanh %283 : vector<8x128xf32>
    %285 = vector.extract_strided_slice %270 {offsets = [0, 384], sizes = [8, 128], strides = [1, 1]} : vector<8x512xf32> to vector<8x128xf32>
    %286 = arith.negf %285 : vector<8x128xf32>
    %287 = math.exp %286 : vector<8x128xf32>
    %cst_72 = arith.constant 1.000000e+00 : f32
    %288 = vector.broadcast %cst_72 : f32 to vector<8x128xf32>
    %289 = arith.addf %288, %287 : vector<8x128xf32>
    %290 = arith.divf %288, %289 : vector<8x128xf32>
    %291 = arith.mulf %282, %213 : vector<8x128xf32>
    %292 = arith.mulf %276, %284 : vector<8x128xf32>
    %293 = arith.addf %291, %292 : vector<8x128xf32>
    %294 = math.tanh %293 : vector<8x128xf32>
    %295 = arith.mulf %290, %294 : vector<8x128xf32>
    %296 = tpu.concatenate %295, %244 in 1 : vector<8x128xf32>, vector<8x128xf32> -> vector<8x256xf32>
    %cst_73 = arith.constant dense<0.000000e+00> : vector<8x512xf32>
    %297 = tpu.matmul %296, %11, %cst_73 {dimension_numbers = #tpu.dot_dimension_numbers<[1], [0], [0], [1], [0, 0, 1, 1], [], []>} : vector<8x256xf32>, vector<256x512xf32>, vector<8x512xf32> -> vector<8x512xf32>
    %298 = vector.broadcast %12 : vector<1x512xf32> to vector<8x512xf32>
    %299 = arith.addf %297, %298 : vector<8x512xf32>
    %300 = vector.extract_strided_slice %299 {offsets = [0, 0], sizes = [8, 128], strides = [1, 1]} : vector<8x512xf32> to vector<8x128xf32>
    %301 = arith.negf %300 : vector<8x128xf32>
    %302 = math.exp %301 : vector<8x128xf32>
    %cst_74 = arith.constant 1.000000e+00 : f32
    %303 = vector.broadcast %cst_74 : f32 to vector<8x128xf32>
    %304 = arith.addf %303, %302 : vector<8x128xf32>
    %305 = arith.divf %303, %304 : vector<8x128xf32>
    %306 = vector.extract_strided_slice %299 {offsets = [0, 128], sizes = [8, 128], strides = [1, 1]} : vector<8x512xf32> to vector<8x128xf32>
    %307 = arith.negf %306 : vector<8x128xf32>
    %308 = math.exp %307 : vector<8x128xf32>
    %cst_75 = arith.constant 1.000000e+00 : f32
    %309 = vector.broadcast %cst_75 : f32 to vector<8x128xf32>
    %310 = arith.addf %309, %308 : vector<8x128xf32>
    %311 = arith.divf %309, %310 : vector<8x128xf32>
    %312 = vector.extract_strided_slice %299 {offsets = [0, 256], sizes = [8, 128], strides = [1, 1]} : vector<8x512xf32> to vector<8x128xf32>
    %313 = math.tanh %312 : vector<8x128xf32>
    %314 = vector.extract_strided_slice %299 {offsets = [0, 384], sizes = [8, 128], strides = [1, 1]} : vector<8x512xf32> to vector<8x128xf32>
    %315 = arith.negf %314 : vector<8x128xf32>
    %316 = math.exp %315 : vector<8x128xf32>
    %cst_76 = arith.constant 1.000000e+00 : f32
    %317 = vector.broadcast %cst_76 : f32 to vector<8x128xf32>
    %318 = arith.addf %317, %316 : vector<8x128xf32>
    %319 = arith.divf %317, %318 : vector<8x128xf32>
    %320 = arith.mulf %311, %242 : vector<8x128xf32>
    %321 = arith.mulf %305, %313 : vector<8x128xf32>
    %322 = arith.addf %320, %321 : vector<8x128xf32>
    %323 = math.tanh %322 : vector<8x128xf32>
    %324 = arith.mulf %319, %323 : vector<8x128xf32>
    %325 = vector.broadcast %13 : vector<1x128xf32> to vector<8x128xf32>
    %326 = arith.mulf %324, %325 : vector<8x128xf32>
    %cst_77 = arith.constant dense<0.000000e+00> : vector<8xf32>
    %327 = vector.multi_reduction <add>, %326, %cst_77 [1] : vector<8x128xf32> to vector<8xf32>
    %328 = vector.shape_cast %327 : vector<8xf32> to vector<8x1xf32>
    %329 = vector.broadcast %14 : vector<1x1xf32> to vector<8x1xf32>
    %330 = arith.addf %328, %329 : vector<8x1xf32>
    %331 = arith.maximumf %251, %330 : vector<8x1xf32>
    %332 = arith.subf %251, %331 : vector<8x1xf32>
    %333 = math.exp %332 : vector<8x1xf32>
    %334 = arith.subf %330, %331 : vector<8x1xf32>
    %335 = math.exp %334 : vector<8x1xf32>
    %336 = arith.mulf %333, %257 : vector<8x1xf32>
    %337 = arith.addf %336, %335 : vector<8x1xf32>
    %338 = vector.broadcast %333 : vector<8x1xf32> to vector<8x128xf32>
    %339 = arith.mulf %338, %262 : vector<8x128xf32>
    %340 = vector.broadcast %335 : vector<8x1xf32> to vector<8x128xf32>
    %341 = arith.mulf %340, %324 : vector<8x128xf32>
    %342 = arith.addf %339, %341 : vector<8x128xf32>
    %c3_i32 = arith.constant 3 : i32
    %343 = vector.broadcast %c3_i32 : i32 to vector<8x8xi32>
    %344 = arith.cmpi eq, %26, %343 : vector<8x8xi32>
    %345 = vector.shape_cast %330 : vector<8x1xf32> to vector<8x1xf32>
    %346 = vector.broadcast %345 : vector<8x1xf32> to vector<8x8xf32>
    %347 = arith.select %344, %346, %267 : vector<8x8xi1>, vector<8x8xf32>
    %c32 = arith.constant 32 : index
    %c0_78 = arith.constant 0 : index
    %348 = vector.load %arg13[%c32, %c0_78] : memref<64x512xf32, #tpu.memory_space<vmem>>, vector<8x512xf32>
    %cst_79 = arith.constant dense<0.000000e+00> : vector<8x512xf32>
    %349 = tpu.matmul %295, %10, %cst_79 {dimension_numbers = #tpu.dot_dimension_numbers<[1], [0], [0], [1], [0, 0, 1, 1], [], []>} : vector<8x128xf32>, vector<128x512xf32>, vector<8x512xf32> -> vector<8x512xf32>
    %350 = arith.addf %348, %349 : vector<8x512xf32>
    %351 = vector.extract_strided_slice %350 {offsets = [0, 0], sizes = [8, 128], strides = [1, 1]} : vector<8x512xf32> to vector<8x128xf32>
    %352 = arith.negf %351 : vector<8x128xf32>
    %353 = math.exp %352 : vector<8x128xf32>
    %cst_80 = arith.constant 1.000000e+00 : f32
    %354 = vector.broadcast %cst_80 : f32 to vector<8x128xf32>
    %355 = arith.addf %354, %353 : vector<8x128xf32>
    %356 = arith.divf %354, %355 : vector<8x128xf32>
    %357 = vector.extract_strided_slice %350 {offsets = [0, 128], sizes = [8, 128], strides = [1, 1]} : vector<8x512xf32> to vector<8x128xf32>
    %358 = arith.negf %357 : vector<8x128xf32>
    %359 = math.exp %358 : vector<8x128xf32>
    %cst_81 = arith.constant 1.000000e+00 : f32
    %360 = vector.broadcast %cst_81 : f32 to vector<8x128xf32>
    %361 = arith.addf %360, %359 : vector<8x128xf32>
    %362 = arith.divf %360, %361 : vector<8x128xf32>
    %363 = vector.extract_strided_slice %350 {offsets = [0, 256], sizes = [8, 128], strides = [1, 1]} : vector<8x512xf32> to vector<8x128xf32>
    %364 = math.tanh %363 : vector<8x128xf32>
    %365 = vector.extract_strided_slice %350 {offsets = [0, 384], sizes = [8, 128], strides = [1, 1]} : vector<8x512xf32> to vector<8x128xf32>
    %366 = arith.negf %365 : vector<8x128xf32>
    %367 = math.exp %366 : vector<8x128xf32>
    %cst_82 = arith.constant 1.000000e+00 : f32
    %368 = vector.broadcast %cst_82 : f32 to vector<8x128xf32>
    %369 = arith.addf %368, %367 : vector<8x128xf32>
    %370 = arith.divf %368, %369 : vector<8x128xf32>
    %371 = arith.mulf %362, %293 : vector<8x128xf32>
    %372 = arith.mulf %356, %364 : vector<8x128xf32>
    %373 = arith.addf %371, %372 : vector<8x128xf32>
    %374 = math.tanh %373 : vector<8x128xf32>
    %375 = arith.mulf %370, %374 : vector<8x128xf32>
    %376 = tpu.concatenate %375, %324 in 1 : vector<8x128xf32>, vector<8x128xf32> -> vector<8x256xf32>
    %cst_83 = arith.constant dense<0.000000e+00> : vector<8x512xf32>
    %377 = tpu.matmul %376, %11, %cst_83 {dimension_numbers = #tpu.dot_dimension_numbers<[1], [0], [0], [1], [0, 0, 1, 1], [], []>} : vector<8x256xf32>, vector<256x512xf32>, vector<8x512xf32> -> vector<8x512xf32>
    %378 = vector.broadcast %12 : vector<1x512xf32> to vector<8x512xf32>
    %379 = arith.addf %377, %378 : vector<8x512xf32>
    %380 = vector.extract_strided_slice %379 {offsets = [0, 0], sizes = [8, 128], strides = [1, 1]} : vector<8x512xf32> to vector<8x128xf32>
    %381 = arith.negf %380 : vector<8x128xf32>
    %382 = math.exp %381 : vector<8x128xf32>
    %cst_84 = arith.constant 1.000000e+00 : f32
    %383 = vector.broadcast %cst_84 : f32 to vector<8x128xf32>
    %384 = arith.addf %383, %382 : vector<8x128xf32>
    %385 = arith.divf %383, %384 : vector<8x128xf32>
    %386 = vector.extract_strided_slice %379 {offsets = [0, 128], sizes = [8, 128], strides = [1, 1]} : vector<8x512xf32> to vector<8x128xf32>
    %387 = arith.negf %386 : vector<8x128xf32>
    %388 = math.exp %387 : vector<8x128xf32>
    %cst_85 = arith.constant 1.000000e+00 : f32
    %389 = vector.broadcast %cst_85 : f32 to vector<8x128xf32>
    %390 = arith.addf %389, %388 : vector<8x128xf32>
    %391 = arith.divf %389, %390 : vector<8x128xf32>
    %392 = vector.extract_strided_slice %379 {offsets = [0, 256], sizes = [8, 128], strides = [1, 1]} : vector<8x512xf32> to vector<8x128xf32>
    %393 = math.tanh %392 : vector<8x128xf32>
    %394 = vector.extract_strided_slice %379 {offsets = [0, 384], sizes = [8, 128], strides = [1, 1]} : vector<8x512xf32> to vector<8x128xf32>
    %395 = arith.negf %394 : vector<8x128xf32>
    %396 = math.exp %395 : vector<8x128xf32>
    %cst_86 = arith.constant 1.000000e+00 : f32
    %397 = vector.broadcast %cst_86 : f32 to vector<8x128xf32>
    %398 = arith.addf %397, %396 : vector<8x128xf32>
    %399 = arith.divf %397, %398 : vector<8x128xf32>
    %400 = arith.mulf %391, %322 : vector<8x128xf32>
    %401 = arith.mulf %385, %393 : vector<8x128xf32>
    %402 = arith.addf %400, %401 : vector<8x128xf32>
    %403 = math.tanh %402 : vector<8x128xf32>
    %404 = arith.mulf %399, %403 : vector<8x128xf32>
    %405 = vector.broadcast %13 : vector<1x128xf32> to vector<8x128xf32>
    %406 = arith.mulf %404, %405 : vector<8x128xf32>
    %cst_87 = arith.constant dense<0.000000e+00> : vector<8xf32>
    %407 = vector.multi_reduction <add>, %406, %cst_87 [1] : vector<8x128xf32> to vector<8xf32>
    %408 = vector.shape_cast %407 : vector<8xf32> to vector<8x1xf32>
    %409 = vector.broadcast %14 : vector<1x1xf32> to vector<8x1xf32>
    %410 = arith.addf %408, %409 : vector<8x1xf32>
    %411 = arith.maximumf %331, %410 : vector<8x1xf32>
    %412 = arith.subf %331, %411 : vector<8x1xf32>
    %413 = math.exp %412 : vector<8x1xf32>
    %414 = arith.subf %410, %411 : vector<8x1xf32>
    %415 = math.exp %414 : vector<8x1xf32>
    %416 = arith.mulf %413, %337 : vector<8x1xf32>
    %417 = arith.addf %416, %415 : vector<8x1xf32>
    %418 = vector.broadcast %413 : vector<8x1xf32> to vector<8x128xf32>
    %419 = arith.mulf %418, %342 : vector<8x128xf32>
    %420 = vector.broadcast %415 : vector<8x1xf32> to vector<8x128xf32>
    %421 = arith.mulf %420, %404 : vector<8x128xf32>
    %422 = arith.addf %419, %421 : vector<8x128xf32>
    %c4_i32 = arith.constant 4 : i32
    %423 = vector.broadcast %c4_i32 : i32 to vector<8x8xi32>
    %424 = arith.cmpi eq, %26, %423 : vector<8x8xi32>
    %425 = vector.shape_cast %410 : vector<8x1xf32> to vector<8x1xf32>
    %426 = vector.broadcast %425 : vector<8x1xf32> to vector<8x8xf32>
    %427 = arith.select %424, %426, %347 : vector<8x8xi1>, vector<8x8xf32>
    %c40 = arith.constant 40 : index
    %c0_88 = arith.constant 0 : index
    %428 = vector.load %arg13[%c40, %c0_88] : memref<64x512xf32, #tpu.memory_space<vmem>>, vector<8x512xf32>
    %cst_89 = arith.constant dense<0.000000e+00> : vector<8x512xf32>
    %429 = tpu.matmul %375, %10, %cst_89 {dimension_numbers = #tpu.dot_dimension_numbers<[1], [0], [0], [1], [0, 0, 1, 1], [], []>} : vector<8x128xf32>, vector<128x512xf32>, vector<8x512xf32> -> vector<8x512xf32>
    %430 = arith.addf %428, %429 : vector<8x512xf32>
    %431 = vector.extract_strided_slice %430 {offsets = [0, 0], sizes = [8, 128], strides = [1, 1]} : vector<8x512xf32> to vector<8x128xf32>
    %432 = arith.negf %431 : vector<8x128xf32>
    %433 = math.exp %432 : vector<8x128xf32>
    %cst_90 = arith.constant 1.000000e+00 : f32
    %434 = vector.broadcast %cst_90 : f32 to vector<8x128xf32>
    %435 = arith.addf %434, %433 : vector<8x128xf32>
    %436 = arith.divf %434, %435 : vector<8x128xf32>
    %437 = vector.extract_strided_slice %430 {offsets = [0, 128], sizes = [8, 128], strides = [1, 1]} : vector<8x512xf32> to vector<8x128xf32>
    %438 = arith.negf %437 : vector<8x128xf32>
    %439 = math.exp %438 : vector<8x128xf32>
    %cst_91 = arith.constant 1.000000e+00 : f32
    %440 = vector.broadcast %cst_91 : f32 to vector<8x128xf32>
    %441 = arith.addf %440, %439 : vector<8x128xf32>
    %442 = arith.divf %440, %441 : vector<8x128xf32>
    %443 = vector.extract_strided_slice %430 {offsets = [0, 256], sizes = [8, 128], strides = [1, 1]} : vector<8x512xf32> to vector<8x128xf32>
    %444 = math.tanh %443 : vector<8x128xf32>
    %445 = vector.extract_strided_slice %430 {offsets = [0, 384], sizes = [8, 128], strides = [1, 1]} : vector<8x512xf32> to vector<8x128xf32>
    %446 = arith.negf %445 : vector<8x128xf32>
    %447 = math.exp %446 : vector<8x128xf32>
    %cst_92 = arith.constant 1.000000e+00 : f32
    %448 = vector.broadcast %cst_92 : f32 to vector<8x128xf32>
    %449 = arith.addf %448, %447 : vector<8x128xf32>
    %450 = arith.divf %448, %449 : vector<8x128xf32>
    %451 = arith.mulf %442, %373 : vector<8x128xf32>
    %452 = arith.mulf %436, %444 : vector<8x128xf32>
    %453 = arith.addf %451, %452 : vector<8x128xf32>
    %454 = math.tanh %453 : vector<8x128xf32>
    %455 = arith.mulf %450, %454 : vector<8x128xf32>
    %456 = tpu.concatenate %455, %404 in 1 : vector<8x128xf32>, vector<8x128xf32> -> vector<8x256xf32>
    %cst_93 = arith.constant dense<0.000000e+00> : vector<8x512xf32>
    %457 = tpu.matmul %456, %11, %cst_93 {dimension_numbers = #tpu.dot_dimension_numbers<[1], [0], [0], [1], [0, 0, 1, 1], [], []>} : vector<8x256xf32>, vector<256x512xf32>, vector<8x512xf32> -> vector<8x512xf32>
    %458 = vector.broadcast %12 : vector<1x512xf32> to vector<8x512xf32>
    %459 = arith.addf %457, %458 : vector<8x512xf32>
    %460 = vector.extract_strided_slice %459 {offsets = [0, 0], sizes = [8, 128], strides = [1, 1]} : vector<8x512xf32> to vector<8x128xf32>
    %461 = arith.negf %460 : vector<8x128xf32>
    %462 = math.exp %461 : vector<8x128xf32>
    %cst_94 = arith.constant 1.000000e+00 : f32
    %463 = vector.broadcast %cst_94 : f32 to vector<8x128xf32>
    %464 = arith.addf %463, %462 : vector<8x128xf32>
    %465 = arith.divf %463, %464 : vector<8x128xf32>
    %466 = vector.extract_strided_slice %459 {offsets = [0, 128], sizes = [8, 128], strides = [1, 1]} : vector<8x512xf32> to vector<8x128xf32>
    %467 = arith.negf %466 : vector<8x128xf32>
    %468 = math.exp %467 : vector<8x128xf32>
    %cst_95 = arith.constant 1.000000e+00 : f32
    %469 = vector.broadcast %cst_95 : f32 to vector<8x128xf32>
    %470 = arith.addf %469, %468 : vector<8x128xf32>
    %471 = arith.divf %469, %470 : vector<8x128xf32>
    %472 = vector.extract_strided_slice %459 {offsets = [0, 256], sizes = [8, 128], strides = [1, 1]} : vector<8x512xf32> to vector<8x128xf32>
    %473 = math.tanh %472 : vector<8x128xf32>
    %474 = vector.extract_strided_slice %459 {offsets = [0, 384], sizes = [8, 128], strides = [1, 1]} : vector<8x512xf32> to vector<8x128xf32>
    %475 = arith.negf %474 : vector<8x128xf32>
    %476 = math.exp %475 : vector<8x128xf32>
    %cst_96 = arith.constant 1.000000e+00 : f32
    %477 = vector.broadcast %cst_96 : f32 to vector<8x128xf32>
    %478 = arith.addf %477, %476 : vector<8x128xf32>
    %479 = arith.divf %477, %478 : vector<8x128xf32>
    %480 = arith.mulf %471, %402 : vector<8x128xf32>
    %481 = arith.mulf %465, %473 : vector<8x128xf32>
    %482 = arith.addf %480, %481 : vector<8x128xf32>
    %483 = math.tanh %482 : vector<8x128xf32>
    %484 = arith.mulf %479, %483 : vector<8x128xf32>
    %485 = vector.broadcast %13 : vector<1x128xf32> to vector<8x128xf32>
    %486 = arith.mulf %484, %485 : vector<8x128xf32>
    %cst_97 = arith.constant dense<0.000000e+00> : vector<8xf32>
    %487 = vector.multi_reduction <add>, %486, %cst_97 [1] : vector<8x128xf32> to vector<8xf32>
    %488 = vector.shape_cast %487 : vector<8xf32> to vector<8x1xf32>
    %489 = vector.broadcast %14 : vector<1x1xf32> to vector<8x1xf32>
    %490 = arith.addf %488, %489 : vector<8x1xf32>
    %491 = arith.maximumf %411, %490 : vector<8x1xf32>
    %492 = arith.subf %411, %491 : vector<8x1xf32>
    %493 = math.exp %492 : vector<8x1xf32>
    %494 = arith.subf %490, %491 : vector<8x1xf32>
    %495 = math.exp %494 : vector<8x1xf32>
    %496 = arith.mulf %493, %417 : vector<8x1xf32>
    %497 = arith.addf %496, %495 : vector<8x1xf32>
    %498 = vector.broadcast %493 : vector<8x1xf32> to vector<8x128xf32>
    %499 = arith.mulf %498, %422 : vector<8x128xf32>
    %500 = vector.broadcast %495 : vector<8x1xf32> to vector<8x128xf32>
    %501 = arith.mulf %500, %484 : vector<8x128xf32>
    %502 = arith.addf %499, %501 : vector<8x128xf32>
    %c5_i32 = arith.constant 5 : i32
    %503 = vector.broadcast %c5_i32 : i32 to vector<8x8xi32>
    %504 = arith.cmpi eq, %26, %503 : vector<8x8xi32>
    %505 = vector.shape_cast %490 : vector<8x1xf32> to vector<8x1xf32>
    %506 = vector.broadcast %505 : vector<8x1xf32> to vector<8x8xf32>
    %507 = arith.select %504, %506, %427 : vector<8x8xi1>, vector<8x8xf32>
    %c48 = arith.constant 48 : index
    %c0_98 = arith.constant 0 : index
    %508 = vector.load %arg13[%c48, %c0_98] : memref<64x512xf32, #tpu.memory_space<vmem>>, vector<8x512xf32>
    %cst_99 = arith.constant dense<0.000000e+00> : vector<8x512xf32>
    %509 = tpu.matmul %455, %10, %cst_99 {dimension_numbers = #tpu.dot_dimension_numbers<[1], [0], [0], [1], [0, 0, 1, 1], [], []>} : vector<8x128xf32>, vector<128x512xf32>, vector<8x512xf32> -> vector<8x512xf32>
    %510 = arith.addf %508, %509 : vector<8x512xf32>
    %511 = vector.extract_strided_slice %510 {offsets = [0, 0], sizes = [8, 128], strides = [1, 1]} : vector<8x512xf32> to vector<8x128xf32>
    %512 = arith.negf %511 : vector<8x128xf32>
    %513 = math.exp %512 : vector<8x128xf32>
    %cst_100 = arith.constant 1.000000e+00 : f32
    %514 = vector.broadcast %cst_100 : f32 to vector<8x128xf32>
    %515 = arith.addf %514, %513 : vector<8x128xf32>
    %516 = arith.divf %514, %515 : vector<8x128xf32>
    %517 = vector.extract_strided_slice %510 {offsets = [0, 128], sizes = [8, 128], strides = [1, 1]} : vector<8x512xf32> to vector<8x128xf32>
    %518 = arith.negf %517 : vector<8x128xf32>
    %519 = math.exp %518 : vector<8x128xf32>
    %cst_101 = arith.constant 1.000000e+00 : f32
    %520 = vector.broadcast %cst_101 : f32 to vector<8x128xf32>
    %521 = arith.addf %520, %519 : vector<8x128xf32>
    %522 = arith.divf %520, %521 : vector<8x128xf32>
    %523 = vector.extract_strided_slice %510 {offsets = [0, 256], sizes = [8, 128], strides = [1, 1]} : vector<8x512xf32> to vector<8x128xf32>
    %524 = math.tanh %523 : vector<8x128xf32>
    %525 = vector.extract_strided_slice %510 {offsets = [0, 384], sizes = [8, 128], strides = [1, 1]} : vector<8x512xf32> to vector<8x128xf32>
    %526 = arith.negf %525 : vector<8x128xf32>
    %527 = math.exp %526 : vector<8x128xf32>
    %cst_102 = arith.constant 1.000000e+00 : f32
    %528 = vector.broadcast %cst_102 : f32 to vector<8x128xf32>
    %529 = arith.addf %528, %527 : vector<8x128xf32>
    %530 = arith.divf %528, %529 : vector<8x128xf32>
    %531 = arith.mulf %522, %453 : vector<8x128xf32>
    %532 = arith.mulf %516, %524 : vector<8x128xf32>
    %533 = arith.addf %531, %532 : vector<8x128xf32>
    %534 = math.tanh %533 : vector<8x128xf32>
    %535 = arith.mulf %530, %534 : vector<8x128xf32>
    %536 = tpu.concatenate %535, %484 in 1 : vector<8x128xf32>, vector<8x128xf32> -> vector<8x256xf32>
    %cst_103 = arith.constant dense<0.000000e+00> : vector<8x512xf32>
    %537 = tpu.matmul %536, %11, %cst_103 {dimension_numbers = #tpu.dot_dimension_numbers<[1], [0], [0], [1], [0, 0, 1, 1], [], []>} : vector<8x256xf32>, vector<256x512xf32>, vector<8x512xf32> -> vector<8x512xf32>
    %538 = vector.broadcast %12 : vector<1x512xf32> to vector<8x512xf32>
    %539 = arith.addf %537, %538 : vector<8x512xf32>
    %540 = vector.extract_strided_slice %539 {offsets = [0, 0], sizes = [8, 128], strides = [1, 1]} : vector<8x512xf32> to vector<8x128xf32>
    %541 = arith.negf %540 : vector<8x128xf32>
    %542 = math.exp %541 : vector<8x128xf32>
    %cst_104 = arith.constant 1.000000e+00 : f32
    %543 = vector.broadcast %cst_104 : f32 to vector<8x128xf32>
    %544 = arith.addf %543, %542 : vector<8x128xf32>
    %545 = arith.divf %543, %544 : vector<8x128xf32>
    %546 = vector.extract_strided_slice %539 {offsets = [0, 128], sizes = [8, 128], strides = [1, 1]} : vector<8x512xf32> to vector<8x128xf32>
    %547 = arith.negf %546 : vector<8x128xf32>
    %548 = math.exp %547 : vector<8x128xf32>
    %cst_105 = arith.constant 1.000000e+00 : f32
    %549 = vector.broadcast %cst_105 : f32 to vector<8x128xf32>
    %550 = arith.addf %549, %548 : vector<8x128xf32>
    %551 = arith.divf %549, %550 : vector<8x128xf32>
    %552 = vector.extract_strided_slice %539 {offsets = [0, 256], sizes = [8, 128], strides = [1, 1]} : vector<8x512xf32> to vector<8x128xf32>
    %553 = math.tanh %552 : vector<8x128xf32>
    %554 = vector.extract_strided_slice %539 {offsets = [0, 384], sizes = [8, 128], strides = [1, 1]} : vector<8x512xf32> to vector<8x128xf32>
    %555 = arith.negf %554 : vector<8x128xf32>
    %556 = math.exp %555 : vector<8x128xf32>
    %cst_106 = arith.constant 1.000000e+00 : f32
    %557 = vector.broadcast %cst_106 : f32 to vector<8x128xf32>
    %558 = arith.addf %557, %556 : vector<8x128xf32>
    %559 = arith.divf %557, %558 : vector<8x128xf32>
    %560 = arith.mulf %551, %482 : vector<8x128xf32>
    %561 = arith.mulf %545, %553 : vector<8x128xf32>
    %562 = arith.addf %560, %561 : vector<8x128xf32>
    %563 = math.tanh %562 : vector<8x128xf32>
    %564 = arith.mulf %559, %563 : vector<8x128xf32>
    %565 = vector.broadcast %13 : vector<1x128xf32> to vector<8x128xf32>
    %566 = arith.mulf %564, %565 : vector<8x128xf32>
    %cst_107 = arith.constant dense<0.000000e+00> : vector<8xf32>
    %567 = vector.multi_reduction <add>, %566, %cst_107 [1] : vector<8x128xf32> to vector<8xf32>
    %568 = vector.shape_cast %567 : vector<8xf32> to vector<8x1xf32>
    %569 = vector.broadcast %14 : vector<1x1xf32> to vector<8x1xf32>
    %570 = arith.addf %568, %569 : vector<8x1xf32>
    %571 = arith.maximumf %491, %570 : vector<8x1xf32>
    %572 = arith.subf %491, %571 : vector<8x1xf32>
    %573 = math.exp %572 : vector<8x1xf32>
    %574 = arith.subf %570, %571 : vector<8x1xf32>
    %575 = math.exp %574 : vector<8x1xf32>
    %576 = arith.mulf %573, %497 : vector<8x1xf32>
    %577 = arith.addf %576, %575 : vector<8x1xf32>
    %578 = vector.broadcast %573 : vector<8x1xf32> to vector<8x128xf32>
    %579 = arith.mulf %578, %502 : vector<8x128xf32>
    %580 = vector.broadcast %575 : vector<8x1xf32> to vector<8x128xf32>
    %581 = arith.mulf %580, %564 : vector<8x128xf32>
    %582 = arith.addf %579, %581 : vector<8x128xf32>
    %c6_i32 = arith.constant 6 : i32
    %583 = vector.broadcast %c6_i32 : i32 to vector<8x8xi32>
    %584 = arith.cmpi eq, %26, %583 : vector<8x8xi32>
    %585 = vector.shape_cast %570 : vector<8x1xf32> to vector<8x1xf32>
    %586 = vector.broadcast %585 : vector<8x1xf32> to vector<8x8xf32>
    %587 = arith.select %584, %586, %507 : vector<8x8xi1>, vector<8x8xf32>
    %c56 = arith.constant 56 : index
    %c0_108 = arith.constant 0 : index
    %588 = vector.load %arg13[%c56, %c0_108] : memref<64x512xf32, #tpu.memory_space<vmem>>, vector<8x512xf32>
    %cst_109 = arith.constant dense<0.000000e+00> : vector<8x512xf32>
    %589 = tpu.matmul %535, %10, %cst_109 {dimension_numbers = #tpu.dot_dimension_numbers<[1], [0], [0], [1], [0, 0, 1, 1], [], []>} : vector<8x128xf32>, vector<128x512xf32>, vector<8x512xf32> -> vector<8x512xf32>
    %590 = arith.addf %588, %589 : vector<8x512xf32>
    %591 = vector.extract_strided_slice %590 {offsets = [0, 0], sizes = [8, 128], strides = [1, 1]} : vector<8x512xf32> to vector<8x128xf32>
    %592 = arith.negf %591 : vector<8x128xf32>
    %593 = math.exp %592 : vector<8x128xf32>
    %cst_110 = arith.constant 1.000000e+00 : f32
    %594 = vector.broadcast %cst_110 : f32 to vector<8x128xf32>
    %595 = arith.addf %594, %593 : vector<8x128xf32>
    %596 = arith.divf %594, %595 : vector<8x128xf32>
    %597 = vector.extract_strided_slice %590 {offsets = [0, 128], sizes = [8, 128], strides = [1, 1]} : vector<8x512xf32> to vector<8x128xf32>
    %598 = arith.negf %597 : vector<8x128xf32>
    %599 = math.exp %598 : vector<8x128xf32>
    %cst_111 = arith.constant 1.000000e+00 : f32
    %600 = vector.broadcast %cst_111 : f32 to vector<8x128xf32>
    %601 = arith.addf %600, %599 : vector<8x128xf32>
    %602 = arith.divf %600, %601 : vector<8x128xf32>
    %603 = vector.extract_strided_slice %590 {offsets = [0, 256], sizes = [8, 128], strides = [1, 1]} : vector<8x512xf32> to vector<8x128xf32>
    %604 = math.tanh %603 : vector<8x128xf32>
    %605 = vector.extract_strided_slice %590 {offsets = [0, 384], sizes = [8, 128], strides = [1, 1]} : vector<8x512xf32> to vector<8x128xf32>
    %606 = arith.negf %605 : vector<8x128xf32>
    %607 = math.exp %606 : vector<8x128xf32>
    %cst_112 = arith.constant 1.000000e+00 : f32
    %608 = vector.broadcast %cst_112 : f32 to vector<8x128xf32>
    %609 = arith.addf %608, %607 : vector<8x128xf32>
    %610 = arith.divf %608, %609 : vector<8x128xf32>
    %611 = arith.mulf %602, %533 : vector<8x128xf32>
    %612 = arith.mulf %596, %604 : vector<8x128xf32>
    %613 = arith.addf %611, %612 : vector<8x128xf32>
    %614 = math.tanh %613 : vector<8x128xf32>
    %615 = arith.mulf %610, %614 : vector<8x128xf32>
    %616 = tpu.concatenate %615, %564 in 1 : vector<8x128xf32>, vector<8x128xf32> -> vector<8x256xf32>
    %cst_113 = arith.constant dense<0.000000e+00> : vector<8x512xf32>
    %617 = tpu.matmul %616, %11, %cst_113 {dimension_numbers = #tpu.dot_dimension_numbers<[1], [0], [0], [1], [0, 0, 1, 1], [], []>} : vector<8x256xf32>, vector<256x512xf32>, vector<8x512xf32> -> vector<8x512xf32>
    %618 = vector.broadcast %12 : vector<1x512xf32> to vector<8x512xf32>
    %619 = arith.addf %617, %618 : vector<8x512xf32>
    %620 = vector.extract_strided_slice %619 {offsets = [0, 0], sizes = [8, 128], strides = [1, 1]} : vector<8x512xf32> to vector<8x128xf32>
    %621 = arith.negf %620 : vector<8x128xf32>
    %622 = math.exp %621 : vector<8x128xf32>
    %cst_114 = arith.constant 1.000000e+00 : f32
    %623 = vector.broadcast %cst_114 : f32 to vector<8x128xf32>
    %624 = arith.addf %623, %622 : vector<8x128xf32>
    %625 = arith.divf %623, %624 : vector<8x128xf32>
    %626 = vector.extract_strided_slice %619 {offsets = [0, 128], sizes = [8, 128], strides = [1, 1]} : vector<8x512xf32> to vector<8x128xf32>
    %627 = arith.negf %626 : vector<8x128xf32>
    %628 = math.exp %627 : vector<8x128xf32>
    %cst_115 = arith.constant 1.000000e+00 : f32
    %629 = vector.broadcast %cst_115 : f32 to vector<8x128xf32>
    %630 = arith.addf %629, %628 : vector<8x128xf32>
    %631 = arith.divf %629, %630 : vector<8x128xf32>
    %632 = vector.extract_strided_slice %619 {offsets = [0, 256], sizes = [8, 128], strides = [1, 1]} : vector<8x512xf32> to vector<8x128xf32>
    %633 = math.tanh %632 : vector<8x128xf32>
    %634 = vector.extract_strided_slice %619 {offsets = [0, 384], sizes = [8, 128], strides = [1, 1]} : vector<8x512xf32> to vector<8x128xf32>
    %635 = arith.negf %634 : vector<8x128xf32>
    %636 = math.exp %635 : vector<8x128xf32>
    %cst_116 = arith.constant 1.000000e+00 : f32
    %637 = vector.broadcast %cst_116 : f32 to vector<8x128xf32>
    %638 = arith.addf %637, %636 : vector<8x128xf32>
    %639 = arith.divf %637, %638 : vector<8x128xf32>
    %640 = arith.mulf %631, %562 : vector<8x128xf32>
    %641 = arith.mulf %625, %633 : vector<8x128xf32>
    %642 = arith.addf %640, %641 : vector<8x128xf32>
    %643 = math.tanh %642 : vector<8x128xf32>
    %644 = arith.mulf %639, %643 : vector<8x128xf32>
    %645 = vector.broadcast %13 : vector<1x128xf32> to vector<8x128xf32>
    %646 = arith.mulf %644, %645 : vector<8x128xf32>
    %cst_117 = arith.constant dense<0.000000e+00> : vector<8xf32>
    %647 = vector.multi_reduction <add>, %646, %cst_117 [1] : vector<8x128xf32> to vector<8xf32>
    %648 = vector.shape_cast %647 : vector<8xf32> to vector<8x1xf32>
    %649 = vector.broadcast %14 : vector<1x1xf32> to vector<8x1xf32>
    %650 = arith.addf %648, %649 : vector<8x1xf32>
    %651 = arith.maximumf %571, %650 : vector<8x1xf32>
    %652 = arith.subf %571, %651 : vector<8x1xf32>
    %653 = math.exp %652 : vector<8x1xf32>
    %654 = arith.subf %650, %651 : vector<8x1xf32>
    %655 = math.exp %654 : vector<8x1xf32>
    %656 = arith.mulf %653, %577 : vector<8x1xf32>
    %657 = arith.addf %656, %655 : vector<8x1xf32>
    %658 = vector.broadcast %653 : vector<8x1xf32> to vector<8x128xf32>
    %659 = arith.mulf %658, %582 : vector<8x128xf32>
    %660 = vector.broadcast %655 : vector<8x1xf32> to vector<8x128xf32>
    %661 = arith.mulf %660, %644 : vector<8x128xf32>
    %662 = arith.addf %659, %661 : vector<8x128xf32>
    %c7_i32 = arith.constant 7 : i32
    %663 = vector.broadcast %c7_i32 : i32 to vector<8x8xi32>
    %664 = arith.cmpi eq, %26, %663 : vector<8x8xi32>
    %665 = vector.shape_cast %650 : vector<8x1xf32> to vector<8x1xf32>
    %666 = vector.broadcast %665 : vector<8x1xf32> to vector<8x8xf32>
    %667 = arith.select %664, %666, %587 : vector<8x8xi1>, vector<8x8xf32>
    %c0_118 = arith.constant 0 : index
    %c0_119 = arith.constant 0 : index
    %c0_120 = arith.constant 0 : index
    %668 = vector.load %arg14[%c0_118, %c0_119, %c0_120] : memref<2x8x128xf32, #tpu.memory_space<vmem>>, vector<1x8x128xf32>
    %669 = vector.shape_cast %668 : vector<1x8x128xf32> to vector<8x128xf32>
    %670 = vector.shape_cast %615 : vector<8x128xf32> to vector<1x8x128xf32>
    tpu.vector_store %arg14[%c0_118, %c0_119, %c0_120], %670 {strides = array<i32>} : memref<2x8x128xf32, #tpu.memory_space<vmem>>, vector<1x8x128xf32>,
    %c0_121 = arith.constant 0 : index
    %c0_122 = arith.constant 0 : index
    %c0_123 = arith.constant 0 : index
    %671 = vector.load %arg15[%c0_121, %c0_122, %c0_123] : memref<2x8x128xf32, #tpu.memory_space<vmem>>, vector<1x8x128xf32>
    %672 = vector.shape_cast %671 : vector<1x8x128xf32> to vector<8x128xf32>
    %673 = vector.shape_cast %613 : vector<8x128xf32> to vector<1x8x128xf32>
    tpu.vector_store %arg15[%c0_121, %c0_122, %c0_123], %673 {strides = array<i32>} : memref<2x8x128xf32, #tpu.memory_space<vmem>>, vector<1x8x128xf32>,
    %c1_124 = arith.constant 1 : index
    %c0_125 = arith.constant 0 : index
    %c0_126 = arith.constant 0 : index
    %674 = vector.load %arg14[%c1_124, %c0_125, %c0_126] : memref<2x8x128xf32, #tpu.memory_space<vmem>>, vector<1x8x128xf32>
    %675 = vector.shape_cast %674 : vector<1x8x128xf32> to vector<8x128xf32>
    %676 = vector.shape_cast %644 : vector<8x128xf32> to vector<1x8x128xf32>
    tpu.vector_store %arg14[%c1_124, %c0_125, %c0_126], %676 {strides = array<i32>} : memref<2x8x128xf32, #tpu.memory_space<vmem>>, vector<1x8x128xf32>,
    %c1_127 = arith.constant 1 : index
    %c0_128 = arith.constant 0 : index
    %c0_129 = arith.constant 0 : index
    %677 = vector.load %arg15[%c1_127, %c0_128, %c0_129] : memref<2x8x128xf32, #tpu.memory_space<vmem>>, vector<1x8x128xf32>
    %678 = vector.shape_cast %677 : vector<1x8x128xf32> to vector<8x128xf32>
    %679 = vector.shape_cast %642 : vector<8x128xf32> to vector<1x8x128xf32>
    tpu.vector_store %arg15[%c1_127, %c0_128, %c0_129], %679 {strides = array<i32>} : memref<2x8x128xf32, #tpu.memory_space<vmem>>, vector<1x8x128xf32>,
    %c0_130 = arith.constant 0 : index
    %c0_131 = arith.constant 0 : index
    %680 = vector.load %arg16[%c0_130, %c0_131] : memref<8x1xf32, #tpu.memory_space<vmem>>, vector<8x1xf32>
    tpu.vector_store %arg16[%c0_130, %c0_131], %651 {strides = array<i32>} : memref<8x1xf32, #tpu.memory_space<vmem>>, vector<8x1xf32>,
    %c0_132 = arith.constant 0 : index
    %c0_133 = arith.constant 0 : index
    %681 = vector.load %arg17[%c0_132, %c0_133] : memref<8x1xf32, #tpu.memory_space<vmem>>, vector<8x1xf32>
    tpu.vector_store %arg17[%c0_132, %c0_133], %657 {strides = array<i32>} : memref<8x1xf32, #tpu.memory_space<vmem>>, vector<8x1xf32>,
    %c0_134 = arith.constant 0 : index
    %c0_135 = arith.constant 0 : index
    %682 = vector.load %arg18[%c0_134, %c0_135] : memref<8x128xf32, #tpu.memory_space<vmem>>, vector<8x128xf32>
    tpu.vector_store %arg18[%c0_134, %c0_135], %662 {strides = array<i32>} : memref<8x128xf32, #tpu.memory_space<vmem>>, vector<8x128xf32>,
    %683 = arith.index_cast %arg0 : i32 to index
    %c0_136 = arith.constant 0 : index
    %c0_137 = arith.constant 0 : index
    %684 = vector.load %arg19[%683, %c0_136, %c0_137] : memref<1x8x8xf32, #tpu.memory_space<vmem>>, vector<1x8x8xf32>
    %685 = vector.shape_cast %684 : vector<1x8x8xf32> to vector<8x8xf32>
    %686 = vector.shape_cast %667 : vector<8x8xf32> to vector<1x8x8xf32>
    tpu.vector_store %arg19[%683, %c0_136, %c0_137], %686 {strides = array<i32>} : memref<1x8x8xf32, #tpu.memory_space<vmem>>, vector<1x8x8xf32>,
    %c0_i32_138 = arith.constant 0 : i32
    %687 = arith.cmpi eq, %arg0, %c0_i32_138 : i32
    %688 = arith.extui %687 : i1 to i32
    %c0_i32_139 = arith.constant 0 : i32
    %689 = arith.cmpi ne, %688, %c0_i32_139 : i32
    scf.if %689 {
      %cst_140 = arith.constant 1.000000e+00 : f32
      %690 = vector.broadcast %cst_140 : f32 to vector<8x1xf32>
      %691 = arith.divf %690, %657 : vector<8x1xf32>
      %692 = vector.broadcast %691 : vector<8x1xf32> to vector<8x128xf32>
      %693 = arith.mulf %662, %692 : vector<8x128xf32>
      %c0_141 = arith.constant 0 : index
      %c0_142 = arith.constant 0 : index
      %694 = vector.load %arg9[%c0_141, %c0_142] : memref<128x128xf32, #tpu.memory_space<vmem>>, vector<128x128xf32>
      %cst_143 = arith.constant dense<0.000000e+00> : vector<8x128xf32>
      %695 = tpu.matmul %693, %694, %cst_143 {dimension_numbers = #tpu.dot_dimension_numbers<[1], [0], [0], [1], [0, 0, 1, 1], [], []>} : vector<8x128xf32>, vector<128x128xf32>, vector<8x128xf32> -> vector<8x128xf32>
      %c0_144 = arith.constant 0 : index
      %c0_145 = arith.constant 0 : index
      %696 = vector.load %arg10[%c0_144, %c0_145] : memref<1x128xf32, #tpu.memory_space<vmem>>, vector<1x128xf32>
      %697 = vector.broadcast %696 : vector<1x128xf32> to vector<8x128xf32>
      %698 = arith.addf %695, %697 : vector<8x128xf32>
      %c0_146 = arith.constant 0 : index
      %c0_147 = arith.constant 0 : index
      %699 = vector.load %arg11[%c0_146, %c0_147] : memref<8x128xf32, #tpu.memory_space<vmem>>, vector<8x128xf32>
      tpu.vector_store %arg11[%c0_146, %c0_147], %698 {strides = array<i32>} : memref<8x128xf32, #tpu.memory_space<vmem>>, vector<8x128xf32>,
      %c0_148 = arith.constant 0 : index
      %c0_149 = arith.constant 0 : index
      %c0_150 = arith.constant 0 : index
      %700 = vector.load %arg19[%c0_148, %c0_149, %c0_150] : memref<1x8x8xf32, #tpu.memory_space<vmem>>, vector<1x8x8xf32>
      %701 = vector.shape_cast %651 : vector<8x1xf32> to vector<1x8x1xf32>
      %702 = vector.broadcast %701 : vector<1x8x1xf32> to vector<1x8x8xf32>
      %703 = arith.subf %700, %702 : vector<1x8x8xf32>
      %704 = math.exp %703 : vector<1x8x8xf32>
      %705 = vector.shape_cast %691 : vector<8x1xf32> to vector<1x8x1xf32>
      %706 = vector.broadcast %705 : vector<1x8x1xf32> to vector<1x8x8xf32>
      %707 = arith.mulf %704, %706 : vector<1x8x8xf32>
      %c0_151 = arith.constant 0 : index
      %c0_152 = arith.constant 0 : index
      %c0_153 = arith.constant 0 : index
      %708 = vector.load %arg12[%c0_151, %c0_152, %c0_153] : memref<1x8x8xf32, #tpu.memory_space<vmem>>, vector<1x8x8xf32>
      tpu.vector_store %arg12[%c0_151, %c0_152, %c0_153], %707 {strides = array<i32>} : memref<1x8x8xf32, #tpu.memory_space<vmem>>, vector<1x8x8xf32>,
    } else {
    }
    return
  }
  func.func @transform_0(%arg0: i32) -> (i32, i32) {
    %c0_i32 = arith.constant 0 : i32
    %c0_i32_0 = arith.constant 0 : i32
    return %arg0, %c0_i32 : i32, i32
  }
  func.func @transform_1(%arg0: i32) -> (i32, i32) {
    %c0_i32 = arith.constant 0 : i32
    %c0_i32_0 = arith.constant 0 : i32
    %c0_i32_1 = arith.constant 0 : i32
    return %c0_i32, %c0_i32_0 : i32, i32
  }
  func.func @transform_2(%arg0: i32) -> (i32, i32) {
    %c0_i32 = arith.constant 0 : i32
    %c0_i32_0 = arith.constant 0 : i32
    %c0_i32_1 = arith.constant 0 : i32
    return %c0_i32, %c0_i32_0 : i32, i32
  }
  func.func @transform_3(%arg0: i32) -> (i32, i32) {
    %c0_i32 = arith.constant 0 : i32
    %c0_i32_0 = arith.constant 0 : i32
    %c0_i32_1 = arith.constant 0 : i32
    return %c0_i32, %c0_i32_0 : i32, i32
  }
  func.func @transform_4(%arg0: i32) -> (i32, i32) {
    %c0_i32 = arith.constant 0 : i32
    %c0_i32_0 = arith.constant 0 : i32
    %c0_i32_1 = arith.constant 0 : i32
    return %c0_i32, %c0_i32_0 : i32, i32
  }
  func.func @transform_5(%arg0: i32) -> (i32, i32) {
    %c0_i32 = arith.constant 0 : i32
    %c0_i32_0 = arith.constant 0 : i32
    %c0_i32_1 = arith.constant 0 : i32
    return %c0_i32, %c0_i32_0 : i32, i32
  }
  func.func @transform_6(%arg0: i32) -> (i32, i32) {
    %c0_i32 = arith.constant 0 : i32
    %c0_i32_0 = arith.constant 0 : i32
    %c0_i32_1 = arith.constant 0 : i32
    return %c0_i32, %c0_i32_0 : i32, i32
  }
  func.func @transform_7(%arg0: i32) -> (i32, i32) {
    %c0_i32 = arith.constant 0 : i32
    %c0_i32_0 = arith.constant 0 : i32
    %c0_i32_1 = arith.constant 0 : i32
    return %c0_i32, %c0_i32_0 : i32, i32
  }
  func.func @transform_8(%arg0: i32) -> (i32, i32) {
    %c0_i32 = arith.constant 0 : i32
    %c0_i32_0 = arith.constant 0 : i32
    %c0_i32_1 = arith.constant 0 : i32
    return %c0_i32, %c0_i32_0 : i32, i32
  }
  func.func @transform_9(%arg0: i32) -> (i32, i32) {
    %c0_i32 = arith.constant 0 : i32
    %c0_i32_0 = arith.constant 0 : i32
    %c0_i32_1 = arith.constant 0 : i32
    return %c0_i32, %c0_i32_0 : i32, i32
  }
  func.func @transform_10(%arg0: i32) -> (i32, i32) {
    %c0_i32 = arith.constant 0 : i32
    %c0_i32_0 = arith.constant 0 : i32
    %c0_i32_1 = arith.constant 0 : i32
    return %c0_i32, %c0_i32_0 : i32, i32
  }
  func.func @transform_11(%arg0: i32) -> (i32, i32, i32) {
    %c0_i32 = arith.constant 0 : i32
    %c0_i32_0 = arith.constant 0 : i32
    %c0_i32_1 = arith.constant 0 : i32
    %c0_i32_2 = arith.constant 0 : i32
    return %c0_i32, %c0_i32_0, %c0_i32_1 : i32, i32, i32
  }
}

</mosaic_0001>

<llo_original>
// kernel: tpu_custom_call.1
$region0: #{tpu_custom_call.1}
  #allocation0 [shape = 'u32[]', space=smem, size = 0x4, offset = 0x4, fixed_abs, tag = 'smem constant byte address 0x4 - core index']
  #allocation1 [shape = 'u32[144,128]{1,0:T(1,128)}', space=vmem, size = 0x12000, scoped, tag = 'internal scratch']
  #allocation2 [shape = 'f32[64,512]{1,0:T(8,128)}', space=vmem, size = 0x20000, scoped, tag = 'scratch operand']
  #allocation3 [shape = 'f32[2,8,128]{2,1,0:T(8,128)}', space=vmem, size = 0x2000, scoped, tag = 'scratch operand']
  #allocation4 [shape = 'f32[2,8,128]{2,1,0:T(8,128)}', space=vmem, size = 0x2000, scoped, tag = 'scratch operand']
  #allocation5 [shape = 'f32[8,1]{1,0:T(8,128)}', space=vmem, size = 0x1000, scoped, tag = 'scratch operand']
  #allocation6 [shape = 'f32[8,1]{1,0:T(8,128)}', space=vmem, size = 0x1000, scoped, tag = 'scratch operand']
  #allocation7 [shape = 'f32[8,128]{1,0:T(8,128)}', space=vmem, size = 0x1000, scoped, tag = 'scratch operand']
  #allocation8 [shape = 'f32[1,8,8]{2,1,0:T(8,128)}', space=vmem, size = 0x1000, scoped, tag = 'scratch operand']
  #allocation9 [shape = 'f32[1,1]{1,0:T(1,128)S(1)}', space=vmem, size = 0x200, scoped, tag = 'scoped memory for tpu_custom_call.1']
  %s0 = inlined_call_operand.hbm [shape: f32[64,128], index: 0, kind: input, shape index: {}]
  %s1 = inlined_call_operand.hbm [shape: f32[128,512], index: 1, kind: input, shape index: {}]
  %s2 = inlined_call_operand.hbm [shape: f32[128,512], index: 2, kind: input, shape index: {}]
  %s3 = inlined_call_operand.vmem [shape: f32[1,512], index: 3, kind: input, shape index: {}]
  %s4 = inlined_call_operand.hbm [shape: f32[256,512], index: 4, kind: input, shape index: {}]
  %s5 = inlined_call_operand.vmem [shape: f32[1,512], index: 5, kind: input, shape index: {}]
  %s6 = inlined_call_operand.vmem [shape: f32[1,128], index: 6, kind: input, shape index: {}]
  %s7 = inlined_call_operand.<no memory space> [shape: f32[1,1], index: 7, kind: input, shape index: {}]
  %s8 = inlined_call_operand.hbm [shape: f32[128,128], index: 8, kind: input, shape index: {}]
  %s9 = inlined_call_operand.vmem [shape: f32[1,128], index: 9, kind: input, shape index: {}]
  %s10 = inlined_call_operand.hbm [shape: f32[8,128], index: 10, kind: output, shape index: {0}]
  %s11 = inlined_call_operand.hbm [shape: f32[1,8,8], index: 11, kind: output, shape index: {1}]
  %12 = xla_tuple %s10, %s11
  %s13 = sld [smem:[#allocation0]]
  $region86: #{tpu_custom_call.1} parent=0
    _
  %s15 = ssub.s32 1, %s13
  %s16 = scalar_select 0, %s15, %s13
  %v17 = vstv %s7
  %18 = vst [vmem:[#allocation9] sm:$0x1] %v17
  $region1: #{tpu_custom_call.1} parent=0
    #allocation10 [shape = 'u8[32768]{0}', space=vmem, size = 0x8000, scoped, tag = 'input window, operand 0, single buffered']
    #allocation11 [shape = 's32[1]{0}', space=sflag, size = 0x4, scoped, tag = 'scoped memory for tpu_custom_call.1']
    #allocation12 [shape = 's32[1]{0}', space=sflag, size = 0x4, scoped, tag = 'scoped memory for tpu_custom_call.1']
    #allocation13 [shape = 'u8[262144]{0}', space=vmem, size = 0x40000, scoped, tag = 'input window, operand 1, single buffered']
    #allocation14 [shape = 's32[1]{0}', space=sflag, size = 0x4, scoped, tag = 'scoped memory for tpu_custom_call.1']
    #allocation15 [shape = 'u8[262144]{0}', space=vmem, size = 0x40000, scoped, tag = 'input window, operand 2, single buffered']
    #allocation16 [shape = 'u8[524288]{0}', space=vmem, size = 0x80000, scoped, tag = 'input window, operand 4, single buffered']
    #allocation17 [shape = 's32[1]{0}', space=sflag, size = 0x4, scoped, tag = 'scoped memory for tpu_custom_call.1']
    #allocation18 [shape = 'u8[65536]{0}', space=vmem, size = 0x10000, scoped, tag = 'input window, operand 8, single buffered']
    #allocation19 [shape = 'u8[4096]{0}', space=vmem, size = 0x1000, scoped, tag = 'output window, operand 0, single buffered']
    #allocation20 [shape = 'u8[4096]{0}', space=vmem, size = 0x1000, scoped, tag = 'output window, operand 1, single buffered']
    #allocation21 [shape = 's32[1]{0}', space=sflag, size = 0x4, scoped, tag = 'scoped memory for tpu_custom_call.1']
    %19 = vsyncpa [#allocation11], 0
    %20 = vsyncpa [#allocation14], 0
    %21 = vsyncpa [#allocation17], 0
    %22 = vsyncpa [#allocation12], 0
    %23 = vsyncpa [#allocation21], 0
    // Predicated region
    $region2: #{tpu_custom_call.1} parent=1 // pred_check
      _
    $region3: #{tpu_custom_call.1} parent=1 // pred_check_branch
      %25 = sbr.rel (0) target = $region5
    $region4: #{tpu_custom_call.1} parent=1 // pred_region
      %s27 = ssub.s32 1024, 1024
      %28 = vsyncadd [#allocation11], %s27
      %s29 = sshll.u32 [#allocation10], 4
      %s30 = int_to_ptr.vmem [resolvable:$true] %s29
      %35 = dma.hbm_to_vmem [thread:$0]  %s0, 1024, %s30, [#allocation11], 128, 128, 8
    $region5: #{tpu_custom_call.1} parent=1 // pred_fallthru
      _
    // Predicated region
    $region6: #{tpu_custom_call.1} parent=1 // pred_check
      _
    $region7: #{tpu_custom_call.1} parent=1 // pred_check_branch
      %37 = sbr.rel (0) target = $region9
    $region8: #{tpu_custom_call.1} parent=1 // pred_region
      %s39 = ssub.s32 8192, 8192
      %40 = vsyncadd [#allocation14], %s39
      %s41 = sshll.u32 [#allocation13], 4
      %s42 = int_to_ptr.vmem [resolvable:$true] %s41
      %47 = dma.hbm_to_vmem [thread:$0]  %s1, 8192, %s42, [#allocation14], 512, 512, 32
    $region9: #{tpu_custom_call.1} parent=1 // pred_fallthru
      _
    // Predicated region
    $region10: #{tpu_custom_call.1} parent=1 // pred_check
      _
    $region11: #{tpu_custom_call.1} parent=1 // pred_check_branch
      %49 = sbr.rel (0) target = $region13
    $region12: #{tpu_custom_call.1} parent=1 // pred_region
      %s51 = ssub.s32 8192, 8192
      %52 = vsyncadd [#allocation14], %s51
      %s53 = sshll.u32 [#allocation15], 4
      %s54 = int_to_ptr.vmem [resolvable:$true] %s53
      %59 = dma.hbm_to_vmem [thread:$0]  %s2, 8192, %s54, [#allocation14], 512, 512, 32
    $region13: #{tpu_custom_call.1} parent=1 // pred_fallthru
      _
    // Predicated region
    $region14: #{tpu_custom_call.1} parent=1 // pred_check
      _
    $region15: #{tpu_custom_call.1} parent=1 // pred_check_branch
      %61 = sbr.rel (0) target = $region17
    $region16: #{tpu_custom_call.1} parent=1 // pred_region
      _
    $region17: #{tpu_custom_call.1} parent=1 // pred_fallthru
      _
    // Predicated region
    $region18: #{tpu_custom_call.1} parent=1 // pred_check
      _
    $region19: #{tpu_custom_call.1} parent=1 // pred_check_branch
      %63 = sbr.rel (0) target = $region21
    $region20: #{tpu_custom_call.1} parent=1 // pred_region
      %s65 = ssub.s32 16384, 16384
      %66 = vsyncadd [#allocation17], %s65
      %s67 = sshll.u32 [#allocation16], 4
      %s68 = int_to_ptr.vmem [resolvable:$true] %s67
      %73 = dma.hbm_to_vmem [thread:$0]  %s4, 16384, %s68, [#allocation17], 512, 512, 32
    $region21: #{tpu_custom_call.1} parent=1 // pred_fallthru
      _
    // Predicated region
    $region22: #{tpu_custom_call.1} parent=1 // pred_check
      _
    $region23: #{tpu_custom_call.1} parent=1 // pred_check_branch
      %75 = sbr.rel (0) target = $region25
    $region24: #{tpu_custom_call.1} parent=1 // pred_region
      _
    $region25: #{tpu_custom_call.1} parent=1 // pred_fallthru
      _
    // Predicated region
    $region26: #{tpu_custom_call.1} parent=1 // pred_check
      _
    $region27: #{tpu_custom_call.1} parent=1 // pred_check_branch
      %77 = sbr.rel (0) target = $region29
    $region28: #{tpu_custom_call.1} parent=1 // pred_region
      _
    $region29: #{tpu_custom_call.1} parent=1 // pred_fallthru
      _
    // Predicated region
    $region30: #{tpu_custom_call.1} parent=1 // pred_check
      _
    $region31: #{tpu_custom_call.1} parent=1 // pred_check_branch
      %79 = sbr.rel (0) target = $region33
    $region32: #{tpu_custom_call.1} parent=1 // pred_region
      _
    $region33: #{tpu_custom_call.1} parent=1 // pred_fallthru
      _
    // Predicated region
    $region34: #{tpu_custom_call.1} parent=1 // pred_check
      _
    $region35: #{tpu_custom_call.1} parent=1 // pred_check_branch
      %81 = sbr.rel (0) target = $region37
    $region36: #{tpu_custom_call.1} parent=1 // pred_region
      %s83 = ssub.s32 2048, 2048
      %84 = vsyncadd [#allocation17], %s83
      %s85 = sshll.u32 [#allocation18], 4
      %s86 = int_to_ptr.vmem [resolvable:$true] %s85
      %91 = dma.hbm_to_vmem [thread:$0]  %s8, 2048, %s86, [#allocation17], 128, 128, 8
    $region37: #{tpu_custom_call.1} parent=1 // pred_fallthru
      _
    // Predicated region
    $region38: #{tpu_custom_call.1} parent=1 // pred_check
      _
    $region39: #{tpu_custom_call.1} parent=1 // pred_check_branch
      %93 = sbr.rel (0) target = $region41
    $region40: #{tpu_custom_call.1} parent=1 // pred_region
      _
    $region41: #{tpu_custom_call.1} parent=1 // pred_fallthru
      _
    // Predicated region
    $region42: #{tpu_custom_call.1} parent=1 // pred_check
      _
    $region43: #{tpu_custom_call.1} parent=1 // pred_check_branch
      %95 = sbr.rel (0) target = $region45
    $region44: #{tpu_custom_call.1} parent=1 // pred_region
      %96 = dma.done [#allocation11], 1024
    $region45: #{tpu_custom_call.1} parent=1 // pred_fallthru
      _
    // Predicated region
    $region46: #{tpu_custom_call.1} parent=1 // pred_check
      _
    $region47: #{tpu_custom_call.1} parent=1 // pred_check_branch
      %98 = sbr.rel (0) target = $region49
    $region48: #{tpu_custom_call.1} parent=1 // pred_region
      %99 = dma.done [#allocation14], 8192
    $region49: #{tpu_custom_call.1} parent=1 // pred_fallthru
      _
    // Predicated region
    $region50: #{tpu_custom_call.1} parent=1 // pred_check
      _
    $region51: #{tpu_custom_call.1} parent=1 // pred_check_branch
      %101 = sbr.rel (0) target = $region53
    $region52: #{tpu_custom_call.1} parent=1 // pred_region
      %102 = dma.done [#allocation14], 8192
    $region53: #{tpu_custom_call.1} parent=1 // pred_fallthru
      _
    // Predicated region
    $region54: #{tpu_custom_call.1} parent=1 // pred_check
      _
    $region55: #{tpu_custom_call.1} parent=1 // pred_check_branch
      %104 = sbr.rel (0) target = $region57
    $region56: #{tpu_custom_call.1} parent=1 // pred_region
      %105 = dma.done [#allocation17], 16384
    $region57: #{tpu_custom_call.1} parent=1 // pred_fallthru
      _
    // Predicated region
    $region58: #{tpu_custom_call.1} parent=1 // pred_check
      _
    $region59: #{tpu_custom_call.1} parent=1 // pred_check_branch
      %107 = sbr.rel (0) target = $region61
    $region60: #{tpu_custom_call.1} parent=1 // pred_region
      %108 = dma.done [#allocation17], 2048
    $region61: #{tpu_custom_call.1} parent=1 // pred_fallthru
      _
    %p109 = scmp.eq.s32.totalorder 0, 0
    // Predicated region
    $region62: #{tpu_custom_call.1} parent=1 // pred_check
      %p110 = pneg %p109
    $region63: #{tpu_custom_call.1} parent=1 // pred_check_branch
      %112 = sbr.rel (%p110) target = $region65
    $region64: #{tpu_custom_call.1} parent=1 // pred_region
      %113 = vst [vmem:[#allocation3] sm:$0xff] 0.0
      %114 = vst [vmem:[#allocation3 + $0x8] sm:$0xff] 0.0
      %115 = vst [vmem:[#allocation4] sm:$0xff] 0.0
      %116 = vst [vmem:[#allocation4 + $0x8] sm:$0xff] 0.0
      %vm117 = vcmask 7168
      %118 = vst.msk [vmem:[#allocation5] sm:$0xff] %vm117, -1e+30
      %119 = vst.msk [vmem:[#allocation6] sm:$0xff] %vm117, 0.0
      %120 = vst [vmem:[#allocation7] sm:$0xff] 0.0
    $region65: #{tpu_custom_call.1} parent=1 // pred_fallthru
      _
    %v121 = vld [vmem:[#allocation10] sm:$0xff]
    %v122 = vld [vmem:[#allocation10 + $0x8] sm:$0xff]
    %v123 = vld [vmem:[#allocation10 + $0x10] sm:$0xff]
    %v124 = vld [vmem:[#allocation10 + $0x18] sm:$0xff]
    %v125 = vld [vmem:[#allocation10 + $0x20] sm:$0xff]
    %v126 = vld [vmem:[#allocation10 + $0x28] sm:$0xff]
    %v127 = vld [vmem:[#allocation10 + $0x30] sm:$0xff]
    %v128 = vld [vmem:[#allocation10 + $0x38] sm:$0xff]
    %v129 = vld [vmem:[#allocation13] sm:$0xff]
    %v130 = vld [vmem:[#allocation13 + $0x8] sm:$0xff]
    %v131 = vld [vmem:[#allocation13 + $0x10] sm:$0xff]
    %v132 = vld [vmem:[#allocation13 + $0x18] sm:$0xff]
    %v133 = vld [vmem:[#allocation13 + $0x20] sm:$0xff]
    %v134 = vld [vmem:[#allocation13 + $0x28] sm:$0xff]
    %v135 = vld [vmem:[#allocation13 + $0x30] sm:$0xff]
    %v136 = vld [vmem:[#allocation13 + $0x38] sm:$0xff]
    %v137 = vld [vmem:[#allocation13 + $0x40] sm:$0xff]
    %v138 = vld [vmem:[#allocation13 + $0x48] sm:$0xff]
    %v139 = vld [vmem:[#allocation13 + $0x50] sm:$0xff]
    %v140 = vld [vmem:[#allocation13 + $0x58] sm:$0xff]
    %v141 = vld [vmem:[#allocation13 + $0x60] sm:$0xff]
    %v142 = vld [vmem:[#allocation13 + $0x68] sm:$0xff]
    %v143 = vld [vmem:[#allocation13 + $0x70] sm:$0xff]
    %v144 = vld [vmem:[#allocation13 + $0x78] sm:$0xff]
    %v145 = vld [vmem:[#allocation13 + $0x80] sm:$0xff]
    %v146 = vld [vmem:[#allocation13 + $0x88] sm:$0xff]
    %v147 = vld [vmem:[#allocation13 + $0x90] sm:$0xff]
    %v148 = vld [vmem:[#allocation13 + $0x98] sm:$0xff]
    %v149 = vld [vmem:[#allocation13 + $0xa0] sm:$0xff]
    %v150 = vld [vmem:[#allocation13 + $0xa8] sm:$0xff]
    %v151 = vld [vmem:[#allocation13 + $0xb0] sm:$0xff]
    %v152 = vld [vmem:[#allocation13 + $0xb8] sm:$0xff]
    %v153 = vld [vmem:[#allocation13 + $0xc0] sm:$0xff]
    %v154 = vld [vmem:[#allocation13 + $0xc8] sm:$0xff]
    %v155 = vld [vmem:[#allocation13 + $0xd0] sm:$0xff]
    %v156 = vld [vmem:[#allocation13 + $0xd8] sm:$0xff]
    %v157 = vld [vmem:[#allocation13 + $0xe0] sm:$0xff]
    %v158 = vld [vmem:[#allocation13 + $0xe8] sm:$0xff]
    %v159 = vld [vmem:[#allocation13 + $0xf0] sm:$0xff]
    %v160 = vld [vmem:[#allocation13 + $0xf8] sm:$0xff]
    %v161 = vld [vmem:[#allocation13 + $0x100] sm:$0xff]
    %v162 = vld [vmem:[#allocation13 + $0x108] sm:$0xff]
    %v163 = vld [vmem:[#allocation13 + $0x110] sm:$0xff]
    %v164 = vld [vmem:[#allocation13 + $0x118] sm:$0xff]
    %v165 = vld [vmem:[#allocation13 + $0x120] sm:$0xff]
    %v166 = vld [vmem:[#allocation13 + $0x128] sm:$0xff]
    %v167 = vld [vmem:[#allocation13 + $0x130] sm:$0xff]
    %v168 = vld [vmem:[#allocation13 + $0x138] sm:$0xff]
    %v169 = vld [vmem:[#allocation13 + $0x140] sm:$0xff]
    %v170 = vld [vmem:[#allocation13 + $0x148] sm:$0xff]
    %v171 = vld [vmem:[#allocation13 + $0x150] sm:$0xff]
    %v172 = vld [vmem:[#allocation13 + $0x158] sm:$0xff]
    %v173 = vld [vmem:[#allocation13 + $0x160] sm:$0xff]
    %v174 = vld [vmem:[#allocation13 + $0x168] sm:$0xff]
    %v175 = vld [vmem:[#allocation13 + $0x170] sm:$0xff]
    %v176 = vld [vmem:[#allocation13 + $0x178] sm:$0xff]
    %v177 = vld [vmem:[#allocation13 + $0x180] sm:$0xff]
    %v178 = vld [vmem:[#allocation13 + $0x188] sm:$0xff]
    %v179 = vld [vmem:[#allocation13 + $0x190] sm:$0xff]
    %v180 = vld [vmem:[#allocation13 + $0x198] sm:$0xff]
    %v181 = vld [vmem:[#allocation13 + $0x1a0] sm:$0xff]
    %v182 = vld [vmem:[#allocation13 + $0x1a8] sm:$0xff]
    %v183 = vld [vmem:[#allocation13 + $0x1b0] sm:$0xff]
    %v184 = vld [vmem:[#allocation13 + $0x1b8] sm:$0xff]
    %v185 = vld [vmem:[#allocation13 + $0x1c0] sm:$0xff]
    %v186 = vld [vmem:[#allocation13 + $0x1c8] sm:$0xff]
    %v187 = vld [vmem:[#allocation13 + $0x1d0] sm:$0xff]
    %v188 = vld [vmem:[#allocation13 + $0x1d8] sm:$0xff]
    %v189 = vld [vmem:[#allocation13 + $0x1e0] sm:$0xff]
    %v190 = vld [vmem:[#allocation13 + $0x1e8] sm:$0xff]
    %v191 = vld [vmem:[#allocation13 + $0x1f0] sm:$0xff]
    %v192 = vld [vmem:[#allocation13 + $0x1f8] sm:$0xff]
    %v193 = vld [vmem:[%s3] sm:$0xf]
    %v195 = vlaneseq
    %v196 = vshrl.u32 %v195, 7
    %v197 = vsub.s32 0, %v196
    %v198 = vrot.slane %v193, %v197
    %v199 = vlaneseq
    %v200 = vshrl.u32 %v199, 7
    %v201 = vsub.s32 1, %v200
    %v202 = vrot.slane %v193, %v201
    %v203 = vlaneseq
    %v204 = vshrl.u32 %v203, 7
    %v205 = vsub.s32 2, %v204
    %v206 = vrot.slane %v193, %v205
    %v207 = vlaneseq
    %v208 = vshrl.u32 %v207, 7
    %v209 = vsub.s32 3, %v208
    %v210 = vrot.slane %v193, %v209
    %215 = vmatprep.subr.mxu0 %v130
    %216 = vmatpush1.msra.mxu0 %v129
    %217 = vmatprep.subr.mxu0 %v134
    %218 = vmatpush1.msra.mxu0 %v133
    %219 = vmatprep.subr.mxu0 %v138
    %220 = vmatpush1.msra.mxu0 %v137
    %221 = vmatprep.subr.mxu0 %v142
    %222 = vmatpush1.msra.mxu0 %v141
    %223 = vmatprep.subr.mxu0 %v146
    %224 = vmatpush1.msra.mxu0 %v145
    %225 = vmatprep.subr.mxu0 %v150
    %226 = vmatpush1.msra.mxu0 %v149
    %227 = vmatprep.subr.mxu0 %v154
    %228 = vmatpush1.msra.mxu0 %v153
    %229 = vmatprep.subr.mxu0 %v158
    %230 = vmatpush1.msra.mxu0 %v157
    %231 = vmatprep.subr.mxu0 %v162
    %232 = vmatpush1.msra.mxu0 %v161
    %233 = vmatprep.subr.mxu0 %v166
    %234 = vmatpush1.msra.mxu0 %v165
    %235 = vmatprep.subr.mxu0 %v170
    %236 = vmatpush1.msra.mxu0 %v169
    %237 = vmatprep.subr.mxu0 %v174
    %238 = vmatpush1.msra.mxu0 %v173
    %239 = vmatprep.subr.mxu0 %v178
    %240 = vmatpush1.msra.mxu0 %v177
    %241 = vmatprep.subr.mxu0 %v182
    %242 = vmatpush1.msra.mxu0 %v181
    %243 = vmatprep.subr.mxu0 %v186
    %244 = vmatpush1.msra.mxu0 %v185
    %245 = vmatprep.subr.mxu0 %v190
    %246 = vmatpush1.msra.mxu0 %v189
    %247 = vmatprep.subr.mxu0 0.0
    %248 = vmatpush1.msra.mxu0 0.0
    %249 = vmatprep.subr.mxu0 0.0
    %250 = vmatpush1.msra.mxu0 0.0
    %251 = vmatprep.subr.mxu0 0.0
    %252 = vmatpush1.msra.mxu0 0.0
    %253 = vmatprep.subr.mxu0 0.0
    %254 = vmatpush1.msra.mxu0 0.0
    %255 = vmatprep.subr.mxu0 0.0
    %256 = vmatpush1.msra.mxu0 0.0
    %257 = vmatprep.subr.mxu0 0.0
    %258 = vmatpush1.msra.mxu0 0.0
    %259 = vmatprep.subr.mxu0 0.0
    %260 = vmatpush1.msra.mxu0 0.0
    %261 = vmatprep.subr.mxu0 0.0
    %262 = vmatpush1.msra.mxu0 0.0
    %263 = vmatprep.subr.mxu0 0.0
    %264 = vmatpush1.msra.mxu0 0.0
    %265 = vmatprep.subr.mxu0 0.0
    %266 = vmatpush1.msra.mxu0 0.0
    %267 = vmatprep.subr.mxu0 0.0
    %268 = vmatpush1.msra.mxu0 0.0
    %269 = vmatprep.subr.mxu0 0.0
    %270 = vmatpush1.msra.mxu0 0.0
    %271 = vmatprep.subr.mxu0 0.0
    %272 = vmatpush1.msra.mxu0 0.0
    %273 = vmatprep.subr.mxu0 0.0
    %274 = vmatpush1.msra.mxu0 0.0
    %275 = vmatprep.subr.mxu0 0.0
    %276 = vmatpush1.msra.mxu0 0.0
    %277 = vmatprep.subr.mxu0 0.0
    %278 = vmatpush1.msra.mxu0 0.0
    %279 = vmatprep.mubr.f32.mxu0 0.0
    %280 = vmatmul.mubr.f32.gmra.mrb[0].mxu0 %v121
    %v281 = vpop.f32.mrb[0].mxu0
    %v282 = vadd.f32 %v198, %v281
    %v283 = vpop.f32.mrb[0].mxu0
    %v284 = vadd.f32 %v202, %v283
    %285 = vmatprep.mubr.f32.mxu0 0.0
    %286 = vmatmul.mubr.f32.gmra.mrb[0].mxu0 %v122
    %v287 = vpop.f32.mrb[0].mxu0
    %v288 = vadd.f32 %v198, %v287
    %v289 = vpop.f32.mrb[0].mxu0
    %v290 = vadd.f32 %v202, %v289
    %291 = vmatprep.mubr.f32.mxu0 0.0
    %292 = vmatmul.mubr.f32.gmra.mrb[0].mxu0 %v123
    %v293 = vpop.f32.mrb[0].mxu0
    %v294 = vadd.f32 %v198, %v293
    %v295 = vpop.f32.mrb[0].mxu0
    %v296 = vadd.f32 %v202, %v295
    %297 = vmatprep.mubr.f32.mxu0 0.0
    %298 = vmatmul.mubr.f32.gmra.mrb[0].mxu0 %v124
    %v299 = vpop.f32.mrb[0].mxu0
    %v300 = vadd.f32 %v198, %v299
    %v301 = vpop.f32.mrb[0].mxu0
    %v302 = vadd.f32 %v202, %v301
    %303 = vmatprep.mubr.f32.mxu0 0.0
    %304 = vmatmul.mubr.f32.gmra.mrb[0].mxu0 %v125
    %v305 = vpop.f32.mrb[0].mxu0
    %v306 = vadd.f32 %v198, %v305
    %v307 = vpop.f32.mrb[0].mxu0
    %v308 = vadd.f32 %v202, %v307
    %309 = vmatprep.mubr.f32.mxu0 0.0
    %310 = vmatmul.mubr.f32.gmra.mrb[0].mxu0 %v126
    %v311 = vpop.f32.mrb[0].mxu0
    %v312 = vadd.f32 %v198, %v311
    %v313 = vpop.f32.mrb[0].mxu0
    %v314 = vadd.f32 %v202, %v313
    %315 = vmatprep.mubr.f32.mxu0 0.0
    %316 = vmatmul.mubr.f32.gmra.mrb[0].mxu0 %v127
    %v317 = vpop.f32.mrb[0].mxu0
    %v318 = vadd.f32 %v198, %v317
    %v319 = vpop.f32.mrb[0].mxu0
    %v320 = vadd.f32 %v202, %v319
    %321 = vmatprep.mubr.f32.mxu0 0.0
    %322 = vmatmul.mubr.f32.gmra.mrb[0].mxu0 %v128
    %v323 = vpop.f32.mrb[0].mxu0
    %v324 = vadd.f32 %v198, %v323
    %v325 = vpop.f32.mrb[0].mxu0
    %v326 = vadd.f32 %v202, %v325
    %327 = vdwg.mxu0
    %328 = vmatprep.subr.mxu0 %v132
    %329 = vmatpush1.msra.mxu0 %v131
    %330 = vmatprep.subr.mxu0 %v136
    %331 = vmatpush1.msra.mxu0 %v135
    %332 = vmatprep.subr.mxu0 %v140
    %333 = vmatpush1.msra.mxu0 %v139
    %334 = vmatprep.subr.mxu0 %v144
    %335 = vmatpush1.msra.mxu0 %v143
    %336 = vmatprep.subr.mxu0 %v148
    %337 = vmatpush1.msra.mxu0 %v147
    %338 = vmatprep.subr.mxu0 %v152
    %339 = vmatpush1.msra.mxu0 %v151
    %340 = vmatprep.subr.mxu0 %v156
    %341 = vmatpush1.msra.mxu0 %v155
    %342 = vmatprep.subr.mxu0 %v160
    %343 = vmatpush1.msra.mxu0 %v159
    %344 = vmatprep.subr.mxu0 %v164
    %345 = vmatpush1.msra.mxu0 %v163
    %346 = vmatprep.subr.mxu0 %v168
    %347 = vmatpush1.msra.mxu0 %v167
    %348 = vmatprep.subr.mxu0 %v172
    %349 = vmatpush1.msra.mxu0 %v171
    %350 = vmatprep.subr.mxu0 %v176
    %351 = vmatpush1.msra.mxu0 %v175
    %352 = vmatprep.subr.mxu0 %v180
    %353 = vmatpush1.msra.mxu0 %v179
    %354 = vmatprep.subr.mxu0 %v184
    %355 = vmatpush1.msra.mxu0 %v183
    %356 = vmatprep.subr.mxu0 %v188
    %357 = vmatpush1.msra.mxu0 %v187
    %358 = vmatprep.subr.mxu0 %v192
    %359 = vmatpush1.msra.mxu0 %v191
    %360 = vmatprep.subr.mxu0 0.0
    %361 = vmatpush1.msra.mxu0 0.0
    %362 = vmatprep.subr.mxu0 0.0
    %363 = vmatpush1.msra.mxu0 0.0
    %364 = vmatprep.subr.mxu0 0.0
    %365 = vmatpush1.msra.mxu0 0.0
    %366 = vmatprep.subr.mxu0 0.0
    %367 = vmatpush1.msra.mxu0 0.0
    %368 = vmatprep.subr.mxu0 0.0
    %369 = vmatpush1.msra.mxu0 0.0
    %370 = vmatprep.subr.mxu0 0.0
    %371 = vmatpush1.msra.mxu0 0.0
    %372 = vmatprep.subr.mxu0 0.0
    %373 = vmatpush1.msra.mxu0 0.0
    %374 = vmatprep.subr.mxu0 0.0
    %375 = vmatpush1.msra.mxu0 0.0
    %376 = vmatprep.subr.mxu0 0.0
    %377 = vmatpush1.msra.mxu0 0.0
    %378 = vmatprep.subr.mxu0 0.0
    %379 = vmatpush1.msra.mxu0 0.0
    %380 = vmatprep.subr.mxu0 0.0
    %381 = vmatpush1.msra.mxu0 0.0
    %382 = vmatprep.subr.mxu0 0.0
    %383 = vmatpush1.msra.mxu0 0.0
    %384 = vmatprep.subr.mxu0 0.0
    %385 = vmatpush1.msra.mxu0 0.0
    %386 = vmatprep.subr.mxu0 0.0
    %387 = vmatpush1.msra.mxu0 0.0
    %388 = vmatprep.subr.mxu0 0.0
    %389 = vmatpush1.msra.mxu0 0.0
    %390 = vmatprep.subr.mxu0 0.0
    %391 = vmatpush1.msra.mxu0 0.0
    %392 = vmatprep.mubr.f32.mxu0 0.0
    %393 = vmatmul.mubr.f32.gmra.mrb[0].mxu0 %v121
    %v394 = vpop.f32.mrb[0].mxu0
    %v395 = vadd.f32 %v206, %v394
    %v396 = vpop.f32.mrb[0].mxu0
    %v397 = vadd.f32 %v210, %v396
    %398 = vmatprep.mubr.f32.mxu0 0.0
    %399 = vmatmul.mubr.f32.gmra.mrb[0].mxu0 %v122
    %v400 = vpop.f32.mrb[0].mxu0
    %v401 = vadd.f32 %v206, %v400
    %v402 = vpop.f32.mrb[0].mxu0
    %v403 = vadd.f32 %v210, %v402
    %404 = vmatprep.mubr.f32.mxu0 0.0
    %405 = vmatmul.mubr.f32.gmra.mrb[0].mxu0 %v123
    %v406 = vpop.f32.mrb[0].mxu0
    %v407 = vadd.f32 %v206, %v406
    %v408 = vpop.f32.mrb[0].mxu0
    %v409 = vadd.f32 %v210, %v408
    %410 = vmatprep.mubr.f32.mxu0 0.0
    %411 = vmatmul.mubr.f32.gmra.mrb[0].mxu0 %v124
    %v412 = vpop.f32.mrb[0].mxu0
    %v413 = vadd.f32 %v206, %v412
    %v414 = vpop.f32.mrb[0].mxu0
    %v415 = vadd.f32 %v210, %v414
    %416 = vmatprep.mubr.f32.mxu0 0.0
    %417 = vmatmul.mubr.f32.gmra.mrb[0].mxu0 %v125
    %v418 = vpop.f32.mrb[0].mxu0
    %v419 = vadd.f32 %v206, %v418
    %v420 = vpop.f32.mrb[0].mxu0
    %v421 = vadd.f32 %v210, %v420
    %422 = vmatprep.mubr.f32.mxu0 0.0
    %423 = vmatmul.mubr.f32.gmra.mrb[0].mxu0 %v126
    %v424 = vpop.f32.mrb[0].mxu0
    %v425 = vadd.f32 %v206, %v424
    %v426 = vpop.f32.mrb[0].mxu0
    %v427 = vadd.f32 %v210, %v426
    %428 = vmatprep.mubr.f32.mxu0 0.0
    %429 = vmatmul.mubr.f32.gmra.mrb[0].mxu0 %v127
    %v430 = vpop.f32.mrb[0].mxu0
    %v431 = vadd.f32 %v206, %v430
    %v432 = vpop.f32.mrb[0].mxu0
    %v433 = vadd.f32 %v210, %v432
    %434 = vmatprep.mubr.f32.mxu0 0.0
    %435 = vmatmul.mubr.f32.gmra.mrb[0].mxu0 %v128
    %v436 = vpop.f32.mrb[0].mxu0
    %v437 = vadd.f32 %v206, %v436
    %v438 = vpop.f32.mrb[0].mxu0
    %v439 = vadd.f32 %v210, %v438
    %440 = vdwg.mxu0
    %441 = vst [vmem:[#allocation2] sm:$0xff] %v282
    %442 = vst [vmem:[#allocation2 + $0x8] sm:$0xff] %v284
    %443 = vst [vmem:[#allocation2 + $0x10] sm:$0xff] %v395
    %444 = vst [vmem:[#allocation2 + $0x18] sm:$0xff] %v397
    %445 = vst [vmem:[#allocation2 + $0x20] sm:$0xff] %v288
    %446 = vst [vmem:[#allocation2 + $0x28] sm:$0xff] %v290
    %447 = vst [vmem:[#allocation2 + $0x30] sm:$0xff] %v401
    %448 = vst [vmem:[#allocation2 + $0x38] sm:$0xff] %v403
    %449 = vst [vmem:[#allocation2 + $0x40] sm:$0xff] %v294
    %450 = vst [vmem:[#allocation2 + $0x48] sm:$0xff] %v296
    %451 = vst [vmem:[#allocation2 + $0x50] sm:$0xff] %v407
    %452 = vst [vmem:[#allocation2 + $0x58] sm:$0xff] %v409
    %453 = vst [vmem:[#allocation2 + $0x60] sm:$0xff] %v300
    %454 = vst [vmem:[#allocation2 + $0x68] sm:$0xff] %v302
    %455 = vst [vmem:[#allocation2 + $0x70] sm:$0xff] %v413
    %456 = vst [vmem:[#allocation2 + $0x78] sm:$0xff] %v415
    %457 = vst [vmem:[#allocation2 + $0x80] sm:$0xff] %v306
    %458 = vst [vmem:[#allocation2 + $0x88] sm:$0xff] %v308
    %459 = vst [vmem:[#allocation2 + $0x90] sm:$0xff] %v419
    %460 = vst [vmem:[#allocation2 + $0x98] sm:$0xff] %v421
    %461 = vst [vmem:[#allocation2 + $0xa0] sm:$0xff] %v312
    %462 = vst [vmem:[#allocation2 + $0xa8] sm:$0xff] %v314
    %463 = vst [vmem:[#allocation2 + $0xb0] sm:$0xff] %v425
    %464 = vst [vmem:[#allocation2 + $0xb8] sm:$0xff] %v427
    %465 = vst [vmem:[#allocation2 + $0xc0] sm:$0xff] %v318
    %466 = vst [vmem:[#allocation2 + $0xc8] sm:$0xff] %v320
    %467 = vst [vmem:[#allocation2 + $0xd0] sm:$0xff] %v431
    %468 = vst [vmem:[#allocation2 + $0xd8] sm:$0xff] %v433
    %469 = vst [vmem:[#allocation2 + $0xe0] sm:$0xff] %v324
    %470 = vst [vmem:[#allocation2 + $0xe8] sm:$0xff] %v326
    %471 = vst [vmem:[#allocation2 + $0xf0] sm:$0xff] %v437
    %472 = vst [vmem:[#allocation2 + $0xf8] sm:$0xff] %v439
    %v473 = vld [vmem:[#allocation15] sm:$0xff]
    %v474 = vld [vmem:[#allocation15 + $0x8] sm:$0xff]
    %v475 = vld [vmem:[#allocation15 + $0x10] sm:$0xff]
    %v476 = vld [vmem:[#allocation15 + $0x18] sm:$0xff]
    %v477 = vld [vmem:[#allocation15 + $0x20] sm:$0xff]
    %v478 = vld [vmem:[#allocation15 + $0x28] sm:$0xff]
    %v479 = vld [vmem:[#allocation15 + $0x30] sm:$0xff]
    %v480 = vld [vmem:[#allocation15 + $0x38] sm:$0xff]
    %v481 = vld [vmem:[#allocation15 + $0x40] sm:$0xff]
    %v482 = vld [vmem:[#allocation15 + $0x48] sm:$0xff]
    %v483 = vld [vmem:[#allocation15 + $0x50] sm:$0xff]
    %v484 = vld [vmem:[#allocation15 + $0x58] sm:$0xff]
    %v485 = vld [vmem:[#allocation15 + $0x60] sm:$0xff]
    %v486 = vld [vmem:[#allocation15 + $0x68] sm:$0xff]
    %v487 = vld [vmem:[#allocation15 + $0x70] sm:$0xff]
    %v488 = vld [vmem:[#allocation15 + $0x78] sm:$0xff]
    %v489 = vld [vmem:[#allocation15 + $0x80] sm:$0xff]
    %v490 = vld [vmem:[#allocation15 + $0x88] sm:$0xff]
    %v491 = vld [vmem:[#allocation15 + $0x90] sm:$0xff]
    %v492 = vld [vmem:[#allocation15 + $0x98] sm:$0xff]
    %v493 = vld [vmem:[#allocation15 + $0xa0] sm:$0xff]
    %v494 = vld [vmem:[#allocation15 + $0xa8] sm:$0xff]
    %v495 = vld [vmem:[#allocation15 + $0xb0] sm:$0xff]
    %v496 = vld [vmem:[#allocation15 + $0xb8] sm:$0xff]
    %v497 = vld [vmem:[#allocation15 + $0xc0] sm:$0xff]
    %v498 = vld [vmem:[#allocation15 + $0xc8] sm:$0xff]
    %v499 = vld [vmem:[#allocation15 + $0xd0] sm:$0xff]
    %v500 = vld [vmem:[#allocation15 + $0xd8] sm:$0xff]
    %v501 = vld [vmem:[#allocation15 + $0xe0] sm:$0xff]
    %v502 = vld [vmem:[#allocation15 + $0xe8] sm:$0xff]
    %v503 = vld [vmem:[#allocation15 + $0xf0] sm:$0xff]
    %v504 = vld [vmem:[#allocation15 + $0xf8] sm:$0xff]
    %v505 = vld [vmem:[#allocation15 + $0x100] sm:$0xff]
    %v506 = vld [vmem:[#allocation15 + $0x108] sm:$0xff]
    %v507 = vld [vmem:[#allocation15 + $0x110] sm:$0xff]
    %v508 = vld [vmem:[#allocation15 + $0x118] sm:$0xff]
    %v509 = vld [vmem:[#allocation15 + $0x120] sm:$0xff]
    %v510 = vld [vmem:[#allocation15 + $0x128] sm:$0xff]
    %v511 = vld [vmem:[#allocation15 + $0x130] sm:$0xff]
    %v512 = vld [vmem:[#allocation15 + $0x138] sm:$0xff]
    %v513 = vld [vmem:[#allocation15 + $0x140] sm:$0xff]
    %v514 = vld [vmem:[#allocation15 + $0x148] sm:$0xff]
    %v515 = vld [vmem:[#allocation15 + $0x150] sm:$0xff]
    %v516 = vld [vmem:[#allocation15 + $0x158] sm:$0xff]
    %v517 = vld [vmem:[#allocation15 + $0x160] sm:$0xff]
    %v518 = vld [vmem:[#allocation15 + $0x168] sm:$0xff]
    %v519 = vld [vmem:[#allocation15 + $0x170] sm:$0xff]
    %v520 = vld [vmem:[#allocation15 + $0x178] sm:$0xff]
    %v521 = vld [vmem:[#allocation15 + $0x180] sm:$0xff]
    %v522 = vld [vmem:[#allocation15 + $0x188] sm:$0xff]
    %v523 = vld [vmem:[#allocation15 + $0x190] sm:$0xff]
    %v524 = vld [vmem:[#allocation15 + $0x198] sm:$0xff]
    %v525 = vld [vmem:[#allocation15 + $0x1a0] sm:$0xff]
    %v526 = vld [vmem:[#allocation15 + $0x1a8] sm:$0xff]
    %v527 = vld [vmem:[#allocation15 + $0x1b0] sm:$0xff]
    %v528 = vld [vmem:[#allocation15 + $0x1b8] sm:$0xff]
    %v529 = vld [vmem:[#allocation15 + $0x1c0] sm:$0xff]
    %v530 = vld [vmem:[#allocation15 + $0x1c8] sm:$0xff]
    %v531 = vld [vmem:[#allocation15 + $0x1d0] sm:$0xff]
    %v532 = vld [vmem:[#allocation15 + $0x1d8] sm:$0xff]
    %v533 = vld [vmem:[#allocation15 + $0x1e0] sm:$0xff]
    %v534 = vld [vmem:[#allocation15 + $0x1e8] sm:$0xff]
    %v535 = vld [vmem:[#allocation15 + $0x1f0] sm:$0xff]
    %v536 = vld [vmem:[#allocation15 + $0x1f8] sm:$0xff]
    %v537 = vld [vmem:[#allocation16] sm:$0xff]
    %v538 = vld [vmem:[#allocation16 + $0x8] sm:$0xff]
    %v539 = vld [vmem:[#allocation16 + $0x10] sm:$0xff]
    %v540 = vld [vmem:[#allocation16 + $0x18] sm:$0xff]
    %v541 = vld [vmem:[#allocation16 + $0x20] sm:$0xff]
    %v542 = vld [vmem:[#allocation16 + $0x28] sm:$0xff]
    %v543 = vld [vmem:[#allocation16 + $0x30] sm:$0xff]
    %v544 = vld [vmem:[#allocation16 + $0x38] sm:$0xff]
    %v545 = vld [vmem:[#allocation16 + $0x40] sm:$0xff]
    %v546 = vld [vmem:[#allocation16 + $0x48] sm:$0xff]
    %v547 = vld [vmem:[#allocation16 + $0x50] sm:$0xff]
    %v548 = vld [vmem:[#allocation16 + $0x58] sm:$0xff]
    %v549 = vld [vmem:[#allocation16 + $0x60] sm:$0xff]
    %v550 = vld [vmem:[#allocation16 + $0x68] sm:$0xff]
    %v551 = vld [vmem:[#allocation16 + $0x70] sm:$0xff]
    %v552 = vld [vmem:[#allocation16 + $0x78] sm:$0xff]
    %v553 = vld [vmem:[#allocation16 + $0x80] sm:$0xff]
    %v554 = vld [vmem:[#allocation16 + $0x88] sm:$0xff]
    %v555 = vld [vmem:[#allocation16 + $0x90] sm:$0xff]
    %v556 = vld [vmem:[#allocation16 + $0x98] sm:$0xff]
    %v557 = vld [vmem:[#allocation16 + $0xa0] sm:$0xff]
    %v558 = vld [vmem:[#allocation16 + $0xa8] sm:$0xff]
    %v559 = vld [vmem:[#allocation16 + $0xb0] sm:$0xff]
    %v560 = vld [vmem:[#allocation16 + $0xb8] sm:$0xff]
    %v561 = vld [vmem:[#allocation16 + $0xc0] sm:$0xff]
    %v562 = vld [vmem:[#allocation16 + $0xc8] sm:$0xff]
    %v563 = vld [vmem:[#allocation16 + $0xd0] sm:$0xff]
    %v564 = vld [vmem:[#allocation16 + $0xd8] sm:$0xff]
    %v565 = vld [vmem:[#allocation16 + $0xe0] sm:$0xff]
    %v566 = vld [vmem:[#allocation16 + $0xe8] sm:$0xff]
    %v567 = vld [vmem:[#allocation16 + $0xf0] sm:$0xff]
    %v568 = vld [vmem:[#allocation16 + $0xf8] sm:$0xff]
    %v569 = vld [vmem:[#allocation16 + $0x100] sm:$0xff]
    %v570 = vld [vmem:[#allocation16 + $0x108] sm:$0xff]
    %v571 = vld [vmem:[#allocation16 + $0x110] sm:$0xff]
    %v572 = vld [vmem:[#allocation16 + $0x118] sm:$0xff]
    %v573 = vld [vmem:[#allocation16 + $0x120] sm:$0xff]
    %v574 = vld [vmem:[#allocation16 + $0x128] sm:$0xff]
    %v575 = vld [vmem:[#allocation16 + $0x130] sm:$0xff]
    %v576 = vld [vmem:[#allocation16 + $0x138] sm:$0xff]
    %v577 = vld [vmem:[#allocation16 + $0x140] sm:$0xff]
    %v578 = vld [vmem:[#allocation16 + $0x148] sm:$0xff]
    %v579 = vld [vmem:[#allocation16 + $0x150] sm:$0xff]
    %v580 = vld [vmem:[#allocation16 + $0x158] sm:$0xff]
    %v581 = vld [vmem:[#allocation16 + $0x160] sm:$0xff]
    %v582 = vld [vmem:[#allocation16 + $0x168] sm:$0xff]
    %v583 = vld [vmem:[#allocation16 + $0x170] sm:$0xff]
    %v584 = vld [vmem:[#allocation16 + $0x178] sm:$0xff]
    %v585 = vld [vmem:[#allocation16 + $0x180] sm:$0xff]
    %v586 = vld [vmem:[#allocation16 + $0x188] sm:$0xff]
    %v587 = vld [vmem:[#allocation16 + $0x190] sm:$0xff]
    %v588 = vld [vmem:[#allocation16 + $0x198] sm:$0xff]
    %v589 = vld [vmem:[#allocation16 + $0x1a0] sm:$0xff]
    %v590 = vld [vmem:[#allocation16 + $0x1a8] sm:$0xff]
    %v591 = vld [vmem:[#allocation16 + $0x1b0] sm:$0xff]
    %v592 = vld [vmem:[#allocation16 + $0x1b8] sm:$0xff]
    %v593 = vld [vmem:[#allocation16 + $0x1c0] sm:$0xff]
    %v594 = vld [vmem:[#allocation16 + $0x1c8] sm:$0xff]
    %v595 = vld [vmem:[#allocation16 + $0x1d0] sm:$0xff]
    %v596 = vld [vmem:[#allocation16 + $0x1d8] sm:$0xff]
    %v597 = vld [vmem:[#allocation16 + $0x1e0] sm:$0xff]
    %v598 = vld [vmem:[#allocation16 + $0x1e8] sm:$0xff]
    %v599 = vld [vmem:[#allocation16 + $0x1f0] sm:$0xff]
    %v600 = vld [vmem:[#allocation16 + $0x1f8] sm:$0xff]
    %v601 = vld [vmem:[#allocation16 + $0x200] sm:$0xff]
    %v602 = vld [vmem:[#allocation16 + $0x208] sm:$0xff]
    %v603 = vld [vmem:[#allocation16 + $0x210] sm:$0xff]
    %v604 = vld [vmem:[#allocation16 + $0x218] sm:$0xff]
    %v605 = vld [vmem:[#allocation16 + $0x220] sm:$0xff]
    %v606 = vld [vmem:[#allocation16 + $0x228] sm:$0xff]
    %v607 = vld [vmem:[#allocation16 + $0x230] sm:$0xff]
    %v608 = vld [vmem:[#allocation16 + $0x238] sm:$0xff]
    %v609 = vld [vmem:[#allocation16 + $0x240] sm:$0xff]
    %v610 = vld [vmem:[#allocation16 + $0x248] sm:$0xff]
    %v611 = vld [vmem:[#allocation16 + $0x250] sm:$0xff]
    %v612 = vld [vmem:[#allocation16 + $0x258] sm:$0xff]
    %v613 = vld [vmem:[#allocation16 + $0x260] sm:$0xff]
    %v614 = vld [vmem:[#allocation16 + $0x268] sm:$0xff]
    %v615 = vld [vmem:[#allocation16 + $0x270] sm:$0xff]
    %v616 = vld [vmem:[#allocation16 + $0x278] sm:$0xff]
    %v617 = vld [vmem:[#allocation16 + $0x280] sm:$0xff]
    %v618 = vld [vmem:[#allocation16 + $0x288] sm:$0xff]
    %v619 = vld [vmem:[#allocation16 + $0x290] sm:$0xff]
    %v620 = vld [vmem:[#allocation16 + $0x298] sm:$0xff]
    %v621 = vld [vmem:[#allocation16 + $0x2a0] sm:$0xff]
    %v622 = vld [vmem:[#allocation16 + $0x2a8] sm:$0xff]
    %v623 = vld [vmem:[#allocation16 + $0x2b0] sm:$0xff]
    %v624 = vld [vmem:[#allocation16 + $0x2b8] sm:$0xff]
    %v625 = vld [vmem:[#allocation16 + $0x2c0] sm:$0xff]
    %v626 = vld [vmem:[#allocation16 + $0x2c8] sm:$0xff]
    %v627 = vld [vmem:[#allocation16 + $0x2d0] sm:$0xff]
    %v628 = vld [vmem:[#allocation16 + $0x2d8] sm:$0xff]
    %v629 = vld [vmem:[#allocation16 + $0x2e0] sm:$0xff]
    %v630 = vld [vmem:[#allocation16 + $0x2e8] sm:$0xff]
    %v631 = vld [vmem:[#allocation16 + $0x2f0] sm:$0xff]
    %v632 = vld [vmem:[#allocation16 + $0x2f8] sm:$0xff]
    %v633 = vld [vmem:[#allocation16 + $0x300] sm:$0xff]
    %v634 = vld [vmem:[#allocation16 + $0x308] sm:$0xff]
    %v635 = vld [vmem:[#allocation16 + $0x310] sm:$0xff]
    %v636 = vld [vmem:[#allocation16 + $0x318] sm:$0xff]
    %v637 = vld [vmem:[#allocation16 + $0x320] sm:$0xff]
    %v638 = vld [vmem:[#allocation16 + $0x328] sm:$0xff]
    %v639 = vld [vmem:[#allocation16 + $0x330] sm:$0xff]
    %v640 = vld [vmem:[#allocation16 + $0x338] sm:$0xff]
    %v641 = vld [vmem:[#allocation16 + $0x340] sm:$0xff]
    %v642 = vld [vmem:[#allocation16 + $0x348] sm:$0xff]
    %v643 = vld [vmem:[#allocation16 + $0x350] sm:$0xff]
    %v644 = vld [vmem:[#allocation16 + $0x358] sm:$0xff]
    %v645 = vld [vmem:[#allocation16 + $0x360] sm:$0xff]
    %v646 = vld [vmem:[#allocation16 + $0x368] sm:$0xff]
    %v647 = vld [vmem:[#allocation16 + $0x370] sm:$0xff]
    %v648 = vld [vmem:[#allocation16 + $0x378] sm:$0xff]
    %v649 = vld [vmem:[#allocation16 + $0x380] sm:$0xff]
    %v650 = vld [vmem:[#allocation16 + $0x388] sm:$0xff]
    %v651 = vld [vmem:[#allocation16 + $0x390] sm:$0xff]
    %v652 = vld [vmem:[#allocation16 + $0x398] sm:$0xff]
    %v653 = vld [vmem:[#allocation16 + $0x3a0] sm:$0xff]
    %v654 = vld [vmem:[#allocation16 + $0x3a8] sm:$0xff]
    %v655 = vld [vmem:[#allocation16 + $0x3b0] sm:$0xff]
    %v656 = vld [vmem:[#allocation16 + $0x3b8] sm:$0xff]
    %v657 = vld [vmem:[#allocation16 + $0x3c0] sm:$0xff]
    %v658 = vld [vmem:[#allocation16 + $0x3c8] sm:$0xff]
    %v659 = vld [vmem:[#allocation16 + $0x3d0] sm:$0xff]
    %v660 = vld [vmem:[#allocation16 + $0x3d8] sm:$0xff]
    %v661 = vld [vmem:[#allocation16 + $0x3e0] sm:$0xff]
    %v662 = vld [vmem:[#allocation16 + $0x3e8] sm:$0xff]
    %v663 = vld [vmem:[#allocation16 + $0x3f0] sm:$0xff]
    %v664 = vld [vmem:[#allocation16 + $0x3f8] sm:$0xff]
    %v665 = vld [vmem:[%s5] sm:$0xf]
    %v666 = vld [vmem:[%s6] sm:$0x1]
    %v667 = vld [vmem:[#allocation9] sm:$0x1]
    %v668 = vld [vmem:[#allocation3] sm:$0xff]
    %v669 = vld [vmem:[#allocation4] sm:$0xff]
    %s670 = scalar_lea.vmem [#allocation3], 8
    %v671 = vld [vmem:[%s670] sm:$0xff]
    %s672 = scalar_lea.vmem [#allocation4], 8
    %v673 = vld [vmem:[%s672] sm:$0xff]
    %v674 = vld [vmem:[#allocation5] sm:$0xff]
    %v675 = vld [vmem:[#allocation6] sm:$0xff]
    %v676 = vld [vmem:[#allocation7] sm:$0xff]
    %v677 = vlaneseq
    %v678 = vand.u32 %v677, 127
    %v679 = vld [vmem:[#allocation2] sm:$0xff]
    %v680 = vld [vmem:[#allocation2 + $0x8] sm:$0xff]
    %v681 = vld [vmem:[#allocation2 + $0x10] sm:$0xff]
    %v682 = vld [vmem:[#allocation2 + $0x18] sm:$0xff]
    %683 = vmatprep.subr.mxu0 %v474
    %684 = vmatpush1.msra.mxu0 %v473
    %685 = vmatprep.subr.mxu0 %v478
    %686 = vmatpush1.msra.mxu0 %v477
    %687 = vmatprep.subr.mxu0 %v482
    %688 = vmatpush1.msra.mxu0 %v481
    %689 = vmatprep.subr.mxu0 %v486
    %690 = vmatpush1.msra.mxu0 %v485
    %691 = vmatprep.subr.mxu0 %v490
    %692 = vmatpush1.msra.mxu0 %v489
    %693 = vmatprep.subr.mxu0 %v494
    %694 = vmatpush1.msra.mxu0 %v493
    %695 = vmatprep.subr.mxu0 %v498
    %696 = vmatpush1.msra.mxu0 %v497
    %697 = vmatprep.subr.mxu0 %v502
    %698 = vmatpush1.msra.mxu0 %v501
    %699 = vmatprep.subr.mxu0 %v506
    %700 = vmatpush1.msra.mxu0 %v505
    %701 = vmatprep.subr.mxu0 %v510
    %702 = vmatpush1.msra.mxu0 %v509
    %703 = vmatprep.subr.mxu0 %v514
    %704 = vmatpush1.msra.mxu0 %v513
    %705 = vmatprep.subr.mxu0 %v518
    %706 = vmatpush1.msra.mxu0 %v517
    %707 = vmatprep.subr.mxu0 %v522
    %708 = vmatpush1.msra.mxu0 %v521
    %709 = vmatprep.subr.mxu0 %v526
    %710 = vmatpush1.msra.mxu0 %v525
    %711 = vmatprep.subr.mxu0 %v530
    %712 = vmatpush1.msra.mxu0 %v529
    %713 = vmatprep.subr.mxu0 %v534
    %714 = vmatpush1.msra.mxu0 %v533
    %715 = vmatprep.subr.mxu0 0.0
    %716 = vmatpush1.msra.mxu0 0.0
    %717 = vmatprep.subr.mxu0 0.0
    %718 = vmatpush1.msra.mxu0 0.0
    %719 = vmatprep.subr.mxu0 0.0
    %720 = vmatpush1.msra.mxu0 0.0
    %721 = vmatprep.subr.mxu0 0.0
    %722 = vmatpush1.msra.mxu0 0.0
    %723 = vmatprep.subr.mxu0 0.0
    %724 = vmatpush1.msra.mxu0 0.0
    %725 = vmatprep.subr.mxu0 0.0
    %726 = vmatpush1.msra.mxu0 0.0
    %727 = vmatprep.subr.mxu0 0.0
    %728 = vmatpush1.msra.mxu0 0.0
    %729 = vmatprep.subr.mxu0 0.0
    %730 = vmatpush1.msra.mxu0 0.0
    %731 = vmatprep.subr.mxu0 0.0
    %732 = vmatpush1.msra.mxu0 0.0
    %733 = vmatprep.subr.mxu0 0.0
    %734 = vmatpush1.msra.mxu0 0.0
    %735 = vmatprep.subr.mxu0 0.0
    %736 = vmatpush1.msra.mxu0 0.0
    %737 = vmatprep.subr.mxu0 0.0
    %738 = vmatpush1.msra.mxu0 0.0
    %739 = vmatprep.subr.mxu0 0.0
    %740 = vmatpush1.msra.mxu0 0.0
    %741 = vmatprep.subr.mxu0 0.0
    %742 = vmatpush1.msra.mxu0 0.0
    %743 = vmatprep.subr.mxu0 0.0
    %744 = vmatpush1.msra.mxu0 0.0
    %745 = vmatprep.subr.mxu0 0.0
    %746 = vmatpush1.msra.mxu0 0.0
    %747 = vmatprep.mubr.f32.mxu0 0.0
    %748 = vmatmul.mubr.f32.gmra.mrb[0].mxu0 %v668
    %v749 = vpop.f32.mrb[0].mxu0
    %v750 = vadd.f32 0.0, %v749
    %v751 = vpop.f32.mrb[0].mxu0
    %v752 = vadd.f32 0.0, %v751
    %753 = vdwg.mxu0
    %754 = vmatprep.subr.mxu0 %v476
    %755 = vmatpush1.msra.mxu0 %v475
    %756 = vmatprep.subr.mxu0 %v480
    %757 = vmatpush1.msra.mxu0 %v479
    %758 = vmatprep.subr.mxu0 %v484
    %759 = vmatpush1.msra.mxu0 %v483
    %760 = vmatprep.subr.mxu0 %v488
    %761 = vmatpush1.msra.mxu0 %v487
    %762 = vmatprep.subr.mxu0 %v492
    %763 = vmatpush1.msra.mxu0 %v491
    %764 = vmatprep.subr.mxu0 %v496
    %765 = vmatpush1.msra.mxu0 %v495
    %766 = vmatprep.subr.mxu0 %v500
    %767 = vmatpush1.msra.mxu0 %v499
    %768 = vmatprep.subr.mxu0 %v504
    %769 = vmatpush1.msra.mxu0 %v503
    %770 = vmatprep.subr.mxu0 %v508
    %771 = vmatpush1.msra.mxu0 %v507
    %772 = vmatprep.subr.mxu0 %v512
    %773 = vmatpush1.msra.mxu0 %v511
    %774 = vmatprep.subr.mxu0 %v516
    %775 = vmatpush1.msra.mxu0 %v515
    %776 = vmatprep.subr.mxu0 %v520
    %777 = vmatpush1.msra.mxu0 %v519
    %778 = vmatprep.subr.mxu0 %v524
    %779 = vmatpush1.msra.mxu0 %v523
    %780 = vmatprep.subr.mxu0 %v528
    %781 = vmatpush1.msra.mxu0 %v527
    %782 = vmatprep.subr.mxu0 %v532
    %783 = vmatpush1.msra.mxu0 %v531
    %784 = vmatprep.subr.mxu0 %v536
    %785 = vmatpush1.msra.mxu0 %v535
    %786 = vmatprep.subr.mxu0 0.0
    %787 = vmatpush1.msra.mxu0 0.0
    %788 = vmatprep.subr.mxu0 0.0
    %789 = vmatpush1.msra.mxu0 0.0
    %790 = vmatprep.subr.mxu0 0.0
    %791 = vmatpush1.msra.mxu0 0.0
    %792 = vmatprep.subr.mxu0 0.0
    %793 = vmatpush1.msra.mxu0 0.0
    %794 = vmatprep.subr.mxu0 0.0
    %795 = vmatpush1.msra.mxu0 0.0
    %796 = vmatprep.subr.mxu0 0.0
    %797 = vmatpush1.msra.mxu0 0.0
    %798 = vmatprep.subr.mxu0 0.0
    %799 = vmatpush1.msra.mxu0 0.0
    %800 = vmatprep.subr.mxu0 0.0
    %801 = vmatpush1.msra.mxu0 0.0
    %802 = vmatprep.subr.mxu0 0.0
    %803 = vmatpush1.msra.mxu0 0.0
    %804 = vmatprep.subr.mxu0 0.0
    %805 = vmatpush1.msra.mxu0 0.0
    %806 = vmatprep.subr.mxu0 0.0
    %807 = vmatpush1.msra.mxu0 0.0
    %808 = vmatprep.subr.mxu0 0.0
    %809 = vmatpush1.msra.mxu0 0.0
    %810 = vmatprep.subr.mxu0 0.0
    %811 = vmatpush1.msra.mxu0 0.0
    %812 = vmatprep.subr.mxu0 0.0
    %813 = vmatpush1.msra.mxu0 0.0
    %814 = vmatprep.subr.mxu0 0.0
    %815 = vmatpush1.msra.mxu0 0.0
    %816 = vmatprep.subr.mxu0 0.0
    %817 = vmatpush1.msra.mxu0 0.0
    %818 = vmatprep.mubr.f32.mxu0 0.0
    %819 = vmatmul.mubr.f32.gmra.mrb[0].mxu0 %v668
    %v820 = vpop.f32.mrb[0].mxu0
    %v821 = vadd.f32 0.0, %v820
    %v822 = vpop.f32.mrb[0].mxu0
    %v823 = vadd.f32 0.0, %v822
    %824 = vdwg.mxu0
    %v825 = vadd.f32 %v679, %v750
    %v826 = vadd.f32 %v680, %v752
    %v827 = vadd.f32 %v681, %v821
    %v828 = vadd.f32 %v682, %v823
    %v829 = vxor.u32 %v825, 2147483648
    %v830 = vmul.f32 %v829, 1.442695
    %v831 = vpow.pop %v830
    %v832 = vadd.f32 %v831, 1.0
    %v833 = vrcp.pop %v832
    %v834 = vmul.f32 1.0, %v833
    %v835 = vxor.u32 %v826, 2147483648
    %v836 = vmul.f32 %v835, 1.442695
    %v837 = vpow.pop %v836
    %v838 = vadd.f32 %v837, 1.0
    %v839 = vrcp.pop %v838
    %v840 = vmul.f32 1.0, %v839
    %v841 = vtanh.pop %v827
    %v842 = vxor.u32 %v828, 2147483648
    %v843 = vmul.f32 %v842, 1.442695
    %v844 = vpow.pop %v843
    %v845 = vadd.f32 %v844, 1.0
    %v846 = vrcp.pop %v845
    %v847 = vmul.f32 1.0, %v846
    %v848 = vmul.f32 %v840, %v669
    %v849 = vmul.f32 %v834, %v841
    %v850 = vadd.f32 %v848, %v849
    %v851 = vtanh.pop %v850
    %v852 = vmul.f32 %v847, %v851
    %v854 = vlaneseq
    %v855 = vshrl.u32 %v854, 7
    %v856 = vsub.s32 0, %v855
    %v857 = vrot.slane %v665, %v856
    %v858 = vlaneseq
    %v859 = vshrl.u32 %v858, 7
    %v860 = vsub.s32 1, %v859
    %v861 = vrot.slane %v665, %v860
    %v862 = vlaneseq
    %v863 = vshrl.u32 %v862, 7
    %v864 = vsub.s32 2, %v863
    %v865 = vrot.slane %v665, %v864
    %v866 = vlaneseq
    %v867 = vshrl.u32 %v866, 7
    %v868 = vsub.s32 3, %v867
    %v869 = vrot.slane %v665, %v868
    %874 = vmatprep.subr.mxu0 %v538
    %875 = vmatpush1.msra.mxu0 %v537
    %876 = vmatprep.subr.mxu0 %v542
    %877 = vmatpush1.msra.mxu0 %v541
    %878 = vmatprep.subr.mxu0 %v546
    %879 = vmatpush1.msra.mxu0 %v545
    %880 = vmatprep.subr.mxu0 %v550
    %881 = vmatpush1.msra.mxu0 %v549
    %882 = vmatprep.subr.mxu0 %v554
    %883 = vmatpush1.msra.mxu0 %v553
    %884 = vmatprep.subr.mxu0 %v558
    %885 = vmatpush1.msra.mxu0 %v557
    %886 = vmatprep.subr.mxu0 %v562
    %887 = vmatpush1.msra.mxu0 %v561
    %888 = vmatprep.subr.mxu0 %v566
    %889 = vmatpush1.msra.mxu0 %v565
    %890 = vmatprep.subr.mxu0 %v570
    %891 = vmatpush1.msra.mxu0 %v569
    %892 = vmatprep.subr.mxu0 %v574
    %893 = vmatpush1.msra.mxu0 %v573
    %894 = vmatprep.subr.mxu0 %v578
    %895 = vmatpush1.msra.mxu0 %v577
    %896 = vmatprep.subr.mxu0 %v582
    %897 = vmatpush1.msra.mxu0 %v581
    %898 = vmatprep.subr.mxu0 %v586
    %899 = vmatpush1.msra.mxu0 %v585
    %900 = vmatprep.subr.mxu0 %v590
    %901 = vmatpush1.msra.mxu0 %v589
    %902 = vmatprep.subr.mxu0 %v594
    %903 = vmatpush1.msra.mxu0 %v593
    %904 = vmatprep.subr.mxu0 %v598
    %905 = vmatpush1.msra.mxu0 %v597
    %906 = vmatprep.subr.mxu0 %v602
    %907 = vmatpush1.msra.mxu0 %v601
    %908 = vmatprep.subr.mxu0 %v606
    %909 = vmatpush1.msra.mxu0 %v605
    %910 = vmatprep.subr.mxu0 %v610
    %911 = vmatpush1.msra.mxu0 %v609
    %912 = vmatprep.subr.mxu0 %v614
    %913 = vmatpush1.msra.mxu0 %v613
    %914 = vmatprep.subr.mxu0 %v618
    %915 = vmatpush1.msra.mxu0 %v617
    %916 = vmatprep.subr.mxu0 %v622
    %917 = vmatpush1.msra.mxu0 %v621
    %918 = vmatprep.subr.mxu0 %v626
    %919 = vmatpush1.msra.mxu0 %v625
    %920 = vmatprep.subr.mxu0 %v630
    %921 = vmatpush1.msra.mxu0 %v629
    %922 = vmatprep.subr.mxu0 %v634
    %923 = vmatpush1.msra.mxu0 %v633
    %924 = vmatprep.subr.mxu0 %v638
    %925 = vmatpush1.msra.mxu0 %v637
    %926 = vmatprep.subr.mxu0 %v642
    %927 = vmatpush1.msra.mxu0 %v641
    %928 = vmatprep.subr.mxu0 %v646
    %929 = vmatpush1.msra.mxu0 %v645
    %930 = vmatprep.subr.mxu0 %v650
    %931 = vmatpush1.msra.mxu0 %v649
    %932 = vmatprep.subr.mxu0 %v654
    %933 = vmatpush1.msra.mxu0 %v653
    %934 = vmatprep.subr.mxu0 %v658
    %935 = vmatpush1.msra.mxu0 %v657
    %936 = vmatprep.subr.mxu0 %v662
    %937 = vmatpush1.msra.mxu0 %v661
    %938 = vmatprep.mubr.f32.mxu0 %v671
    %939 = vmatmul.mubr.f32.gmra.mrb[0].mxu0 %v852
    %v940 = vpop.f32.mrb[0].mxu0
    %v941 = vadd.f32 %v857, %v940
    %v942 = vpop.f32.mrb[0].mxu0
    %v943 = vadd.f32 %v861, %v942
    %944 = vdwg.mxu0
    %945 = vmatprep.subr.mxu0 %v540
    %946 = vmatpush1.msra.mxu0 %v539
    %947 = vmatprep.subr.mxu0 %v544
    %948 = vmatpush1.msra.mxu0 %v543
    %949 = vmatprep.subr.mxu0 %v548
    %950 = vmatpush1.msra.mxu0 %v547
    %951 = vmatprep.subr.mxu0 %v552
    %952 = vmatpush1.msra.mxu0 %v551
    %953 = vmatprep.subr.mxu0 %v556
    %954 = vmatpush1.msra.mxu0 %v555
    %955 = vmatprep.subr.mxu0 %v560
    %956 = vmatpush1.msra.mxu0 %v559
    %957 = vmatprep.subr.mxu0 %v564
    %958 = vmatpush1.msra.mxu0 %v563
    %959 = vmatprep.subr.mxu0 %v568
    %960 = vmatpush1.msra.mxu0 %v567
    %961 = vmatprep.subr.mxu0 %v572
    %962 = vmatpush1.msra.mxu0 %v571
    %963 = vmatprep.subr.mxu0 %v576
    %964 = vmatpush1.msra.mxu0 %v575
    %965 = vmatprep.subr.mxu0 %v580
    %966 = vmatpush1.msra.mxu0 %v579
    %967 = vmatprep.subr.mxu0 %v584
    %968 = vmatpush1.msra.mxu0 %v583
    %969 = vmatprep.subr.mxu0 %v588
    %970 = vmatpush1.msra.mxu0 %v587
    %971 = vmatprep.subr.mxu0 %v592
    %972 = vmatpush1.msra.mxu0 %v591
    %973 = vmatprep.subr.mxu0 %v596
    %974 = vmatpush1.msra.mxu0 %v595
    %975 = vmatprep.subr.mxu0 %v600
    %976 = vmatpush1.msra.mxu0 %v599
    %977 = vmatprep.subr.mxu0 %v604
    %978 = vmatpush1.msra.mxu0 %v603
    %979 = vmatprep.subr.mxu0 %v608
    %980 = vmatpush1.msra.mxu0 %v607
    %981 = vmatprep.subr.mxu0 %v612
    %982 = vmatpush1.msra.mxu0 %v611
    %983 = vmatprep.subr.mxu0 %v616
    %984 = vmatpush1.msra.mxu0 %v615
    %985 = vmatprep.subr.mxu0 %v620
    %986 = vmatpush1.msra.mxu0 %v619
    %987 = vmatprep.subr.mxu0 %v624
    %988 = vmatpush1.msra.mxu0 %v623
    %989 = vmatprep.subr.mxu0 %v628
    %990 = vmatpush1.msra.mxu0 %v627
    %991 = vmatprep.subr.mxu0 %v632
    %992 = vmatpush1.msra.mxu0 %v631
    %993 = vmatprep.subr.mxu0 %v636
    %994 = vmatpush1.msra.mxu0 %v635
    %995 = vmatprep.subr.mxu0 %v640
    %996 = vmatpush1.msra.mxu0 %v639
    %997 = vmatprep.subr.mxu0 %v644
    %998 = vmatpush1.msra.mxu0 %v643
    %999 = vmatprep.subr.mxu0 %v648
    %1000 = vmatpush1.msra.mxu0 %v647
    %1001 = vmatprep.subr.mxu0 %v652
    %1002 = vmatpush1.msra.mxu0 %v651
    %1003 = vmatprep.subr.mxu0 %v656
    %1004 = vmatpush1.msra.mxu0 %v655
    %1005 = vmatprep.subr.mxu0 %v660
    %1006 = vmatpush1.msra.mxu0 %v659
    %1007 = vmatprep.subr.mxu0 %v664
    %1008 = vmatpush1.msra.mxu0 %v663
    %1009 = vmatprep.mubr.f32.mxu0 %v671
    %1010 = vmatmul.mubr.f32.gmra.mrb[0].mxu0 %v852
    %v1011 = vpop.f32.mrb[0].mxu0
    %v1012 = vadd.f32 %v865, %v1011
    %v1013 = vpop.f32.mrb[0].mxu0
    %v1014 = vadd.f32 %v869, %v1013
    %1015 = vdwg.mxu0
    %v1016 = vxor.u32 %v941, 2147483648
    %v1017 = vmul.f32 %v1016, 1.442695
    %v1018 = vpow.pop %v1017
    %v1019 = vadd.f32 %v1018, 1.0
    %v1020 = vrcp.pop %v1019
    %v1021 = vmul.f32 1.0, %v1020
    %v1022 = vxor.u32 %v943, 2147483648
    %v1023 = vmul.f32 %v1022, 1.442695
    %v1024 = vpow.pop %v1023
    %v1025 = vadd.f32 %v1024, 1.0
    %v1026 = vrcp.pop %v1025
    %v1027 = vmul.f32 1.0, %v1026
    %v1028 = vtanh.pop %v1012
    %v1029 = vxor.u32 %v1014, 2147483648
    %v1030 = vmul.f32 %v1029, 1.442695
    %v1031 = vpow.pop %v1030
    %v1032 = vadd.f32 %v1031, 1.0
    %v1033 = vrcp.pop %v1032
    %v1034 = vmul.f32 1.0, %v1033
    %v1035 = vmul.f32 %v1027, %v673
    %v1036 = vmul.f32 %v1021, %v1028
    %v1037 = vadd.f32 %v1035, %v1036
    %v1038 = vtanh.pop %v1037
    %v1039 = vmul.f32 %v1034, %v1038
    %v1041 = vlaneseq
    %v1042 = vshrl.u32 %v1041, 7
    %v1043 = vsub.s32 0, %v1042
    %v1044 = vrot.slane %v666, %v1043
    %v1046 = vmul.f32 %v1039, %v1044
    %1047 = vadd.xlane.f32.xlu0 %v1046
    %v1048 = vpop.xlane.xlu0 %1047
    %v1050 = vlaneseq
    %v1051 = vshrl.u32 %v1050, 7
    %v1052 = vsub.s32 0, %v1051
    %v1053 = vrot.slane %v667, %v1052
    %v1055 = vadd.f32 %v1048, %v1053
    %v1056 = vmax.f32 %v674, %v1055
    %v1057 = vsub.f32 %v674, %v1056
    %v1058 = vmul.f32 %v1057, 1.442695
    %v1059 = vpow.pop %v1058
    %v1060 = vsub.f32 %v1055, %v1056
    %v1061 = vmul.f32 %v1060, 1.442695
    %v1062 = vpow.pop %v1061
    %v1063 = vmul.f32 %v1059, %v675
    %v1064 = vadd.f32 %v1063, %v1062
    %1066 = vset.pattern.permute.xlu0 0
    %1067 = vperm.xlu0 %1066, %v1059
    %v1068 = vpop.permute.xlu0 %1067
    %v1070 = vmul.f32 %v1068, %v676
    %1072 = vset.pattern.permute.xlu0 0
    %1073 = vperm.xlu0 %1072, %v1062
    %v1074 = vpop.permute.xlu0 %1073
    %v1076 = vmul.f32 %v1074, %v1039
    %v1077 = vadd.f32 %v1070, %v1076
    %vm1078 = vcmp.eq.s32.totalorder %v678, 0
    %1080 = vset.pattern.permute.xlu0 0
    %1081 = vperm.xlu0 %1080, %v1055
    %v1082 = vpop.permute.xlu0 %1081
    %v1084 = vsel %vm1078, %v1082, -1e+30
    %v1085 = vld [vmem:[#allocation2 + $0x20] sm:$0xff]
    %v1086 = vld [vmem:[#allocation2 + $0x28] sm:$0xff]
    %v1087 = vld [vmem:[#allocation2 + $0x30] sm:$0xff]
    %v1088 = vld [vmem:[#allocation2 + $0x38] sm:$0xff]
    %1089 = vmatprep.subr.mxu0 %v474
    %1090 = vmatpush1.msra.mxu0 %v473
    %1091 = vmatprep.subr.mxu0 %v478
    %1092 = vmatpush1.msra.mxu0 %v477
    %1093 = vmatprep.subr.mxu0 %v482
    %1094 = vmatpush1.msra.mxu0 %v481
    %1095 = vmatprep.subr.mxu0 %v486
    %1096 = vmatpush1.msra.mxu0 %v485
    %1097 = vmatprep.subr.mxu0 %v490
    %1098 = vmatpush1.msra.mxu0 %v489
    %1099 = vmatprep.subr.mxu0 %v494
    %1100 = vmatpush1.msra.mxu0 %v493
    %1101 = vmatprep.subr.mxu0 %v498
    %1102 = vmatpush1.msra.mxu0 %v497
    %1103 = vmatprep.subr.mxu0 %v502
    %1104 = vmatpush1.msra.mxu0 %v501
    %1105 = vmatprep.subr.mxu0 %v506
    %1106 = vmatpush1.msra.mxu0 %v505
    %1107 = vmatprep.subr.mxu0 %v510
    %1108 = vmatpush1.msra.mxu0 %v509
    %1109 = vmatprep.subr.mxu0 %v514
    %1110 = vmatpush1.msra.mxu0 %v513
    %1111 = vmatprep.subr.mxu0 %v518
    %1112 = vmatpush1.msra.mxu0 %v517
    %1113 = vmatprep.subr.mxu0 %v522
    %1114 = vmatpush1.msra.mxu0 %v521
    %1115 = vmatprep.subr.mxu0 %v526
    %1116 = vmatpush1.msra.mxu0 %v525
    %1117 = vmatprep.subr.mxu0 %v530
    %1118 = vmatpush1.msra.mxu0 %v529
    %1119 = vmatprep.subr.mxu0 %v534
    %1120 = vmatpush1.msra.mxu0 %v533
    %1121 = vmatprep.subr.mxu0 0.0
    %1122 = vmatpush1.msra.mxu0 0.0
    %1123 = vmatprep.subr.mxu0 0.0
    %1124 = vmatpush1.msra.mxu0 0.0
    %1125 = vmatprep.subr.mxu0 0.0
    %1126 = vmatpush1.msra.mxu0 0.0
    %1127 = vmatprep.subr.mxu0 0.0
    %1128 = vmatpush1.msra.mxu0 0.0
    %1129 = vmatprep.subr.mxu0 0.0
    %1130 = vmatpush1.msra.mxu0 0.0
    %1131 = vmatprep.subr.mxu0 0.0
    %1132 = vmatpush1.msra.mxu0 0.0
    %1133 = vmatprep.subr.mxu0 0.0
    %1134 = vmatpush1.msra.mxu0 0.0
    %1135 = vmatprep.subr.mxu0 0.0
    %1136 = vmatpush1.msra.mxu0 0.0
    %1137 = vmatprep.subr.mxu0 0.0
    %1138 = vmatpush1.msra.mxu0 0.0
    %1139 = vmatprep.subr.mxu0 0.0
    %1140 = vmatpush1.msra.mxu0 0.0
    %1141 = vmatprep.subr.mxu0 0.0
    %1142 = vmatpush1.msra.mxu0 0.0
    %1143 = vmatprep.subr.mxu0 0.0
    %1144 = vmatpush1.msra.mxu0 0.0
    %1145 = vmatprep.subr.mxu0 0.0
    %1146 = vmatpush1.msra.mxu0 0.0
    %1147 = vmatprep.subr.mxu0 0.0
    %1148 = vmatpush1.msra.mxu0 0.0
    %1149 = vmatprep.subr.mxu0 0.0
    %1150 = vmatpush1.msra.mxu0 0.0
    %1151 = vmatprep.subr.mxu0 0.0
    %1152 = vmatpush1.msra.mxu0 0.0
    %1153 = vmatprep.mubr.f32.mxu0 0.0
    %1154 = vmatmul.mubr.f32.gmra.mrb[0].mxu0 %v852
    %v1155 = vpop.f32.mrb[0].mxu0
    %v1156 = vadd.f32 0.0, %v1155
    %v1157 = vpop.f32.mrb[0].mxu0
    %v1158 = vadd.f32 0.0, %v1157
    %1159 = vdwg.mxu0
    %1160 = vmatprep.subr.mxu0 %v476
    %1161 = vmatpush1.msra.mxu0 %v475
    %1162 = vmatprep.subr.mxu0 %v480
    %1163 = vmatpush1.msra.mxu0 %v479
    %1164 = vmatprep.subr.mxu0 %v484
    %1165 = vmatpush1.msra.mxu0 %v483
    %1166 = vmatprep.subr.mxu0 %v488
    %1167 = vmatpush1.msra.mxu0 %v487
    %1168 = vmatprep.subr.mxu0 %v492
    %1169 = vmatpush1.msra.mxu0 %v491
    %1170 = vmatprep.subr.mxu0 %v496
    %1171 = vmatpush1.msra.mxu0 %v495
    %1172 = vmatprep.subr.mxu0 %v500
    %1173 = vmatpush1.msra.mxu0 %v499
    %1174 = vmatprep.subr.mxu0 %v504
    %1175 = vmatpush1.msra.mxu0 %v503
    %1176 = vmatprep.subr.mxu0 %v508
    %1177 = vmatpush1.msra.mxu0 %v507
    %1178 = vmatprep.subr.mxu0 %v512
    %1179 = vmatpush1.msra.mxu0 %v511
    %1180 = vmatprep.subr.mxu0 %v516
    %1181 = vmatpush1.msra.mxu0 %v515
    %1182 = vmatprep.subr.mxu0 %v520
    %1183 = vmatpush1.msra.mxu0 %v519
    %1184 = vmatprep.subr.mxu0 %v524
    %1185 = vmatpush1.msra.mxu0 %v523
    %1186 = vmatprep.subr.mxu0 %v528
    %1187 = vmatpush1.msra.mxu0 %v527
    %1188 = vmatprep.subr.mxu0 %v532
    %1189 = vmatpush1.msra.mxu0 %v531
    %1190 = vmatprep.subr.mxu0 %v536
    %1191 = vmatpush1.msra.mxu0 %v535
    %1192 = vmatprep.subr.mxu0 0.0
    %1193 = vmatpush1.msra.mxu0 0.0
    %1194 = vmatprep.subr.mxu0 0.0
    %1195 = vmatpush1.msra.mxu0 0.0
    %1196 = vmatprep.subr.mxu0 0.0
    %1197 = vmatpush1.msra.mxu0 0.0
    %1198 = vmatprep.subr.mxu0 0.0
    %1199 = vmatpush1.msra.mxu0 0.0
    %1200 = vmatprep.subr.mxu0 0.0
    %1201 = vmatpush1.msra.mxu0 0.0
    %1202 = vmatprep.subr.mxu0 0.0
    %1203 = vmatpush1.msra.mxu0 0.0
    %1204 = vmatprep.subr.mxu0 0.0
    %1205 = vmatpush1.msra.mxu0 0.0
    %1206 = vmatprep.subr.mxu0 0.0
    %1207 = vmatpush1.msra.mxu0 0.0
    %1208 = vmatprep.subr.mxu0 0.0
    %1209 = vmatpush1.msra.mxu0 0.0
    %1210 = vmatprep.subr.mxu0 0.0
    %1211 = vmatpush1.msra.mxu0 0.0
    %1212 = vmatprep.subr.mxu0 0.0
    %1213 = vmatpush1.msra.mxu0 0.0
    %1214 = vmatprep.subr.mxu0 0.0
    %1215 = vmatpush1.msra.mxu0 0.0
    %1216 = vmatprep.subr.mxu0 0.0
    %1217 = vmatpush1.msra.mxu0 0.0
    %1218 = vmatprep.subr.mxu0 0.0
    %1219 = vmatpush1.msra.mxu0 0.0
    %1220 = vmatprep.subr.mxu0 0.0
    %1221 = vmatpush1.msra.mxu0 0.0
    %1222 = vmatprep.subr.mxu0 0.0
    %1223 = vmatpush1.msra.mxu0 0.0
    %1224 = vmatprep.mubr.f32.mxu0 0.0
    %1225 = vmatmul.mubr.f32.gmra.mrb[0].mxu0 %v852
    %v1226 = vpop.f32.mrb[0].mxu0
    %v1227 = vadd.f32 0.0, %v1226
    %v1228 = vpop.f32.mrb[0].mxu0
    %v1229 = vadd.f32 0.0, %v1228
    %1230 = vdwg.mxu0
    %v1231 = vadd.f32 %v1085, %v1156
    %v1232 = vadd.f32 %v1086, %v1158
    %v1233 = vadd.f32 %v1087, %v1227
    %v1234 = vadd.f32 %v1088, %v1229
    %v1235 = vxor.u32 %v1231, 2147483648
    %v1236 = vmul.f32 %v1235, 1.442695
    %v1237 = vpow.pop %v1236
    %v1238 = vadd.f32 %v1237, 1.0
    %v1239 = vrcp.pop %v1238
    %v1240 = vmul.f32 1.0, %v1239
    %v1241 = vxor.u32 %v1232, 2147483648
    %v1242 = vmul.f32 %v1241, 1.442695
    %v1243 = vpow.pop %v1242
    %v1244 = vadd.f32 %v1243, 1.0
    %v1245 = vrcp.pop %v1244
    %v1246 = vmul.f32 1.0, %v1245
    %v1247 = vtanh.pop %v1233
    %v1248 = vxor.u32 %v1234, 2147483648
    %v1249 = vmul.f32 %v1248, 1.442695
    %v1250 = vpow.pop %v1249
    %v1251 = vadd.f32 %v1250, 1.0
    %v1252 = vrcp.pop %v1251
    %v1253 = vmul.f32 1.0, %v1252
    %v1254 = vmul.f32 %v1246, %v850
    %v1255 = vmul.f32 %v1240, %v1247
    %v1256 = vadd.f32 %v1254, %v1255
    %v1257 = vtanh.pop %v1256
    %v1258 = vmul.f32 %v1253, %v1257
    %1259 = vmatprep.subr.mxu0 %v538
    %1260 = vmatpush1.msra.mxu0 %v537
    %1261 = vmatprep.subr.mxu0 %v542
    %1262 = vmatpush1.msra.mxu0 %v541
    %1263 = vmatprep.subr.mxu0 %v546
    %1264 = vmatpush1.msra.mxu0 %v545
    %1265 = vmatprep.subr.mxu0 %v550
    %1266 = vmatpush1.msra.mxu0 %v549
    %1267 = vmatprep.subr.mxu0 %v554
    %1268 = vmatpush1.msra.mxu0 %v553
    %1269 = vmatprep.subr.mxu0 %v558
    %1270 = vmatpush1.msra.mxu0 %v557
    %1271 = vmatprep.subr.mxu0 %v562
    %1272 = vmatpush1.msra.mxu0 %v561
    %1273 = vmatprep.subr.mxu0 %v566
    %1274 = vmatpush1.msra.mxu0 %v565
    %1275 = vmatprep.subr.mxu0 %v570
    %1276 = vmatpush1.msra.mxu0 %v569
    %1277 = vmatprep.subr.mxu0 %v574
    %1278 = vmatpush1.msra.mxu0 %v573
    %1279 = vmatprep.subr.mxu0 %v578
    %1280 = vmatpush1.msra.mxu0 %v577
    %1281 = vmatprep.subr.mxu0 %v582
    %1282 = vmatpush1.msra.mxu0 %v581
    %1283 = vmatprep.subr.mxu0 %v586
    %1284 = vmatpush1.msra.mxu0 %v585
    %1285 = vmatprep.subr.mxu0 %v590
    %1286 = vmatpush1.msra.mxu0 %v589
    %1287 = vmatprep.subr.mxu0 %v594
    %1288 = vmatpush1.msra.mxu0 %v593
    %1289 = vmatprep.subr.mxu0 %v598
    %1290 = vmatpush1.msra.mxu0 %v597
    %1291 = vmatprep.subr.mxu0 %v602
    %1292 = vmatpush1.msra.mxu0 %v601
    %1293 = vmatprep.subr.mxu0 %v606
    %1294 = vmatpush1.msra.mxu0 %v605
    %1295 = vmatprep.subr.mxu0 %v610
    %1296 = vmatpush1.msra.mxu0 %v609
    %1297 = vmatprep.subr.mxu0 %v614
    %1298 = vmatpush1.msra.mxu0 %v613
    %1299 = vmatprep.subr.mxu0 %v618
    %1300 = vmatpush1.msra.mxu0 %v617
    %1301 = vmatprep.subr.mxu0 %v622
    %1302 = vmatpush1.msra.mxu0 %v621
    %1303 = vmatprep.subr.mxu0 %v626
    %1304 = vmatpush1.msra.mxu0 %v625
    %1305 = vmatprep.subr.mxu0 %v630
    %1306 = vmatpush1.msra.mxu0 %v629
    %1307 = vmatprep.subr.mxu0 %v634
    %1308 = vmatpush1.msra.mxu0 %v633
    %1309 = vmatprep.subr.mxu0 %v638
    %1310 = vmatpush1.msra.mxu0 %v637
    %1311 = vmatprep.subr.mxu0 %v642
    %1312 = vmatpush1.msra.mxu0 %v641
    %1313 = vmatprep.subr.mxu0 %v646
    %1314 = vmatpush1.msra.mxu0 %v645
    %1315 = vmatprep.subr.mxu0 %v650
    %1316 = vmatpush1.msra.mxu0 %v649
    %1317 = vmatprep.subr.mxu0 %v654
    %1318 = vmatpush1.msra.mxu0 %v653
    %1319 = vmatprep.subr.mxu0 %v658
    %1320 = vmatpush1.msra.mxu0 %v657
    %1321 = vmatprep.subr.mxu0 %v662
    %1322 = vmatpush1.msra.mxu0 %v661
    %1323 = vmatprep.mubr.f32.mxu0 %v1039
    %1324 = vmatmul.mubr.f32.gmra.mrb[0].mxu0 %v1258
    %v1325 = vpop.f32.mrb[0].mxu0
    %v1326 = vadd.f32 %v857, %v1325
    %v1327 = vpop.f32.mrb[0].mxu0
    %v1328 = vadd.f32 %v861, %v1327
    %1329 = vdwg.mxu0
    %1330 = vmatprep.subr.mxu0 %v540
    %1331 = vmatpush1.msra.mxu0 %v539
    %1332 = vmatprep.subr.mxu0 %v544
    %1333 = vmatpush1.msra.mxu0 %v543
    %1334 = vmatprep.subr.mxu0 %v548
    %1335 = vmatpush1.msra.mxu0 %v547
    %1336 = vmatprep.subr.mxu0 %v552
    %1337 = vmatpush1.msra.mxu0 %v551
    %1338 = vmatprep.subr.mxu0 %v556
    %1339 = vmatpush1.msra.mxu0 %v555
    %1340 = vmatprep.subr.mxu0 %v560
    %1341 = vmatpush1.msra.mxu0 %v559
    %1342 = vmatprep.subr.mxu0 %v564
    %1343 = vmatpush1.msra.mxu0 %v563
    %1344 = vmatprep.subr.mxu0 %v568
    %1345 = vmatpush1.msra.mxu0 %v567
    %1346 = vmatprep.subr.mxu0 %v572
    %1347 = vmatpush1.msra.mxu0 %v571
    %1348 = vmatprep.subr.mxu0 %v576
    %1349 = vmatpush1.msra.mxu0 %v575
    %1350 = vmatprep.subr.mxu0 %v580
    %1351 = vmatpush1.msra.mxu0 %v579
    %1352 = vmatprep.subr.mxu0 %v584
    %1353 = vmatpush1.msra.mxu0 %v583
    %1354 = vmatprep.subr.mxu0 %v588
    %1355 = vmatpush1.msra.mxu0 %v587
    %1356 = vmatprep.subr.mxu0 %v592
    %1357 = vmatpush1.msra.mxu0 %v591
    %1358 = vmatprep.subr.mxu0 %v596
    %1359 = vmatpush1.msra.mxu0 %v595
    %1360 = vmatprep.subr.mxu0 %v600
    %1361 = vmatpush1.msra.mxu0 %v599
    %1362 = vmatprep.subr.mxu0 %v604
    %1363 = vmatpush1.msra.mxu0 %v603
    %1364 = vmatprep.subr.mxu0 %v608
    %1365 = vmatpush1.msra.mxu0 %v607
    %1366 = vmatprep.subr.mxu0 %v612
    %1367 = vmatpush1.msra.mxu0 %v611
    %1368 = vmatprep.subr.mxu0 %v616
    %1369 = vmatpush1.msra.mxu0 %v615
    %1370 = vmatprep.subr.mxu0 %v620
    %1371 = vmatpush1.msra.mxu0 %v619
    %1372 = vmatprep.subr.mxu0 %v624
    %1373 = vmatpush1.msra.mxu0 %v623
    %1374 = vmatprep.subr.mxu0 %v628
    %1375 = vmatpush1.msra.mxu0 %v627
    %1376 = vmatprep.subr.mxu0 %v632
    %1377 = vmatpush1.msra.mxu0 %v631
    %1378 = vmatprep.subr.mxu0 %v636
    %1379 = vmatpush1.msra.mxu0 %v635
    %1380 = vmatprep.subr.mxu0 %v640
    %1381 = vmatpush1.msra.mxu0 %v639
    %1382 = vmatprep.subr.mxu0 %v644
    %1383 = vmatpush1.msra.mxu0 %v643
    %1384 = vmatprep.subr.mxu0 %v648
    %1385 = vmatpush1.msra.mxu0 %v647
    %1386 = vmatprep.subr.mxu0 %v652
    %1387 = vmatpush1.msra.mxu0 %v651
    %1388 = vmatprep.subr.mxu0 %v656
    %1389 = vmatpush1.msra.mxu0 %v655
    %1390 = vmatprep.subr.mxu0 %v660
    %1391 = vmatpush1.msra.mxu0 %v659
    %1392 = vmatprep.subr.mxu0 %v664
    %1393 = vmatpush1.msra.mxu0 %v663
    %1394 = vmatprep.mubr.f32.mxu0 %v1039
    %1395 = vmatmul.mubr.f32.gmra.mrb[0].mxu0 %v1258
    %v1396 = vpop.f32.mrb[0].mxu0
    %v1397 = vadd.f32 %v865, %v1396
    %v1398 = vpop.f32.mrb[0].mxu0
    %v1399 = vadd.f32 %v869, %v1398
    %1400 = vdwg.mxu0
    %v1401 = vxor.u32 %v1326, 2147483648
    %v1402 = vmul.f32 %v1401, 1.442695
    %v1403 = vpow.pop %v1402
    %v1404 = vadd.f32 %v1403, 1.0
    %v1405 = vrcp.pop %v1404
    %v1406 = vmul.f32 1.0, %v1405
    %v1407 = vxor.u32 %v1328, 2147483648
    %v1408 = vmul.f32 %v1407, 1.442695
    %v1409 = vpow.pop %v1408
    %v1410 = vadd.f32 %v1409, 1.0
    %v1411 = vrcp.pop %v1410
    %v1412 = vmul.f32 1.0, %v1411
    %v1413 = vtanh.pop %v1397
    %v1414 = vxor.u32 %v1399, 2147483648
    %v1415 = vmul.f32 %v1414, 1.442695
    %v1416 = vpow.pop %v1415
    %v1417 = vadd.f32 %v1416, 1.0
    %v1418 = vrcp.pop %v1417
    %v1419 = vmul.f32 1.0, %v1418
    %v1420 = vmul.f32 %v1412, %v1037
    %v1421 = vmul.f32 %v1406, %v1413
    %v1422 = vadd.f32 %v1420, %v1421
    %v1423 = vtanh.pop %v1422
    %v1424 = vmul.f32 %v1419, %v1423
    %v1425 = vmul.f32 %v1424, %v1044
    %1426 = vadd.xlane.f32.xlu0 %v1425
    %v1427 = vpop.xlane.xlu0 %1426
    %v1428 = vadd.f32 %v1427, %v1053
    %v1429 = vmax.f32 %v1056, %v1428
    %v1430 = vsub.f32 %v1056, %v1429
    %v1431 = vmul.f32 %v1430, 1.442695
    %v1432 = vpow.pop %v1431
    %v1433 = vsub.f32 %v1428, %v1429
    %v1434 = vmul.f32 %v1433, 1.442695
    %v1435 = vpow.pop %v1434
    %v1436 = vmul.f32 %v1432, %v1064
    %v1437 = vadd.f32 %v1436, %v1435
    %1439 = vset.pattern.permute.xlu0 0
    %1440 = vperm.xlu0 %1439, %v1432
    %v1441 = vpop.permute.xlu0 %1440
    %v1443 = vmul.f32 %v1441, %v1077
    %1445 = vset.pattern.permute.xlu0 0
    %1446 = vperm.xlu0 %1445, %v1435
    %v1447 = vpop.permute.xlu0 %1446
    %v1449 = vmul.f32 %v1447, %v1424
    %v1450 = vadd.f32 %v1443, %v1449
    %vm1451 = vcmp.eq.s32.totalorder %v678, 1
    %1453 = vset.pattern.permute.xlu0 0
    %1454 = vperm.xlu0 %1453, %v1428
    %v1455 = vpop.permute.xlu0 %1454
    %v1457 = vsel %vm1451, %v1455, %v1084
    %v1458 = vld [vmem:[#allocation2 + $0x40] sm:$0xff]
    %v1459 = vld [vmem:[#allocation2 + $0x48] sm:$0xff]
    %v1460 = vld [vmem:[#allocation2 + $0x50] sm:$0xff]
    %v1461 = vld [vmem:[#allocation2 + $0x58] sm:$0xff]
    %1462 = vmatprep.subr.mxu0 %v474
    %1463 = vmatpush1.msra.mxu0 %v473
    %1464 = vmatprep.subr.mxu0 %v478
    %1465 = vmatpush1.msra.mxu0 %v477
    %1466 = vmatprep.subr.mxu0 %v482
    %1467 = vmatpush1.msra.mxu0 %v481
    %1468 = vmatprep.subr.mxu0 %v486
    %1469 = vmatpush1.msra.mxu0 %v485
    %1470 = vmatprep.subr.mxu0 %v490
    %1471 = vmatpush1.msra.mxu0 %v489
    %1472 = vmatprep.subr.mxu0 %v494
    %1473 = vmatpush1.msra.mxu0 %v493
    %1474 = vmatprep.subr.mxu0 %v498
    %1475 = vmatpush1.msra.mxu0 %v497
    %1476 = vmatprep.subr.mxu0 %v502
    %1477 = vmatpush1.msra.mxu0 %v501
    %1478 = vmatprep.subr.mxu0 %v506
    %1479 = vmatpush1.msra.mxu0 %v505
    %1480 = vmatprep.subr.mxu0 %v510
    %1481 = vmatpush1.msra.mxu0 %v509
    %1482 = vmatprep.subr.mxu0 %v514
    %1483 = vmatpush1.msra.mxu0 %v513
    %1484 = vmatprep.subr.mxu0 %v518
    %1485 = vmatpush1.msra.mxu0 %v517
    %1486 = vmatprep.subr.mxu0 %v522
    %1487 = vmatpush1.msra.mxu0 %v521
    %1488 = vmatprep.subr.mxu0 %v526
    %1489 = vmatpush1.msra.mxu0 %v525
    %1490 = vmatprep.subr.mxu0 %v530
    %1491 = vmatpush1.msra.mxu0 %v529
    %1492 = vmatprep.subr.mxu0 %v534
    %1493 = vmatpush1.msra.mxu0 %v533
    %1494 = vmatprep.subr.mxu0 0.0
    %1495 = vmatpush1.msra.mxu0 0.0
    %1496 = vmatprep.subr.mxu0 0.0
    %1497 = vmatpush1.msra.mxu0 0.0
    %1498 = vmatprep.subr.mxu0 0.0
    %1499 = vmatpush1.msra.mxu0 0.0
    %1500 = vmatprep.subr.mxu0 0.0
    %1501 = vmatpush1.msra.mxu0 0.0
    %1502 = vmatprep.subr.mxu0 0.0
    %1503 = vmatpush1.msra.mxu0 0.0
    %1504 = vmatprep.subr.mxu0 0.0
    %1505 = vmatpush1.msra.mxu0 0.0
    %1506 = vmatprep.subr.mxu0 0.0
    %1507 = vmatpush1.msra.mxu0 0.0
    %1508 = vmatprep.subr.mxu0 0.0
    %1509 = vmatpush1.msra.mxu0 0.0
    %1510 = vmatprep.subr.mxu0 0.0
    %1511 = vmatpush1.msra.mxu0 0.0
    %1512 = vmatprep.subr.mxu0 0.0
    %1513 = vmatpush1.msra.mxu0 0.0
    %1514 = vmatprep.subr.mxu0 0.0
    %1515 = vmatpush1.msra.mxu0 0.0
    %1516 = vmatprep.subr.mxu0 0.0
    %1517 = vmatpush1.msra.mxu0 0.0
    %1518 = vmatprep.subr.mxu0 0.0
    %1519 = vmatpush1.msra.mxu0 0.0
    %1520 = vmatprep.subr.mxu0 0.0
    %1521 = vmatpush1.msra.mxu0 0.0
    %1522 = vmatprep.subr.mxu0 0.0
    %1523 = vmatpush1.msra.mxu0 0.0
    %1524 = vmatprep.subr.mxu0 0.0
    %1525 = vmatpush1.msra.mxu0 0.0
    %1526 = vmatprep.mubr.f32.mxu0 0.0
    %1527 = vmatmul.mubr.f32.gmra.mrb[0].mxu0 %v1258
    %v1528 = vpop.f32.mrb[0].mxu0
    %v1529 = vadd.f32 0.0, %v1528
    %v1530 = vpop.f32.mrb[0].mxu0
    %v1531 = vadd.f32 0.0, %v1530
    %1532 = vdwg.mxu0
    %1533 = vmatprep.subr.mxu0 %v476
    %1534 = vmatpush1.msra.mxu0 %v475
    %1535 = vmatprep.subr.mxu0 %v480
    %1536 = vmatpush1.msra.mxu0 %v479
    %1537 = vmatprep.subr.mxu0 %v484
    %1538 = vmatpush1.msra.mxu0 %v483
    %1539 = vmatprep.subr.mxu0 %v488
    %1540 = vmatpush1.msra.mxu0 %v487
    %1541 = vmatprep.subr.mxu0 %v492
    %1542 = vmatpush1.msra.mxu0 %v491
    %1543 = vmatprep.subr.mxu0 %v496
    %1544 = vmatpush1.msra.mxu0 %v495
    %1545 = vmatprep.subr.mxu0 %v500
    %1546 = vmatpush1.msra.mxu0 %v499
    %1547 = vmatprep.subr.mxu0 %v504
    %1548 = vmatpush1.msra.mxu0 %v503
    %1549 = vmatprep.subr.mxu0 %v508
    %1550 = vmatpush1.msra.mxu0 %v507
    %1551 = vmatprep.subr.mxu0 %v512
    %1552 = vmatpush1.msra.mxu0 %v511
    %1553 = vmatprep.subr.mxu0 %v516
    %1554 = vmatpush1.msra.mxu0 %v515
    %1555 = vmatprep.subr.mxu0 %v520
    %1556 = vmatpush1.msra.mxu0 %v519
    %1557 = vmatprep.subr.mxu0 %v524
    %1558 = vmatpush1.msra.mxu0 %v523
    %1559 = vmatprep.subr.mxu0 %v528
    %1560 = vmatpush1.msra.mxu0 %v527
    %1561 = vmatprep.subr.mxu0 %v532
    %1562 = vmatpush1.msra.mxu0 %v531
    %1563 = vmatprep.subr.mxu0 %v536
    %1564 = vmatpush1.msra.mxu0 %v535
    %1565 = vmatprep.subr.mxu0 0.0
    %1566 = vmatpush1.msra.mxu0 0.0
    %1567 = vmatprep.subr.mxu0 0.0
    %1568 = vmatpush1.msra.mxu0 0.0
    %1569 = vmatprep.subr.mxu0 0.0
    %1570 = vmatpush1.msra.mxu0 0.0
    %1571 = vmatprep.subr.mxu0 0.0
    %1572 = vmatpush1.msra.mxu0 0.0
    %1573 = vmatprep.subr.mxu0 0.0
    %1574 = vmatpush1.msra.mxu0 0.0
    %1575 = vmatprep.subr.mxu0 0.0
    %1576 = vmatpush1.msra.mxu0 0.0
    %1577 = vmatprep.subr.mxu0 0.0
    %1578 = vmatpush1.msra.mxu0 0.0
    %1579 = vmatprep.subr.mxu0 0.0
    %1580 = vmatpush1.msra.mxu0 0.0
    %1581 = vmatprep.subr.mxu0 0.0
    %1582 = vmatpush1.msra.mxu0 0.0
    %1583 = vmatprep.subr.mxu0 0.0
    %1584 = vmatpush1.msra.mxu0 0.0
    %1585 = vmatprep.subr.mxu0 0.0
    %1586 = vmatpush1.msra.mxu0 0.0
    %1587 = vmatprep.subr.mxu0 0.0
    %1588 = vmatpush1.msra.mxu0 0.0
    %1589 = vmatprep.subr.mxu0 0.0
    %1590 = vmatpush1.msra.mxu0 0.0
    %1591 = vmatprep.subr.mxu0 0.0
    %1592 = vmatpush1.msra.mxu0 0.0
    %1593 = vmatprep.subr.mxu0 0.0
    %1594 = vmatpush1.msra.mxu0 0.0
    %1595 = vmatprep.subr.mxu0 0.0
    %1596 = vmatpush1.msra.mxu0 0.0
    %1597 = vmatprep.mubr.f32.mxu0 0.0
    %1598 = vmatmul.mubr.f32.gmra.mrb[0].mxu0 %v1258
    %v1599 = vpop.f32.mrb[0].mxu0
    %v1600 = vadd.f32 0.0, %v1599
    %v1601 = vpop.f32.mrb[0].mxu0
    %v1602 = vadd.f32 0.0, %v1601
    %1603 = vdwg.mxu0
    %v1604 = vadd.f32 %v1458, %v1529
    %v1605 = vadd.f32 %v1459, %v1531
    %v1606 = vadd.f32 %v1460, %v1600
    %v1607 = vadd.f32 %v1461, %v1602
    %v1608 = vxor.u32 %v1604, 2147483648
    %v1609 = vmul.f32 %v1608, 1.442695
    %v1610 = vpow.pop %v1609
    %v1611 = vadd.f32 %v1610, 1.0
    %v1612 = vrcp.pop %v1611
    %v1613 = vmul.f32 1.0, %v1612
    %v1614 = vxor.u32 %v1605, 2147483648
    %v1615 = vmul.f32 %v1614, 1.442695
    %v1616 = vpow.pop %v1615
    %v1617 = vadd.f32 %v1616, 1.0
    %v1618 = vrcp.pop %v1617
    %v1619 = vmul.f32 1.0, %v1618
    %v1620 = vtanh.pop %v1606
    %v1621 = vxor.u32 %v1607, 2147483648
    %v1622 = vmul.f32 %v1621, 1.442695
    %v1623 = vpow.pop %v1622
    %v1624 = vadd.f32 %v1623, 1.0
    %v1625 = vrcp.pop %v1624
    %v1626 = vmul.f32 1.0, %v1625
    %v1627 = vmul.f32 %v1619, %v1256
    %v1628 = vmul.f32 %v1613, %v1620
    %v1629 = vadd.f32 %v1627, %v1628
    %v1630 = vtanh.pop %v1629
    %v1631 = vmul.f32 %v1626, %v1630
    %1632 = vmatprep.subr.mxu0 %v538
    %1633 = vmatpush1.msra.mxu0 %v537
    %1634 = vmatprep.subr.mxu0 %v542
    %1635 = vmatpush1.msra.mxu0 %v541
    %1636 = vmatprep.subr.mxu0 %v546
    %1637 = vmatpush1.msra.mxu0 %v545
    %1638 = vmatprep.subr.mxu0 %v550
    %1639 = vmatpush1.msra.mxu0 %v549
    %1640 = vmatprep.subr.mxu0 %v554
    %1641 = vmatpush1.msra.mxu0 %v553
    %1642 = vmatprep.subr.mxu0 %v558
    %1643 = vmatpush1.msra.mxu0 %v557
    %1644 = vmatprep.subr.mxu0 %v562
    %1645 = vmatpush1.msra.mxu0 %v561
    %1646 = vmatprep.subr.mxu0 %v566
    %1647 = vmatpush1.msra.mxu0 %v565
    %1648 = vmatprep.subr.mxu0 %v570
    %1649 = vmatpush1.msra.mxu0 %v569
    %1650 = vmatprep.subr.mxu0 %v574
    %1651 = vmatpush1.msra.mxu0 %v573
    %1652 = vmatprep.subr.mxu0 %v578
    %1653 = vmatpush1.msra.mxu0 %v577
    %1654 = vmatprep.subr.mxu0 %v582
    %1655 = vmatpush1.msra.mxu0 %v581
    %1656 = vmatprep.subr.mxu0 %v586
    %1657 = vmatpush1.msra.mxu0 %v585
    %1658 = vmatprep.subr.mxu0 %v590
    %1659 = vmatpush1.msra.mxu0 %v589
    %1660 = vmatprep.subr.mxu0 %v594
    %1661 = vmatpush1.msra.mxu0 %v593
    %1662 = vmatprep.subr.mxu0 %v598
    %1663 = vmatpush1.msra.mxu0 %v597
    %1664 = vmatprep.subr.mxu0 %v602
    %1665 = vmatpush1.msra.mxu0 %v601
    %1666 = vmatprep.subr.mxu0 %v606
    %1667 = vmatpush1.msra.mxu0 %v605
    %1668 = vmatprep.subr.mxu0 %v610
    %1669 = vmatpush1.msra.mxu0 %v609
    %1670 = vmatprep.subr.mxu0 %v614
    %1671 = vmatpush1.msra.mxu0 %v613
    %1672 = vmatprep.subr.mxu0 %v618
    %1673 = vmatpush1.msra.mxu0 %v617
    %1674 = vmatprep.subr.mxu0 %v622
    %1675 = vmatpush1.msra.mxu0 %v621
    %1676 = vmatprep.subr.mxu0 %v626
    %1677 = vmatpush1.msra.mxu0 %v625
    %1678 = vmatprep.subr.mxu0 %v630
    %1679 = vmatpush1.msra.mxu0 %v629
    %1680 = vmatprep.subr.mxu0 %v634
    %1681 = vmatpush1.msra.mxu0 %v633
    %1682 = vmatprep.subr.mxu0 %v638
    %1683 = vmatpush1.msra.mxu0 %v637
    %1684 = vmatprep.subr.mxu0 %v642
    %1685 = vmatpush1.msra.mxu0 %v641
    %1686 = vmatprep.subr.mxu0 %v646
    %1687 = vmatpush1.msra.mxu0 %v645
    %1688 = vmatprep.subr.mxu0 %v650
    %1689 = vmatpush1.msra.mxu0 %v649
    %1690 = vmatprep.subr.mxu0 %v654
    %1691 = vmatpush1.msra.mxu0 %v653
    %1692 = vmatprep.subr.mxu0 %v658
    %1693 = vmatpush1.msra.mxu0 %v657
    %1694 = vmatprep.subr.mxu0 %v662
    %1695 = vmatpush1.msra.mxu0 %v661
    %1696 = vmatprep.mubr.f32.mxu0 %v1424
    %1697 = vmatmul.mubr.f32.gmra.mrb[0].mxu0 %v1631
    %v1698 = vpop.f32.mrb[0].mxu0
    %v1699 = vadd.f32 %v857, %v1698
    %v1700 = vpop.f32.mrb[0].mxu0
    %v1701 = vadd.f32 %v861, %v1700
    %1702 = vdwg.mxu0
    %1703 = vmatprep.subr.mxu0 %v540
    %1704 = vmatpush1.msra.mxu0 %v539
    %1705 = vmatprep.subr.mxu0 %v544
    %1706 = vmatpush1.msra.mxu0 %v543
    %1707 = vmatprep.subr.mxu0 %v548
    %1708 = vmatpush1.msra.mxu0 %v547
    %1709 = vmatprep.subr.mxu0 %v552
    %1710 = vmatpush1.msra.mxu0 %v551
    %1711 = vmatprep.subr.mxu0 %v556
    %1712 = vmatpush1.msra.mxu0 %v555
    %1713 = vmatprep.subr.mxu0 %v560
    %1714 = vmatpush1.msra.mxu0 %v559
    %1715 = vmatprep.subr.mxu0 %v564
    %1716 = vmatpush1.msra.mxu0 %v563
    %1717 = vmatprep.subr.mxu0 %v568
    %1718 = vmatpush1.msra.mxu0 %v567
    %1719 = vmatprep.subr.mxu0 %v572
    %1720 = vmatpush1.msra.mxu0 %v571
    %1721 = vmatprep.subr.mxu0 %v576
    %1722 = vmatpush1.msra.mxu0 %v575
    %1723 = vmatprep.subr.mxu0 %v580
    %1724 = vmatpush1.msra.mxu0 %v579
    %1725 = vmatprep.subr.mxu0 %v584
    %1726 = vmatpush1.msra.mxu0 %v583
    %1727 = vmatprep.subr.mxu0 %v588
    %1728 = vmatpush1.msra.mxu0 %v587
    %1729 = vmatprep.subr.mxu0 %v592
    %1730 = vmatpush1.msra.mxu0 %v591
    %1731 = vmatprep.subr.mxu0 %v596
    %1732 = vmatpush1.msra.mxu0 %v595
    %1733 = vmatprep.subr.mxu0 %v600
    %1734 = vmatpush1.msra.mxu0 %v599
    %1735 = vmatprep.subr.mxu0 %v604
    %1736 = vmatpush1.msra.mxu0 %v603
    %1737 = vmatprep.subr.mxu0 %v608
    %1738 = vmatpush1.msra.mxu0 %v607
    %1739 = vmatprep.subr.mxu0 %v612
    %1740 = vmatpush1.msra.mxu0 %v611
    %1741 = vmatprep.subr.mxu0 %v616
    %1742 = vmatpush1.msra.mxu0 %v615
    %1743 = vmatprep.subr.mxu0 %v620
    %1744 = vmatpush1.msra.mxu0 %v619
    %1745 = vmatprep.subr.mxu0 %v624
    %1746 = vmatpush1.msra.mxu0 %v623
    %1747 = vmatprep.subr.mxu0 %v628
    %1748 = vmatpush1.msra.mxu0 %v627
    %1749 = vmatprep.subr.mxu0 %v632
    %1750 = vmatpush1.msra.mxu0 %v631
    %1751 = vmatprep.subr.mxu0 %v636
    %1752 = vmatpush1.msra.mxu0 %v635
    %1753 = vmatprep.subr.mxu0 %v640
    %1754 = vmatpush1.msra.mxu0 %v639
    %1755 = vmatprep.subr.mxu0 %v644
    %1756 = vmatpush1.msra.mxu0 %v643
    %1757 = vmatprep.subr.mxu0 %v648
    %1758 = vmatpush1.msra.mxu0 %v647
    %1759 = vmatprep.subr.mxu0 %v652
    %1760 = vmatpush1.msra.mxu0 %v651
    %1761 = vmatprep.subr.mxu0 %v656
    %1762 = vmatpush1.msra.mxu0 %v655
    %1763 = vmatprep.subr.mxu0 %v660
    %1764 = vmatpush1.msra.mxu0 %v659
    %1765 = vmatprep.subr.mxu0 %v664
    %1766 = vmatpush1.msra.mxu0 %v663
    %1767 = vmatprep.mubr.f32.mxu0 %v1424
    %1768 = vmatmul.mubr.f32.gmra.mrb[0].mxu0 %v1631
    %v1769 = vpop.f32.mrb[0].mxu0
    %v1770 = vadd.f32 %v865, %v1769
    %v1771 = vpop.f32.mrb[0].mxu0
    %v1772 = vadd.f32 %v869, %v1771
    %1773 = vdwg.mxu0
    %v1774 = vxor.u32 %v1699, 2147483648
    %v1775 = vmul.f32 %v1774, 1.442695
    %v1776 = vpow.pop %v1775
    %v1777 = vadd.f32 %v1776, 1.0
    %v1778 = vrcp.pop %v1777
    %v1779 = vmul.f32 1.0, %v1778
    %v1780 = vxor.u32 %v1701, 2147483648
    %v1781 = vmul.f32 %v1780, 1.442695
    %v1782 = vpow.pop %v1781
    %v1783 = vadd.f32 %v1782, 1.0
    %v1784 = vrcp.pop %v1783
    %v1785 = vmul.f32 1.0, %v1784
    %v1786 = vtanh.pop %v1770
    %v1787 = vxor.u32 %v1772, 2147483648
    %v1788 = vmul.f32 %v1787, 1.442695
    %v1789 = vpow.pop %v1788
    %v1790 = vadd.f32 %v1789, 1.0
    %v1791 = vrcp.pop %v1790
    %v1792 = vmul.f32 1.0, %v1791
    %v1793 = vmul.f32 %v1785, %v1422
    %v1794 = vmul.f32 %v1779, %v1786
    %v1795 = vadd.f32 %v1793, %v1794
    %v1796 = vtanh.pop %v1795
    %v1797 = vmul.f32 %v1792, %v1796
    %v1798 = vmul.f32 %v1797, %v1044
    %1799 = vadd.xlane.f32.xlu0 %v1798
    %v1800 = vpop.xlane.xlu0 %1799
    %v1801 = vadd.f32 %v1800, %v1053
    %v1802 = vmax.f32 %v1429, %v1801
    %v1803 = vsub.f32 %v1429, %v1802
    %v1804 = vmul.f32 %v1803, 1.442695
    %v1805 = vpow.pop %v1804
    %v1806 = vsub.f32 %v1801, %v1802
    %v1807 = vmul.f32 %v1806, 1.442695
    %v1808 = vpow.pop %v1807
    %v1809 = vmul.f32 %v1805, %v1437
    %v1810 = vadd.f32 %v1809, %v1808
    %1812 = vset.pattern.permute.xlu0 0
    %1813 = vperm.xlu0 %1812, %v1805
    %v1814 = vpop.permute.xlu0 %1813
    %v1816 = vmul.f32 %v1814, %v1450
    %1818 = vset.pattern.permute.xlu0 0
    %1819 = vperm.xlu0 %1818, %v1808
    %v1820 = vpop.permute.xlu0 %1819
    %v1822 = vmul.f32 %v1820, %v1797
    %v1823 = vadd.f32 %v1816, %v1822
    %vm1824 = vcmp.eq.s32.totalorder %v678, 2
    %1826 = vset.pattern.permute.xlu0 0
    %1827 = vperm.xlu0 %1826, %v1801
    %v1828 = vpop.permute.xlu0 %1827
    %v1830 = vsel %vm1824, %v1828, %v1457
    %v1831 = vld [vmem:[#allocation2 + $0x60] sm:$0xff]
    %v1832 = vld [vmem:[#allocation2 + $0x68] sm:$0xff]
    %v1833 = vld [vmem:[#allocation2 + $0x70] sm:$0xff]
    %v1834 = vld [vmem:[#allocation2 + $0x78] sm:$0xff]
    %1835 = vmatprep.subr.mxu0 %v474
    %1836 = vmatpush1.msra.mxu0 %v473
    %1837 = vmatprep.subr.mxu0 %v478
    %1838 = vmatpush1.msra.mxu0 %v477
    %1839 = vmatprep.subr.mxu0 %v482
    %1840 = vmatpush1.msra.mxu0 %v481
    %1841 = vmatprep.subr.mxu0 %v486
    %1842 = vmatpush1.msra.mxu0 %v485
    %1843 = vmatprep.subr.mxu0 %v490
    %1844 = vmatpush1.msra.mxu0 %v489
    %1845 = vmatprep.subr.mxu0 %v494
    %1846 = vmatpush1.msra.mxu0 %v493
    %1847 = vmatprep.subr.mxu0 %v498
    %1848 = vmatpush1.msra.mxu0 %v497
    %1849 = vmatprep.subr.mxu0 %v502
    %1850 = vmatpush1.msra.mxu0 %v501
    %1851 = vmatprep.subr.mxu0 %v506
    %1852 = vmatpush1.msra.mxu0 %v505
    %1853 = vmatprep.subr.mxu0 %v510
    %1854 = vmatpush1.msra.mxu0 %v509
    %1855 = vmatprep.subr.mxu0 %v514
    %1856 = vmatpush1.msra.mxu0 %v513
    %1857 = vmatprep.subr.mxu0 %v518
    %1858 = vmatpush1.msra.mxu0 %v517
    %1859 = vmatprep.subr.mxu0 %v522
    %1860 = vmatpush1.msra.mxu0 %v521
    %1861 = vmatprep.subr.mxu0 %v526
    %1862 = vmatpush1.msra.mxu0 %v525
    %1863 = vmatprep.subr.mxu0 %v530
    %1864 = vmatpush1.msra.mxu0 %v529
    %1865 = vmatprep.subr.mxu0 %v534
    %1866 = vmatpush1.msra.mxu0 %v533
    %1867 = vmatprep.subr.mxu0 0.0
    %1868 = vmatpush1.msra.mxu0 0.0
    %1869 = vmatprep.subr.mxu0 0.0
    %1870 = vmatpush1.msra.mxu0 0.0
    %1871 = vmatprep.subr.mxu0 0.0
    %1872 = vmatpush1.msra.mxu0 0.0
    %1873 = vmatprep.subr.mxu0 0.0
    %1874 = vmatpush1.msra.mxu0 0.0
    %1875 = vmatprep.subr.mxu0 0.0
    %1876 = vmatpush1.msra.mxu0 0.0
    %1877 = vmatprep.subr.mxu0 0.0
    %1878 = vmatpush1.msra.mxu0 0.0
    %1879 = vmatprep.subr.mxu0 0.0
    %1880 = vmatpush1.msra.mxu0 0.0
    %1881 = vmatprep.subr.mxu0 0.0
    %1882 = vmatpush1.msra.mxu0 0.0
    %1883 = vmatprep.subr.mxu0 0.0
    %1884 = vmatpush1.msra.mxu0 0.0
    %1885 = vmatprep.subr.mxu0 0.0
    %1886 = vmatpush1.msra.mxu0 0.0
    %1887 = vmatprep.subr.mxu0 0.0
    %1888 = vmatpush1.msra.mxu0 0.0
    %1889 = vmatprep.subr.mxu0 0.0
    %1890 = vmatpush1.msra.mxu0 0.0
    %1891 = vmatprep.subr.mxu0 0.0
    %1892 = vmatpush1.msra.mxu0 0.0
    %1893 = vmatprep.subr.mxu0 0.0
    %1894 = vmatpush1.msra.mxu0 0.0
    %1895 = vmatprep.subr.mxu0 0.0
    %1896 = vmatpush1.msra.mxu0 0.0
    %1897 = vmatprep.subr.mxu0 0.0
    %1898 = vmatpush1.msra.mxu0 0.0
    %1899 = vmatprep.mubr.f32.mxu0 0.0
    %1900 = vmatmul.mubr.f32.gmra.mrb[0].mxu0 %v1631
    %v1901 = vpop.f32.mrb[0].mxu0
    %v1902 = vadd.f32 0.0, %v1901
    %v1903 = vpop.f32.mrb[0].mxu0
    %v1904 = vadd.f32 0.0, %v1903
    %1905 = vdwg.mxu0
    %1906 = vmatprep.subr.mxu0 %v476
    %1907 = vmatpush1.msra.mxu0 %v475
    %1908 = vmatprep.subr.mxu0 %v480
    %1909 = vmatpush1.msra.mxu0 %v479
    %1910 = vmatprep.subr.mxu0 %v484
    %1911 = vmatpush1.msra.mxu0 %v483
    %1912 = vmatprep.subr.mxu0 %v488
    %1913 = vmatpush1.msra.mxu0 %v487
    %1914 = vmatprep.subr.mxu0 %v492
    %1915 = vmatpush1.msra.mxu0 %v491
    %1916 = vmatprep.subr.mxu0 %v496
    %1917 = vmatpush1.msra.mxu0 %v495
    %1918 = vmatprep.subr.mxu0 %v500
    %1919 = vmatpush1.msra.mxu0 %v499
    %1920 = vmatprep.subr.mxu0 %v504
    %1921 = vmatpush1.msra.mxu0 %v503
    %1922 = vmatprep.subr.mxu0 %v508
    %1923 = vmatpush1.msra.mxu0 %v507
    %1924 = vmatprep.subr.mxu0 %v512
    %1925 = vmatpush1.msra.mxu0 %v511
    %1926 = vmatprep.subr.mxu0 %v516
    %1927 = vmatpush1.msra.mxu0 %v515
    %1928 = vmatprep.subr.mxu0 %v520
    %1929 = vmatpush1.msra.mxu0 %v519
    %1930 = vmatprep.subr.mxu0 %v524
    %1931 = vmatpush1.msra.mxu0 %v523
    %1932 = vmatprep.subr.mxu0 %v528
    %1933 = vmatpush1.msra.mxu0 %v527
    %1934 = vmatprep.subr.mxu0 %v532
    %1935 = vmatpush1.msra.mxu0 %v531
    %1936 = vmatprep.subr.mxu0 %v536
    %1937 = vmatpush1.msra.mxu0 %v535
    %1938 = vmatprep.subr.mxu0 0.0
    %1939 = vmatpush1.msra.mxu0 0.0
    %1940 = vmatprep.subr.mxu0 0.0
    %1941 = vmatpush1.msra.mxu0 0.0
    %1942 = vmatprep.subr.mxu0 0.0
    %1943 = vmatpush1.msra.mxu0 0.0
    %1944 = vmatprep.subr.mxu0 0.0
    %1945 = vmatpush1.msra.mxu0 0.0
    %1946 = vmatprep.subr.mxu0 0.0
    %1947 = vmatpush1.msra.mxu0 0.0
    %1948 = vmatprep.subr.mxu0 0.0
    %1949 = vmatpush1.msra.mxu0 0.0
    %1950 = vmatprep.subr.mxu0 0.0
    %1951 = vmatpush1.msra.mxu0 0.0
    %1952 = vmatprep.subr.mxu0 0.0
    %1953 = vmatpush1.msra.mxu0 0.0
    %1954 = vmatprep.subr.mxu0 0.0
    %1955 = vmatpush1.msra.mxu0 0.0
    %1956 = vmatprep.subr.mxu0 0.0
    %1957 = vmatpush1.msra.mxu0 0.0
    %1958 = vmatprep.subr.mxu0 0.0
    %1959 = vmatpush1.msra.mxu0 0.0
    %1960 = vmatprep.subr.mxu0 0.0
    %1961 = vmatpush1.msra.mxu0 0.0
    %1962 = vmatprep.subr.mxu0 0.0
    %1963 = vmatpush1.msra.mxu0 0.0
    %1964 = vmatprep.subr.mxu0 0.0
    %1965 = vmatpush1.msra.mxu0 0.0
    %1966 = vmatprep.subr.mxu0 0.0
    %1967 = vmatpush1.msra.mxu0 0.0
    %1968 = vmatprep.subr.mxu0 0.0
    %1969 = vmatpush1.msra.mxu0 0.0
    %1970 = vmatprep.mubr.f32.mxu0 0.0
    %1971 = vmatmul.mubr.f32.gmra.mrb[0].mxu0 %v1631
    %v1972 = vpop.f32.mrb[0].mxu0
    %v1973 = vadd.f32 0.0, %v1972
    %v1974 = vpop.f32.mrb[0].mxu0
    %v1975 = vadd.f32 0.0, %v1974
    %1976 = vdwg.mxu0
    %v1977 = vadd.f32 %v1831, %v1902
    %v1978 = vadd.f32 %v1832, %v1904
    %v1979 = vadd.f32 %v1833, %v1973
    %v1980 = vadd.f32 %v1834, %v1975
    %v1981 = vxor.u32 %v1977, 2147483648
    %v1982 = vmul.f32 %v1981, 1.442695
    %v1983 = vpow.pop %v1982
    %v1984 = vadd.f32 %v1983, 1.0
    %v1985 = vrcp.pop %v1984
    %v1986 = vmul.f32 1.0, %v1985
    %v1987 = vxor.u32 %v1978, 2147483648
    %v1988 = vmul.f32 %v1987, 1.442695
    %v1989 = vpow.pop %v1988
    %v1990 = vadd.f32 %v1989, 1.0
    %v1991 = vrcp.pop %v1990
    %v1992 = vmul.f32 1.0, %v1991
    %v1993 = vtanh.pop %v1979
    %v1994 = vxor.u32 %v1980, 2147483648
    %v1995 = vmul.f32 %v1994, 1.442695
    %v1996 = vpow.pop %v1995
    %v1997 = vadd.f32 %v1996, 1.0
    %v1998 = vrcp.pop %v1997
    %v1999 = vmul.f32 1.0, %v1998
    %v2000 = vmul.f32 %v1992, %v1629
    %v2001 = vmul.f32 %v1986, %v1993
    %v2002 = vadd.f32 %v2000, %v2001
    %v2003 = vtanh.pop %v2002
    %v2004 = vmul.f32 %v1999, %v2003
    %2005 = vmatprep.subr.mxu0 %v538
    %2006 = vmatpush1.msra.mxu0 %v537
    %2007 = vmatprep.subr.mxu0 %v542
    %2008 = vmatpush1.msra.mxu0 %v541
    %2009 = vmatprep.subr.mxu0 %v546
    %2010 = vmatpush1.msra.mxu0 %v545
    %2011 = vmatprep.subr.mxu0 %v550
    %2012 = vmatpush1.msra.mxu0 %v549
    %2013 = vmatprep.subr.mxu0 %v554
    %2014 = vmatpush1.msra.mxu0 %v553
    %2015 = vmatprep.subr.mxu0 %v558
    %2016 = vmatpush1.msra.mxu0 %v557
    %2017 = vmatprep.subr.mxu0 %v562
    %2018 = vmatpush1.msra.mxu0 %v561
    %2019 = vmatprep.subr.mxu0 %v566
    %2020 = vmatpush1.msra.mxu0 %v565
    %2021 = vmatprep.subr.mxu0 %v570
    %2022 = vmatpush1.msra.mxu0 %v569
    %2023 = vmatprep.subr.mxu0 %v574
    %2024 = vmatpush1.msra.mxu0 %v573
    %2025 = vmatprep.subr.mxu0 %v578
    %2026 = vmatpush1.msra.mxu0 %v577
    %2027 = vmatprep.subr.mxu0 %v582
    %2028 = vmatpush1.msra.mxu0 %v581
    %2029 = vmatprep.subr.mxu0 %v586
    %2030 = vmatpush1.msra.mxu0 %v585
    %2031 = vmatprep.subr.mxu0 %v590
    %2032 = vmatpush1.msra.mxu0 %v589
    %2033 = vmatprep.subr.mxu0 %v594
    %2034 = vmatpush1.msra.mxu0 %v593
    %2035 = vmatprep.subr.mxu0 %v598
    %2036 = vmatpush1.msra.mxu0 %v597
    %2037 = vmatprep.subr.mxu0 %v602
    %2038 = vmatpush1.msra.mxu0 %v601
    %2039 = vmatprep.subr.mxu0 %v606
    %2040 = vmatpush1.msra.mxu0 %v605
    %2041 = vmatprep.subr.mxu0 %v610
    %2042 = vmatpush1.msra.mxu0 %v609
    %2043 = vmatprep.subr.mxu0 %v614
    %2044 = vmatpush1.msra.mxu0 %v613
    %2045 = vmatprep.subr.mxu0 %v618
    %2046 = vmatpush1.msra.mxu0 %v617
    %2047 = vmatprep.subr.mxu0 %v622
    %2048 = vmatpush1.msra.mxu0 %v621
    %2049 = vmatprep.subr.mxu0 %v626
    %2050 = vmatpush1.msra.mxu0 %v625
    %2051 = vmatprep.subr.mxu0 %v630
    %2052 = vmatpush1.msra.mxu0 %v629
    %2053 = vmatprep.subr.mxu0 %v634
    %2054 = vmatpush1.msra.mxu0 %v633
    %2055 = vmatprep.subr.mxu0 %v638
    %2056 = vmatpush1.msra.mxu0 %v637
    %2057 = vmatprep.subr.mxu0 %v642
    %2058 = vmatpush1.msra.mxu0 %v641
    %2059 = vmatprep.subr.mxu0 %v646
    %2060 = vmatpush1.msra.mxu0 %v645
    %2061 = vmatprep.subr.mxu0 %v650
    %2062 = vmatpush1.msra.mxu0 %v649
    %2063 = vmatprep.subr.mxu0 %v654
    %2064 = vmatpush1.msra.mxu0 %v653
    %2065 = vmatprep.subr.mxu0 %v658
    %2066 = vmatpush1.msra.mxu0 %v657
    %2067 = vmatprep.subr.mxu0 %v662
    %2068 = vmatpush1.msra.mxu0 %v661
    %2069 = vmatprep.mubr.f32.mxu0 %v1797
    %2070 = vmatmul.mubr.f32.gmra.mrb[0].mxu0 %v2004
    %v2071 = vpop.f32.mrb[0].mxu0
    %v2072 = vadd.f32 %v857, %v2071
    %v2073 = vpop.f32.mrb[0].mxu0
    %v2074 = vadd.f32 %v861, %v2073
    %2075 = vdwg.mxu0
    %2076 = vmatprep.subr.mxu0 %v540
    %2077 = vmatpush1.msra.mxu0 %v539
    %2078 = vmatprep.subr.mxu0 %v544
    %2079 = vmatpush1.msra.mxu0 %v543
    %2080 = vmatprep.subr.mxu0 %v548
    %2081 = vmatpush1.msra.mxu0 %v547
    %2082 = vmatprep.subr.mxu0 %v552
    %2083 = vmatpush1.msra.mxu0 %v551
    %2084 = vmatprep.subr.mxu0 %v556
    %2085 = vmatpush1.msra.mxu0 %v555
    %2086 = vmatprep.subr.mxu0 %v560
    %2087 = vmatpush1.msra.mxu0 %v559
    %2088 = vmatprep.subr.mxu0 %v564
    %2089 = vmatpush1.msra.mxu0 %v563
    %2090 = vmatprep.subr.mxu0 %v568
    %2091 = vmatpush1.msra.mxu0 %v567
    %2092 = vmatprep.subr.mxu0 %v572
    %2093 = vmatpush1.msra.mxu0 %v571
    %2094 = vmatprep.subr.mxu0 %v576
    %2095 = vmatpush1.msra.mxu0 %v575
    %2096 = vmatprep.subr.mxu0 %v580
    %2097 = vmatpush1.msra.mxu0 %v579
    %2098 = vmatprep.subr.mxu0 %v584
    %2099 = vmatpush1.msra.mxu0 %v583
    %2100 = vmatprep.subr.mxu0 %v588
    %2101 = vmatpush1.msra.mxu0 %v587
    %2102 = vmatprep.subr.mxu0 %v592
    %2103 = vmatpush1.msra.mxu0 %v591
    %2104 = vmatprep.subr.mxu0 %v596
    %2105 = vmatpush1.msra.mxu0 %v595
    %2106 = vmatprep.subr.mxu0 %v600
    %2107 = vmatpush1.msra.mxu0 %v599
    %2108 = vmatprep.subr.mxu0 %v604
    %2109 = vmatpush1.msra.mxu0 %v603
    %2110 = vmatprep.subr.mxu0 %v608
    %2111 = vmatpush1.msra.mxu0 %v607
    %2112 = vmatprep.subr.mxu0 %v612
    %2113 = vmatpush1.msra.mxu0 %v611
    %2114 = vmatprep.subr.mxu0 %v616
    %2115 = vmatpush1.msra.mxu0 %v615
    %2116 = vmatprep.subr.mxu0 %v620
    %2117 = vmatpush1.msra.mxu0 %v619
    %2118 = vmatprep.subr.mxu0 %v624
    %2119 = vmatpush1.msra.mxu0 %v623
    %2120 = vmatprep.subr.mxu0 %v628
    %2121 = vmatpush1.msra.mxu0 %v627
    %2122 = vmatprep.subr.mxu0 %v632
    %2123 = vmatpush1.msra.mxu0 %v631
    %2124 = vmatprep.subr.mxu0 %v636
    %2125 = vmatpush1.msra.mxu0 %v635
    %2126 = vmatprep.subr.mxu0 %v640
    %2127 = vmatpush1.msra.mxu0 %v639
    %2128 = vmatprep.subr.mxu0 %v644
    %2129 = vmatpush1.msra.mxu0 %v643
    %2130 = vmatprep.subr.mxu0 %v648
    %2131 = vmatpush1.msra.mxu0 %v647
    %2132 = vmatprep.subr.mxu0 %v652
    %2133 = vmatpush1.msra.mxu0 %v651
    %2134 = vmatprep.subr.mxu0 %v656
    %2135 = vmatpush1.msra.mxu0 %v655
    %2136 = vmatprep.subr.mxu0 %v660
    %2137 = vmatpush1.msra.mxu0 %v659
    %2138 = vmatprep.subr.mxu0 %v664
    %2139 = vmatpush1.msra.mxu0 %v663
    %2140 = vmatprep.mubr.f32.mxu0 %v1797
    %2141 = vmatmul.mubr.f32.gmra.mrb[0].mxu0 %v2004
    %v2142 = vpop.f32.mrb[0].mxu0
    %v2143 = vadd.f32 %v865, %v2142
    %v2144 = vpop.f32.mrb[0].mxu0
    %v2145 = vadd.f32 %v869, %v2144
    %2146 = vdwg.mxu0
    %v2147 = vxor.u32 %v2072, 2147483648
    %v2148 = vmul.f32 %v2147, 1.442695
    %v2149 = vpow.pop %v2148
    %v2150 = vadd.f32 %v2149, 1.0
    %v2151 = vrcp.pop %v2150
    %v2152 = vmul.f32 1.0, %v2151
    %v2153 = vxor.u32 %v2074, 2147483648
    %v2154 = vmul.f32 %v2153, 1.442695
    %v2155 = vpow.pop %v2154
    %v2156 = vadd.f32 %v2155, 1.0
    %v2157 = vrcp.pop %v2156
    %v2158 = vmul.f32 1.0, %v2157
    %v2159 = vtanh.pop %v2143
    %v2160 = vxor.u32 %v2145, 2147483648
    %v2161 = vmul.f32 %v2160, 1.442695
    %v2162 = vpow.pop %v2161
    %v2163 = vadd.f32 %v2162, 1.0
    %v2164 = vrcp.pop %v2163
    %v2165 = vmul.f32 1.0, %v2164
    %v2166 = vmul.f32 %v2158, %v1795
    %v2167 = vmul.f32 %v2152, %v2159
    %v2168 = vadd.f32 %v2166, %v2167
    %v2169 = vtanh.pop %v2168
    %v2170 = vmul.f32 %v2165, %v2169
    %v2171 = vmul.f32 %v2170, %v1044
    %2172 = vadd.xlane.f32.xlu0 %v2171
    %v2173 = vpop.xlane.xlu0 %2172
    %v2174 = vadd.f32 %v2173, %v1053
    %v2175 = vmax.f32 %v1802, %v2174
    %v2176 = vsub.f32 %v1802, %v2175
    %v2177 = vmul.f32 %v2176, 1.442695
    %v2178 = vpow.pop %v2177
    %v2179 = vsub.f32 %v2174, %v2175
    %v2180 = vmul.f32 %v2179, 1.442695
    %v2181 = vpow.pop %v2180
    %v2182 = vmul.f32 %v2178, %v1810
    %v2183 = vadd.f32 %v2182, %v2181
    %2185 = vset.pattern.permute.xlu0 0
    %2186 = vperm.xlu0 %2185, %v2178
    %v2187 = vpop.permute.xlu0 %2186
    %v2189 = vmul.f32 %v2187, %v1823
    %2191 = vset.pattern.permute.xlu0 0
    %2192 = vperm.xlu0 %2191, %v2181
    %v2193 = vpop.permute.xlu0 %2192
    %v2195 = vmul.f32 %v2193, %v2170
    %v2196 = vadd.f32 %v2189, %v2195
    %vm2197 = vcmp.eq.s32.totalorder %v678, 3
    %2199 = vset.pattern.permute.xlu0 0
    %2200 = vperm.xlu0 %2199, %v2174
    %v2201 = vpop.permute.xlu0 %2200
    %v2203 = vsel %vm2197, %v2201, %v1830
    %v2204 = vld [vmem:[#allocation2 + $0x80] sm:$0xff]
    %v2205 = vld [vmem:[#allocation2 + $0x88] sm:$0xff]
    %v2206 = vld [vmem:[#allocation2 + $0x90] sm:$0xff]
    %v2207 = vld [vmem:[#allocation2 + $0x98] sm:$0xff]
    %2208 = vmatprep.subr.mxu0 %v474
    %2209 = vmatpush1.msra.mxu0 %v473
    %2210 = vmatprep.subr.mxu0 %v478
    %2211 = vmatpush1.msra.mxu0 %v477
    %2212 = vmatprep.subr.mxu0 %v482
    %2213 = vmatpush1.msra.mxu0 %v481
    %2214 = vmatprep.subr.mxu0 %v486
    %2215 = vmatpush1.msra.mxu0 %v485
    %2216 = vmatprep.subr.mxu0 %v490
    %2217 = vmatpush1.msra.mxu0 %v489
    %2218 = vmatprep.subr.mxu0 %v494
    %2219 = vmatpush1.msra.mxu0 %v493
    %2220 = vmatprep.subr.mxu0 %v498
    %2221 = vmatpush1.msra.mxu0 %v497
    %2222 = vmatprep.subr.mxu0 %v502
    %2223 = vmatpush1.msra.mxu0 %v501
    %2224 = vmatprep.subr.mxu0 %v506
    %2225 = vmatpush1.msra.mxu0 %v505
    %2226 = vmatprep.subr.mxu0 %v510
    %2227 = vmatpush1.msra.mxu0 %v509
    %2228 = vmatprep.subr.mxu0 %v514
    %2229 = vmatpush1.msra.mxu0 %v513
    %2230 = vmatprep.subr.mxu0 %v518
    %2231 = vmatpush1.msra.mxu0 %v517
    %2232 = vmatprep.subr.mxu0 %v522
    %2233 = vmatpush1.msra.mxu0 %v521
    %2234 = vmatprep.subr.mxu0 %v526
    %2235 = vmatpush1.msra.mxu0 %v525
    %2236 = vmatprep.subr.mxu0 %v530
    %2237 = vmatpush1.msra.mxu0 %v529
    %2238 = vmatprep.subr.mxu0 %v534
    %2239 = vmatpush1.msra.mxu0 %v533
    %2240 = vmatprep.subr.mxu0 0.0
    %2241 = vmatpush1.msra.mxu0 0.0
    %2242 = vmatprep.subr.mxu0 0.0
    %2243 = vmatpush1.msra.mxu0 0.0
    %2244 = vmatprep.subr.mxu0 0.0
    %2245 = vmatpush1.msra.mxu0 0.0
    %2246 = vmatprep.subr.mxu0 0.0
    %2247 = vmatpush1.msra.mxu0 0.0
    %2248 = vmatprep.subr.mxu0 0.0
    %2249 = vmatpush1.msra.mxu0 0.0
    %2250 = vmatprep.subr.mxu0 0.0
    %2251 = vmatpush1.msra.mxu0 0.0
    %2252 = vmatprep.subr.mxu0 0.0
    %2253 = vmatpush1.msra.mxu0 0.0
    %2254 = vmatprep.subr.mxu0 0.0
    %2255 = vmatpush1.msra.mxu0 0.0
    %2256 = vmatprep.subr.mxu0 0.0
    %2257 = vmatpush1.msra.mxu0 0.0
    %2258 = vmatprep.subr.mxu0 0.0
    %2259 = vmatpush1.msra.mxu0 0.0
    %2260 = vmatprep.subr.mxu0 0.0
    %2261 = vmatpush1.msra.mxu0 0.0
    %2262 = vmatprep.subr.mxu0 0.0
    %2263 = vmatpush1.msra.mxu0 0.0
    %2264 = vmatprep.subr.mxu0 0.0
    %2265 = vmatpush1.msra.mxu0 0.0
    %2266 = vmatprep.subr.mxu0 0.0
    %2267 = vmatpush1.msra.mxu0 0.0
    %2268 = vmatprep.subr.mxu0 0.0
    %2269 = vmatpush1.msra.mxu0 0.0
    %2270 = vmatprep.subr.mxu0 0.0
    %2271 = vmatpush1.msra.mxu0 0.0
    %2272 = vmatprep.mubr.f32.mxu0 0.0
    %2273 = vmatmul.mubr.f32.gmra.mrb[0].mxu0 %v2004
    %v2274 = vpop.f32.mrb[0].mxu0
    %v2275 = vadd.f32 0.0, %v2274
    %v2276 = vpop.f32.mrb[0].mxu0
    %v2277 = vadd.f32 0.0, %v2276
    %2278 = vdwg.mxu0
    %2279 = vmatprep.subr.mxu0 %v476
    %2280 = vmatpush1.msra.mxu0 %v475
    %2281 = vmatprep.subr.mxu0 %v480
    %2282 = vmatpush1.msra.mxu0 %v479
    %2283 = vmatprep.subr.mxu0 %v484
    %2284 = vmatpush1.msra.mxu0 %v483
    %2285 = vmatprep.subr.mxu0 %v488
    %2286 = vmatpush1.msra.mxu0 %v487
    %2287 = vmatprep.subr.mxu0 %v492
    %2288 = vmatpush1.msra.mxu0 %v491
    %2289 = vmatprep.subr.mxu0 %v496
    %2290 = vmatpush1.msra.mxu0 %v495
    %2291 = vmatprep.subr.mxu0 %v500
    %2292 = vmatpush1.msra.mxu0 %v499
    %2293 = vmatprep.subr.mxu0 %v504
    %2294 = vmatpush1.msra.mxu0 %v503
    %2295 = vmatprep.subr.mxu0 %v508
    %2296 = vmatpush1.msra.mxu0 %v507
    %2297 = vmatprep.subr.mxu0 %v512
    %2298 = vmatpush1.msra.mxu0 %v511
    %2299 = vmatprep.subr.mxu0 %v516
    %2300 = vmatpush1.msra.mxu0 %v515
    %2301 = vmatprep.subr.mxu0 %v520
    %2302 = vmatpush1.msra.mxu0 %v519
    %2303 = vmatprep.subr.mxu0 %v524
    %2304 = vmatpush1.msra.mxu0 %v523
    %2305 = vmatprep.subr.mxu0 %v528
    %2306 = vmatpush1.msra.mxu0 %v527
    %2307 = vmatprep.subr.mxu0 %v532
    %2308 = vmatpush1.msra.mxu0 %v531
    %2309 = vmatprep.subr.mxu0 %v536
    %2310 = vmatpush1.msra.mxu0 %v535
    %2311 = vmatprep.subr.mxu0 0.0
    %2312 = vmatpush1.msra.mxu0 0.0
    %2313 = vmatprep.subr.mxu0 0.0
    %2314 = vmatpush1.msra.mxu0 0.0
    %2315 = vmatprep.subr.mxu0 0.0
    %2316 = vmatpush1.msra.mxu0 0.0
    %2317 = vmatprep.subr.mxu0 0.0
    %2318 = vmatpush1.msra.mxu0 0.0
    %2319 = vmatprep.subr.mxu0 0.0
    %2320 = vmatpush1.msra.mxu0 0.0
    %2321 = vmatprep.subr.mxu0 0.0
    %2322 = vmatpush1.msra.mxu0 0.0
    %2323 = vmatprep.subr.mxu0 0.0
    %2324 = vmatpush1.msra.mxu0 0.0
    %2325 = vmatprep.subr.mxu0 0.0
    %2326 = vmatpush1.msra.mxu0 0.0
    %2327 = vmatprep.subr.mxu0 0.0
    %2328 = vmatpush1.msra.mxu0 0.0
    %2329 = vmatprep.subr.mxu0 0.0
    %2330 = vmatpush1.msra.mxu0 0.0
    %2331 = vmatprep.subr.mxu0 0.0
    %2332 = vmatpush1.msra.mxu0 0.0
    %2333 = vmatprep.subr.mxu0 0.0
    %2334 = vmatpush1.msra.mxu0 0.0
    %2335 = vmatprep.subr.mxu0 0.0
    %2336 = vmatpush1.msra.mxu0 0.0
    %2337 = vmatprep.subr.mxu0 0.0
    %2338 = vmatpush1.msra.mxu0 0.0
    %2339 = vmatprep.subr.mxu0 0.0
    %2340 = vmatpush1.msra.mxu0 0.0
    %2341 = vmatprep.subr.mxu0 0.0
    %2342 = vmatpush1.msra.mxu0 0.0
    %2343 = vmatprep.mubr.f32.mxu0 0.0
    %2344 = vmatmul.mubr.f32.gmra.mrb[0].mxu0 %v2004
    %v2345 = vpop.f32.mrb[0].mxu0
    %v2346 = vadd.f32 0.0, %v2345
    %v2347 = vpop.f32.mrb[0].mxu0
    %v2348 = vadd.f32 0.0, %v2347
    %2349 = vdwg.mxu0
    %v2350 = vadd.f32 %v2204, %v2275
    %v2351 = vadd.f32 %v2205, %v2277
    %v2352 = vadd.f32 %v2206, %v2346
    %v2353 = vadd.f32 %v2207, %v2348
    %v2354 = vxor.u32 %v2350, 2147483648
    %v2355 = vmul.f32 %v2354, 1.442695
    %v2356 = vpow.pop %v2355
    %v2357 = vadd.f32 %v2356, 1.0
    %v2358 = vrcp.pop %v2357
    %v2359 = vmul.f32 1.0, %v2358
    %v2360 = vxor.u32 %v2351, 2147483648
    %v2361 = vmul.f32 %v2360, 1.442695
    %v2362 = vpow.pop %v2361
    %v2363 = vadd.f32 %v2362, 1.0
    %v2364 = vrcp.pop %v2363
    %v2365 = vmul.f32 1.0, %v2364
    %v2366 = vtanh.pop %v2352
    %v2367 = vxor.u32 %v2353, 2147483648
    %v2368 = vmul.f32 %v2367, 1.442695
    %v2369 = vpow.pop %v2368
    %v2370 = vadd.f32 %v2369, 1.0
    %v2371 = vrcp.pop %v2370
    %v2372 = vmul.f32 1.0, %v2371
    %v2373 = vmul.f32 %v2365, %v2002
    %v2374 = vmul.f32 %v2359, %v2366
    %v2375 = vadd.f32 %v2373, %v2374
    %v2376 = vtanh.pop %v2375
    %v2377 = vmul.f32 %v2372, %v2376
    %2378 = vmatprep.subr.mxu0 %v538
    %2379 = vmatpush1.msra.mxu0 %v537
    %2380 = vmatprep.subr.mxu0 %v542
    %2381 = vmatpush1.msra.mxu0 %v541
    %2382 = vmatprep.subr.mxu0 %v546
    %2383 = vmatpush1.msra.mxu0 %v545
    %2384 = vmatprep.subr.mxu0 %v550
    %2385 = vmatpush1.msra.mxu0 %v549
    %2386 = vmatprep.subr.mxu0 %v554
    %2387 = vmatpush1.msra.mxu0 %v553
    %2388 = vmatprep.subr.mxu0 %v558
    %2389 = vmatpush1.msra.mxu0 %v557
    %2390 = vmatprep.subr.mxu0 %v562
    %2391 = vmatpush1.msra.mxu0 %v561
    %2392 = vmatprep.subr.mxu0 %v566
    %2393 = vmatpush1.msra.mxu0 %v565
    %2394 = vmatprep.subr.mxu0 %v570
    %2395 = vmatpush1.msra.mxu0 %v569
    %2396 = vmatprep.subr.mxu0 %v574
    %2397 = vmatpush1.msra.mxu0 %v573
    %2398 = vmatprep.subr.mxu0 %v578
    %2399 = vmatpush1.msra.mxu0 %v577
    %2400 = vmatprep.subr.mxu0 %v582
    %2401 = vmatpush1.msra.mxu0 %v581
    %2402 = vmatprep.subr.mxu0 %v586
    %2403 = vmatpush1.msra.mxu0 %v585
    %2404 = vmatprep.subr.mxu0 %v590
    %2405 = vmatpush1.msra.mxu0 %v589
    %2406 = vmatprep.subr.mxu0 %v594
    %2407 = vmatpush1.msra.mxu0 %v593
    %2408 = vmatprep.subr.mxu0 %v598
    %2409 = vmatpush1.msra.mxu0 %v597
    %2410 = vmatprep.subr.mxu0 %v602
    %2411 = vmatpush1.msra.mxu0 %v601
    %2412 = vmatprep.subr.mxu0 %v606
    %2413 = vmatpush1.msra.mxu0 %v605
    %2414 = vmatprep.subr.mxu0 %v610
    %2415 = vmatpush1.msra.mxu0 %v609
    %2416 = vmatprep.subr.mxu0 %v614
    %2417 = vmatpush1.msra.mxu0 %v613
    %2418 = vmatprep.subr.mxu0 %v618
    %2419 = vmatpush1.msra.mxu0 %v617
    %2420 = vmatprep.subr.mxu0 %v622
    %2421 = vmatpush1.msra.mxu0 %v621
    %2422 = vmatprep.subr.mxu0 %v626
    %2423 = vmatpush1.msra.mxu0 %v625
    %2424 = vmatprep.subr.mxu0 %v630
    %2425 = vmatpush1.msra.mxu0 %v629
    %2426 = vmatprep.subr.mxu0 %v634
    %2427 = vmatpush1.msra.mxu0 %v633
    %2428 = vmatprep.subr.mxu0 %v638
    %2429 = vmatpush1.msra.mxu0 %v637
    %2430 = vmatprep.subr.mxu0 %v642
    %2431 = vmatpush1.msra.mxu0 %v641
    %2432 = vmatprep.subr.mxu0 %v646
    %2433 = vmatpush1.msra.mxu0 %v645
    %2434 = vmatprep.subr.mxu0 %v650
    %2435 = vmatpush1.msra.mxu0 %v649
    %2436 = vmatprep.subr.mxu0 %v654
    %2437 = vmatpush1.msra.mxu0 %v653
    %2438 = vmatprep.subr.mxu0 %v658
    %2439 = vmatpush1.msra.mxu0 %v657
    %2440 = vmatprep.subr.mxu0 %v662
    %2441 = vmatpush1.msra.mxu0 %v661
    %2442 = vmatprep.mubr.f32.mxu0 %v2170
    %2443 = vmatmul.mubr.f32.gmra.mrb[0].mxu0 %v2377
    %v2444 = vpop.f32.mrb[0].mxu0
    %v2445 = vadd.f32 %v857, %v2444
    %v2446 = vpop.f32.mrb[0].mxu0
    %v2447 = vadd.f32 %v861, %v2446
    %2448 = vdwg.mxu0
    %2449 = vmatprep.subr.mxu0 %v540
    %2450 = vmatpush1.msra.mxu0 %v539
    %2451 = vmatprep.subr.mxu0 %v544
    %2452 = vmatpush1.msra.mxu0 %v543
    %2453 = vmatprep.subr.mxu0 %v548
    %2454 = vmatpush1.msra.mxu0 %v547
    %2455 = vmatprep.subr.mxu0 %v552
    %2456 = vmatpush1.msra.mxu0 %v551
    %2457 = vmatprep.subr.mxu0 %v556
    %2458 = vmatpush1.msra.mxu0 %v555
    %2459 = vmatprep.subr.mxu0 %v560
    %2460 = vmatpush1.msra.mxu0 %v559
    %2461 = vmatprep.subr.mxu0 %v564
    %2462 = vmatpush1.msra.mxu0 %v563
    %2463 = vmatprep.subr.mxu0 %v568
    %2464 = vmatpush1.msra.mxu0 %v567
    %2465 = vmatprep.subr.mxu0 %v572
    %2466 = vmatpush1.msra.mxu0 %v571
    %2467 = vmatprep.subr.mxu0 %v576
    %2468 = vmatpush1.msra.mxu0 %v575
    %2469 = vmatprep.subr.mxu0 %v580
    %2470 = vmatpush1.msra.mxu0 %v579
    %2471 = vmatprep.subr.mxu0 %v584
    %2472 = vmatpush1.msra.mxu0 %v583
    %2473 = vmatprep.subr.mxu0 %v588
    %2474 = vmatpush1.msra.mxu0 %v587
    %2475 = vmatprep.subr.mxu0 %v592
    %2476 = vmatpush1.msra.mxu0 %v591
    %2477 = vmatprep.subr.mxu0 %v596
    %2478 = vmatpush1.msra.mxu0 %v595
    %2479 = vmatprep.subr.mxu0 %v600
    %2480 = vmatpush1.msra.mxu0 %v599
    %2481 = vmatprep.subr.mxu0 %v604
    %2482 = vmatpush1.msra.mxu0 %v603
    %2483 = vmatprep.subr.mxu0 %v608
    %2484 = vmatpush1.msra.mxu0 %v607
    %2485 = vmatprep.subr.mxu0 %v612
    %2486 = vmatpush1.msra.mxu0 %v611
    %2487 = vmatprep.subr.mxu0 %v616
    %2488 = vmatpush1.msra.mxu0 %v615
    %2489 = vmatprep.subr.mxu0 %v620
    %2490 = vmatpush1.msra.mxu0 %v619
    %2491 = vmatprep.subr.mxu0 %v624
    %2492 = vmatpush1.msra.mxu0 %v623
    %2493 = vmatprep.subr.mxu0 %v628
    %2494 = vmatpush1.msra.mxu0 %v627
    %2495 = vmatprep.subr.mxu0 %v632
    %2496 = vmatpush1.msra.mxu0 %v631
    %2497 = vmatprep.subr.mxu0 %v636
    %2498 = vmatpush1.msra.mxu0 %v635
    %2499 = vmatprep.subr.mxu0 %v640
    %2500 = vmatpush1.msra.mxu0 %v639
    %2501 = vmatprep.subr.mxu0 %v644
    %2502 = vmatpush1.msra.mxu0 %v643
    %2503 = vmatprep.subr.mxu0 %v648
    %2504 = vmatpush1.msra.mxu0 %v647
    %2505 = vmatprep.subr.mxu0 %v652
    %2506 = vmatpush1.msra.mxu0 %v651
    %2507 = vmatprep.subr.mxu0 %v656
    %2508 = vmatpush1.msra.mxu0 %v655
    %2509 = vmatprep.subr.mxu0 %v660
    %2510 = vmatpush1.msra.mxu0 %v659
    %2511 = vmatprep.subr.mxu0 %v664
    %2512 = vmatpush1.msra.mxu0 %v663
    %2513 = vmatprep.mubr.f32.mxu0 %v2170
    %2514 = vmatmul.mubr.f32.gmra.mrb[0].mxu0 %v2377
    %v2515 = vpop.f32.mrb[0].mxu0
    %v2516 = vadd.f32 %v865, %v2515
    %v2517 = vpop.f32.mrb[0].mxu0
    %v2518 = vadd.f32 %v869, %v2517
    %2519 = vdwg.mxu0
    %v2520 = vxor.u32 %v2445, 2147483648
    %v2521 = vmul.f32 %v2520, 1.442695
    %v2522 = vpow.pop %v2521
    %v2523 = vadd.f32 %v2522, 1.0
    %v2524 = vrcp.pop %v2523
    %v2525 = vmul.f32 1.0, %v2524
    %v2526 = vxor.u32 %v2447, 2147483648
    %v2527 = vmul.f32 %v2526, 1.442695
    %v2528 = vpow.pop %v2527
    %v2529 = vadd.f32 %v2528, 1.0
    %v2530 = vrcp.pop %v2529
    %v2531 = vmul.f32 1.0, %v2530
    %v2532 = vtanh.pop %v2516
    %v2533 = vxor.u32 %v2518, 2147483648
    %v2534 = vmul.f32 %v2533, 1.442695
    %v2535 = vpow.pop %v2534
    %v2536 = vadd.f32 %v2535, 1.0
    %v2537 = vrcp.pop %v2536
    %v2538 = vmul.f32 1.0, %v2537
    %v2539 = vmul.f32 %v2531, %v2168
    %v2540 = vmul.f32 %v2525, %v2532
    %v2541 = vadd.f32 %v2539, %v2540
    %v2542 = vtanh.pop %v2541
    %v2543 = vmul.f32 %v2538, %v2542
    %v2544 = vmul.f32 %v2543, %v1044
    %2545 = vadd.xlane.f32.xlu0 %v2544
    %v2546 = vpop.xlane.xlu0 %2545
    %v2547 = vadd.f32 %v2546, %v1053
    %v2548 = vmax.f32 %v2175, %v2547
    %v2549 = vsub.f32 %v2175, %v2548
    %v2550 = vmul.f32 %v2549, 1.442695
    %v2551 = vpow.pop %v2550
    %v2552 = vsub.f32 %v2547, %v2548
    %v2553 = vmul.f32 %v2552, 1.442695
    %v2554 = vpow.pop %v2553
    %v2555 = vmul.f32 %v2551, %v2183
    %v2556 = vadd.f32 %v2555, %v2554
    %2558 = vset.pattern.permute.xlu0 0
    %2559 = vperm.xlu0 %2558, %v2551
    %v2560 = vpop.permute.xlu0 %2559
    %v2562 = vmul.f32 %v2560, %v2196
    %2564 = vset.pattern.permute.xlu0 0
    %2565 = vperm.xlu0 %2564, %v2554
    %v2566 = vpop.permute.xlu0 %2565
    %v2568 = vmul.f32 %v2566, %v2543
    %v2569 = vadd.f32 %v2562, %v2568
    %vm2570 = vcmp.eq.s32.totalorder %v678, 4
    %2572 = vset.pattern.permute.xlu0 0
    %2573 = vperm.xlu0 %2572, %v2547
    %v2574 = vpop.permute.xlu0 %2573
    %v2576 = vsel %vm2570, %v2574, %v2203
    %v2577 = vld [vmem:[#allocation2 + $0xa0] sm:$0xff]
    %v2578 = vld [vmem:[#allocation2 + $0xa8] sm:$0xff]
    %v2579 = vld [vmem:[#allocation2 + $0xb0] sm:$0xff]
    %v2580 = vld [vmem:[#allocation2 + $0xb8] sm:$0xff]
    %2581 = vmatprep.subr.mxu0 %v474
    %2582 = vmatpush1.msra.mxu0 %v473
    %2583 = vmatprep.subr.mxu0 %v478
    %2584 = vmatpush1.msra.mxu0 %v477
    %2585 = vmatprep.subr.mxu0 %v482
    %2586 = vmatpush1.msra.mxu0 %v481
    %2587 = vmatprep.subr.mxu0 %v486
    %2588 = vmatpush1.msra.mxu0 %v485
    %2589 = vmatprep.subr.mxu0 %v490
    %2590 = vmatpush1.msra.mxu0 %v489
    %2591 = vmatprep.subr.mxu0 %v494
    %2592 = vmatpush1.msra.mxu0 %v493
    %2593 = vmatprep.subr.mxu0 %v498
    %2594 = vmatpush1.msra.mxu0 %v497
    %2595 = vmatprep.subr.mxu0 %v502
    %2596 = vmatpush1.msra.mxu0 %v501
    %2597 = vmatprep.subr.mxu0 %v506
    %2598 = vmatpush1.msra.mxu0 %v505
    %2599 = vmatprep.subr.mxu0 %v510
    %2600 = vmatpush1.msra.mxu0 %v509
    %2601 = vmatprep.subr.mxu0 %v514
    %2602 = vmatpush1.msra.mxu0 %v513
    %2603 = vmatprep.subr.mxu0 %v518
    %2604 = vmatpush1.msra.mxu0 %v517
    %2605 = vmatprep.subr.mxu0 %v522
    %2606 = vmatpush1.msra.mxu0 %v521
    %2607 = vmatprep.subr.mxu0 %v526
    %2608 = vmatpush1.msra.mxu0 %v525
    %2609 = vmatprep.subr.mxu0 %v530
    %2610 = vmatpush1.msra.mxu0 %v529
    %2611 = vmatprep.subr.mxu0 %v534
    %2612 = vmatpush1.msra.mxu0 %v533
    %2613 = vmatprep.subr.mxu0 0.0
    %2614 = vmatpush1.msra.mxu0 0.0
    %2615 = vmatprep.subr.mxu0 0.0
    %2616 = vmatpush1.msra.mxu0 0.0
    %2617 = vmatprep.subr.mxu0 0.0
    %2618 = vmatpush1.msra.mxu0 0.0
    %2619 = vmatprep.subr.mxu0 0.0
    %2620 = vmatpush1.msra.mxu0 0.0
    %2621 = vmatprep.subr.mxu0 0.0
    %2622 = vmatpush1.msra.mxu0 0.0
    %2623 = vmatprep.subr.mxu0 0.0
    %2624 = vmatpush1.msra.mxu0 0.0
    %2625 = vmatprep.subr.mxu0 0.0
    %2626 = vmatpush1.msra.mxu0 0.0
    %2627 = vmatprep.subr.mxu0 0.0
    %2628 = vmatpush1.msra.mxu0 0.0
    %2629 = vmatprep.subr.mxu0 0.0
    %2630 = vmatpush1.msra.mxu0 0.0
    %2631 = vmatprep.subr.mxu0 0.0
    %2632 = vmatpush1.msra.mxu0 0.0
    %2633 = vmatprep.subr.mxu0 0.0
    %2634 = vmatpush1.msra.mxu0 0.0
    %2635 = vmatprep.subr.mxu0 0.0
    %2636 = vmatpush1.msra.mxu0 0.0
    %2637 = vmatprep.subr.mxu0 0.0
    %2638 = vmatpush1.msra.mxu0 0.0
    %2639 = vmatprep.subr.mxu0 0.0
    %2640 = vmatpush1.msra.mxu0 0.0
    %2641 = vmatprep.subr.mxu0 0.0
    %2642 = vmatpush1.msra.mxu0 0.0
    %2643 = vmatprep.subr.mxu0 0.0
    %2644 = vmatpush1.msra.mxu0 0.0
    %2645 = vmatprep.mubr.f32.mxu0 0.0
    %2646 = vmatmul.mubr.f32.gmra.mrb[0].mxu0 %v2377
    %v2647 = vpop.f32.mrb[0].mxu0
    %v2648 = vadd.f32 0.0, %v2647
    %v2649 = vpop.f32.mrb[0].mxu0
    %v2650 = vadd.f32 0.0, %v2649
    %2651 = vdwg.mxu0
    %2652 = vmatprep.subr.mxu0 %v476
    %2653 = vmatpush1.msra.mxu0 %v475
    %2654 = vmatprep.subr.mxu0 %v480
    %2655 = vmatpush1.msra.mxu0 %v479
    %2656 = vmatprep.subr.mxu0 %v484
    %2657 = vmatpush1.msra.mxu0 %v483
    %2658 = vmatprep.subr.mxu0 %v488
    %2659 = vmatpush1.msra.mxu0 %v487
    %2660 = vmatprep.subr.mxu0 %v492
    %2661 = vmatpush1.msra.mxu0 %v491
    %2662 = vmatprep.subr.mxu0 %v496
    %2663 = vmatpush1.msra.mxu0 %v495
    %2664 = vmatprep.subr.mxu0 %v500
    %2665 = vmatpush1.msra.mxu0 %v499
    %2666 = vmatprep.subr.mxu0 %v504
    %2667 = vmatpush1.msra.mxu0 %v503
    %2668 = vmatprep.subr.mxu0 %v508
    %2669 = vmatpush1.msra.mxu0 %v507
    %2670 = vmatprep.subr.mxu0 %v512
    %2671 = vmatpush1.msra.mxu0 %v511
    %2672 = vmatprep.subr.mxu0 %v516
    %2673 = vmatpush1.msra.mxu0 %v515
    %2674 = vmatprep.subr.mxu0 %v520
    %2675 = vmatpush1.msra.mxu0 %v519
    %2676 = vmatprep.subr.mxu0 %v524
    %2677 = vmatpush1.msra.mxu0 %v523
    %2678 = vmatprep.subr.mxu0 %v528
    %2679 = vmatpush1.msra.mxu0 %v527
    %2680 = vmatprep.subr.mxu0 %v532
    %2681 = vmatpush1.msra.mxu0 %v531
    %2682 = vmatprep.subr.mxu0 %v536
    %2683 = vmatpush1.msra.mxu0 %v535
    %2684 = vmatprep.subr.mxu0 0.0
    %2685 = vmatpush1.msra.mxu0 0.0
    %2686 = vmatprep.subr.mxu0 0.0
    %2687 = vmatpush1.msra.mxu0 0.0
    %2688 = vmatprep.subr.mxu0 0.0
    %2689 = vmatpush1.msra.mxu0 0.0
    %2690 = vmatprep.subr.mxu0 0.0
    %2691 = vmatpush1.msra.mxu0 0.0
    %2692 = vmatprep.subr.mxu0 0.0
    %2693 = vmatpush1.msra.mxu0 0.0
    %2694 = vmatprep.subr.mxu0 0.0
    %2695 = vmatpush1.msra.mxu0 0.0
    %2696 = vmatprep.subr.mxu0 0.0
    %2697 = vmatpush1.msra.mxu0 0.0
    %2698 = vmatprep.subr.mxu0 0.0
    %2699 = vmatpush1.msra.mxu0 0.0
    %2700 = vmatprep.subr.mxu0 0.0
    %2701 = vmatpush1.msra.mxu0 0.0
    %2702 = vmatprep.subr.mxu0 0.0
    %2703 = vmatpush1.msra.mxu0 0.0
    %2704 = vmatprep.subr.mxu0 0.0
    %2705 = vmatpush1.msra.mxu0 0.0
    %2706 = vmatprep.subr.mxu0 0.0
    %2707 = vmatpush1.msra.mxu0 0.0
    %2708 = vmatprep.subr.mxu0 0.0
    %2709 = vmatpush1.msra.mxu0 0.0
    %2710 = vmatprep.subr.mxu0 0.0
    %2711 = vmatpush1.msra.mxu0 0.0
    %2712 = vmatprep.subr.mxu0 0.0
    %2713 = vmatpush1.msra.mxu0 0.0
    %2714 = vmatprep.subr.mxu0 0.0
    %2715 = vmatpush1.msra.mxu0 0.0
    %2716 = vmatprep.mubr.f32.mxu0 0.0
    %2717 = vmatmul.mubr.f32.gmra.mrb[0].mxu0 %v2377
    %v2718 = vpop.f32.mrb[0].mxu0
    %v2719 = vadd.f32 0.0, %v2718
    %v2720 = vpop.f32.mrb[0].mxu0
    %v2721 = vadd.f32 0.0, %v2720
    %2722 = vdwg.mxu0
    %v2723 = vadd.f32 %v2577, %v2648
    %v2724 = vadd.f32 %v2578, %v2650
    %v2725 = vadd.f32 %v2579, %v2719
    %v2726 = vadd.f32 %v2580, %v2721
    %v2727 = vxor.u32 %v2723, 2147483648
    %v2728 = vmul.f32 %v2727, 1.442695
    %v2729 = vpow.pop %v2728
    %v2730 = vadd.f32 %v2729, 1.0
    %v2731 = vrcp.pop %v2730
    %v2732 = vmul.f32 1.0, %v2731
    %v2733 = vxor.u32 %v2724, 2147483648
    %v2734 = vmul.f32 %v2733, 1.442695
    %v2735 = vpow.pop %v2734
    %v2736 = vadd.f32 %v2735, 1.0
    %v2737 = vrcp.pop %v2736
    %v2738 = vmul.f32 1.0, %v2737
    %v2739 = vtanh.pop %v2725
    %v2740 = vxor.u32 %v2726, 2147483648
    %v2741 = vmul.f32 %v2740, 1.442695
    %v2742 = vpow.pop %v2741
    %v2743 = vadd.f32 %v2742, 1.0
    %v2744 = vrcp.pop %v2743
    %v2745 = vmul.f32 1.0, %v2744
    %v2746 = vmul.f32 %v2738, %v2375
    %v2747 = vmul.f32 %v2732, %v2739
    %v2748 = vadd.f32 %v2746, %v2747
    %v2749 = vtanh.pop %v2748
    %v2750 = vmul.f32 %v2745, %v2749
    %2751 = vmatprep.subr.mxu0 %v538
    %2752 = vmatpush1.msra.mxu0 %v537
    %2753 = vmatprep.subr.mxu0 %v542
    %2754 = vmatpush1.msra.mxu0 %v541
    %2755 = vmatprep.subr.mxu0 %v546
    %2756 = vmatpush1.msra.mxu0 %v545
    %2757 = vmatprep.subr.mxu0 %v550
    %2758 = vmatpush1.msra.mxu0 %v549
    %2759 = vmatprep.subr.mxu0 %v554
    %2760 = vmatpush1.msra.mxu0 %v553
    %2761 = vmatprep.subr.mxu0 %v558
    %2762 = vmatpush1.msra.mxu0 %v557
    %2763 = vmatprep.subr.mxu0 %v562
    %2764 = vmatpush1.msra.mxu0 %v561
    %2765 = vmatprep.subr.mxu0 %v566
    %2766 = vmatpush1.msra.mxu0 %v565
    %2767 = vmatprep.subr.mxu0 %v570
    %2768 = vmatpush1.msra.mxu0 %v569
    %2769 = vmatprep.subr.mxu0 %v574
    %2770 = vmatpush1.msra.mxu0 %v573
    %2771 = vmatprep.subr.mxu0 %v578
    %2772 = vmatpush1.msra.mxu0 %v577
    %2773 = vmatprep.subr.mxu0 %v582
    %2774 = vmatpush1.msra.mxu0 %v581
    %2775 = vmatprep.subr.mxu0 %v586
    %2776 = vmatpush1.msra.mxu0 %v585
    %2777 = vmatprep.subr.mxu0 %v590
    %2778 = vmatpush1.msra.mxu0 %v589
    %2779 = vmatprep.subr.mxu0 %v594
    %2780 = vmatpush1.msra.mxu0 %v593
    %2781 = vmatprep.subr.mxu0 %v598
    %2782 = vmatpush1.msra.mxu0 %v597
    %2783 = vmatprep.subr.mxu0 %v602
    %2784 = vmatpush1.msra.mxu0 %v601
    %2785 = vmatprep.subr.mxu0 %v606
    %2786 = vmatpush1.msra.mxu0 %v605
    %2787 = vmatprep.subr.mxu0 %v610
    %2788 = vmatpush1.msra.mxu0 %v609
    %2789 = vmatprep.subr.mxu0 %v614
    %2790 = vmatpush1.msra.mxu0 %v613
    %2791 = vmatprep.subr.mxu0 %v618
    %2792 = vmatpush1.msra.mxu0 %v617
    %2793 = vmatprep.subr.mxu0 %v622
    %2794 = vmatpush1.msra.mxu0 %v621
    %2795 = vmatprep.subr.mxu0 %v626
    %2796 = vmatpush1.msra.mxu0 %v625
    %2797 = vmatprep.subr.mxu0 %v630
    %2798 = vmatpush1.msra.mxu0 %v629
    %2799 = vmatprep.subr.mxu0 %v634
    %2800 = vmatpush1.msra.mxu0 %v633
    %2801 = vmatprep.subr.mxu0 %v638
    %2802 = vmatpush1.msra.mxu0 %v637
    %2803 = vmatprep.subr.mxu0 %v642
    %2804 = vmatpush1.msra.mxu0 %v641
    %2805 = vmatprep.subr.mxu0 %v646
    %2806 = vmatpush1.msra.mxu0 %v645
    %2807 = vmatprep.subr.mxu0 %v650
    %2808 = vmatpush1.msra.mxu0 %v649
    %2809 = vmatprep.subr.mxu0 %v654
    %2810 = vmatpush1.msra.mxu0 %v653
    %2811 = vmatprep.subr.mxu0 %v658
    %2812 = vmatpush1.msra.mxu0 %v657
    %2813 = vmatprep.subr.mxu0 %v662
    %2814 = vmatpush1.msra.mxu0 %v661
    %2815 = vmatprep.mubr.f32.mxu0 %v2543
    %2816 = vmatmul.mubr.f32.gmra.mrb[0].mxu0 %v2750
    %v2817 = vpop.f32.mrb[0].mxu0
    %v2818 = vadd.f32 %v857, %v2817
    %v2819 = vpop.f32.mrb[0].mxu0
    %v2820 = vadd.f32 %v861, %v2819
    %2821 = vdwg.mxu0
    %2822 = vmatprep.subr.mxu0 %v540
    %2823 = vmatpush1.msra.mxu0 %v539
    %2824 = vmatprep.subr.mxu0 %v544
    %2825 = vmatpush1.msra.mxu0 %v543
    %2826 = vmatprep.subr.mxu0 %v548
    %2827 = vmatpush1.msra.mxu0 %v547
    %2828 = vmatprep.subr.mxu0 %v552
    %2829 = vmatpush1.msra.mxu0 %v551
    %2830 = vmatprep.subr.mxu0 %v556
    %2831 = vmatpush1.msra.mxu0 %v555
    %2832 = vmatprep.subr.mxu0 %v560
    %2833 = vmatpush1.msra.mxu0 %v559
    %2834 = vmatprep.subr.mxu0 %v564
    %2835 = vmatpush1.msra.mxu0 %v563
    %2836 = vmatprep.subr.mxu0 %v568
    %2837 = vmatpush1.msra.mxu0 %v567
    %2838 = vmatprep.subr.mxu0 %v572
    %2839 = vmatpush1.msra.mxu0 %v571
    %2840 = vmatprep.subr.mxu0 %v576
    %2841 = vmatpush1.msra.mxu0 %v575
    %2842 = vmatprep.subr.mxu0 %v580
    %2843 = vmatpush1.msra.mxu0 %v579
    %2844 = vmatprep.subr.mxu0 %v584
    %2845 = vmatpush1.msra.mxu0 %v583
    %2846 = vmatprep.subr.mxu0 %v588
    %2847 = vmatpush1.msra.mxu0 %v587
    %2848 = vmatprep.subr.mxu0 %v592
    %2849 = vmatpush1.msra.mxu0 %v591
    %2850 = vmatprep.subr.mxu0 %v596
    %2851 = vmatpush1.msra.mxu0 %v595
    %2852 = vmatprep.subr.mxu0 %v600
    %2853 = vmatpush1.msra.mxu0 %v599
    %2854 = vmatprep.subr.mxu0 %v604
    %2855 = vmatpush1.msra.mxu0 %v603
    %2856 = vmatprep.subr.mxu0 %v608
    %2857 = vmatpush1.msra.mxu0 %v607
    %2858 = vmatprep.subr.mxu0 %v612
    %2859 = vmatpush1.msra.mxu0 %v611
    %2860 = vmatprep.subr.mxu0 %v616
    %2861 = vmatpush1.msra.mxu0 %v615
    %2862 = vmatprep.subr.mxu0 %v620
    %2863 = vmatpush1.msra.mxu0 %v619
    %2864 = vmatprep.subr.mxu0 %v624
    %2865 = vmatpush1.msra.mxu0 %v623
    %2866 = vmatprep.subr.mxu0 %v628
    %2867 = vmatpush1.msra.mxu0 %v627
    %2868 = vmatprep.subr.mxu0 %v632
    %2869 = vmatpush1.msra.mxu0 %v631
    %2870 = vmatprep.subr.mxu0 %v636
    %2871 = vmatpush1.msra.mxu0 %v635
    %2872 = vmatprep.subr.mxu0 %v640
    %2873 = vmatpush1.msra.mxu0 %v639
    %2874 = vmatprep.subr.mxu0 %v644
    %2875 = vmatpush1.msra.mxu0 %v643
    %2876 = vmatprep.subr.mxu0 %v648
    %2877 = vmatpush1.msra.mxu0 %v647
    %2878 = vmatprep.subr.mxu0 %v652
    %2879 = vmatpush1.msra.mxu0 %v651
    %2880 = vmatprep.subr.mxu0 %v656
    %2881 = vmatpush1.msra.mxu0 %v655
    %2882 = vmatprep.subr.mxu0 %v660
    %2883 = vmatpush1.msra.mxu0 %v659
    %2884 = vmatprep.subr.mxu0 %v664
    %2885 = vmatpush1.msra.mxu0 %v663
    %2886 = vmatprep.mubr.f32.mxu0 %v2543
    %2887 = vmatmul.mubr.f32.gmra.mrb[0].mxu0 %v2750
    %v2888 = vpop.f32.mrb[0].mxu0
    %v2889 = vadd.f32 %v865, %v2888
    %v2890 = vpop.f32.mrb[0].mxu0
    %v2891 = vadd.f32 %v869, %v2890
    %2892 = vdwg.mxu0
    %v2893 = vxor.u32 %v2818, 2147483648
    %v2894 = vmul.f32 %v2893, 1.442695
    %v2895 = vpow.pop %v2894
    %v2896 = vadd.f32 %v2895, 1.0
    %v2897 = vrcp.pop %v2896
    %v2898 = vmul.f32 1.0, %v2897
    %v2899 = vxor.u32 %v2820, 2147483648
    %v2900 = vmul.f32 %v2899, 1.442695
    %v2901 = vpow.pop %v2900
    %v2902 = vadd.f32 %v2901, 1.0
    %v2903 = vrcp.pop %v2902
    %v2904 = vmul.f32 1.0, %v2903
    %v2905 = vtanh.pop %v2889
    %v2906 = vxor.u32 %v2891, 2147483648
    %v2907 = vmul.f32 %v2906, 1.442695
    %v2908 = vpow.pop %v2907
    %v2909 = vadd.f32 %v2908, 1.0
    %v2910 = vrcp.pop %v2909
    %v2911 = vmul.f32 1.0, %v2910
    %v2912 = vmul.f32 %v2904, %v2541
    %v2913 = vmul.f32 %v2898, %v2905
    %v2914 = vadd.f32 %v2912, %v2913
    %v2915 = vtanh.pop %v2914
    %v2916 = vmul.f32 %v2911, %v2915
    %v2917 = vmul.f32 %v2916, %v1044
    %2918 = vadd.xlane.f32.xlu0 %v2917
    %v2919 = vpop.xlane.xlu0 %2918
    %v2920 = vadd.f32 %v2919, %v1053
    %v2921 = vmax.f32 %v2548, %v2920
    %v2922 = vsub.f32 %v2548, %v2921
    %v2923 = vmul.f32 %v2922, 1.442695
    %v2924 = vpow.pop %v2923
    %v2925 = vsub.f32 %v2920, %v2921
    %v2926 = vmul.f32 %v2925, 1.442695
    %v2927 = vpow.pop %v2926
    %v2928 = vmul.f32 %v2924, %v2556
    %v2929 = vadd.f32 %v2928, %v2927
    %2931 = vset.pattern.permute.xlu0 0
    %2932 = vperm.xlu0 %2931, %v2924
    %v2933 = vpop.permute.xlu0 %2932
    %v2935 = vmul.f32 %v2933, %v2569
    %2937 = vset.pattern.permute.xlu0 0
    %2938 = vperm.xlu0 %2937, %v2927
    %v2939 = vpop.permute.xlu0 %2938
    %v2941 = vmul.f32 %v2939, %v2916
    %v2942 = vadd.f32 %v2935, %v2941
    %vm2943 = vcmp.eq.s32.totalorder %v678, 5
    %2945 = vset.pattern.permute.xlu0 0
    %2946 = vperm.xlu0 %2945, %v2920
    %v2947 = vpop.permute.xlu0 %2946
    %v2949 = vsel %vm2943, %v2947, %v2576
    %v2950 = vld [vmem:[#allocation2 + $0xc0] sm:$0xff]
    %v2951 = vld [vmem:[#allocation2 + $0xc8] sm:$0xff]
    %v2952 = vld [vmem:[#allocation2 + $0xd0] sm:$0xff]
    %v2953 = vld [vmem:[#allocation2 + $0xd8] sm:$0xff]
    %2954 = vmatprep.subr.mxu0 %v474
    %2955 = vmatpush1.msra.mxu0 %v473
    %2956 = vmatprep.subr.mxu0 %v478
    %2957 = vmatpush1.msra.mxu0 %v477
    %2958 = vmatprep.subr.mxu0 %v482
    %2959 = vmatpush1.msra.mxu0 %v481
    %2960 = vmatprep.subr.mxu0 %v486
    %2961 = vmatpush1.msra.mxu0 %v485
    %2962 = vmatprep.subr.mxu0 %v490
    %2963 = vmatpush1.msra.mxu0 %v489
    %2964 = vmatprep.subr.mxu0 %v494
    %2965 = vmatpush1.msra.mxu0 %v493
    %2966 = vmatprep.subr.mxu0 %v498
    %2967 = vmatpush1.msra.mxu0 %v497
    %2968 = vmatprep.subr.mxu0 %v502
    %2969 = vmatpush1.msra.mxu0 %v501
    %2970 = vmatprep.subr.mxu0 %v506
    %2971 = vmatpush1.msra.mxu0 %v505
    %2972 = vmatprep.subr.mxu0 %v510
    %2973 = vmatpush1.msra.mxu0 %v509
    %2974 = vmatprep.subr.mxu0 %v514
    %2975 = vmatpush1.msra.mxu0 %v513
    %2976 = vmatprep.subr.mxu0 %v518
    %2977 = vmatpush1.msra.mxu0 %v517
    %2978 = vmatprep.subr.mxu0 %v522
    %2979 = vmatpush1.msra.mxu0 %v521
    %2980 = vmatprep.subr.mxu0 %v526
    %2981 = vmatpush1.msra.mxu0 %v525
    %2982 = vmatprep.subr.mxu0 %v530
    %2983 = vmatpush1.msra.mxu0 %v529
    %2984 = vmatprep.subr.mxu0 %v534
    %2985 = vmatpush1.msra.mxu0 %v533
    %2986 = vmatprep.subr.mxu0 0.0
    %2987 = vmatpush1.msra.mxu0 0.0
    %2988 = vmatprep.subr.mxu0 0.0
    %2989 = vmatpush1.msra.mxu0 0.0
    %2990 = vmatprep.subr.mxu0 0.0
    %2991 = vmatpush1.msra.mxu0 0.0
    %2992 = vmatprep.subr.mxu0 0.0
    %2993 = vmatpush1.msra.mxu0 0.0
    %2994 = vmatprep.subr.mxu0 0.0
    %2995 = vmatpush1.msra.mxu0 0.0
    %2996 = vmatprep.subr.mxu0 0.0
    %2997 = vmatpush1.msra.mxu0 0.0
    %2998 = vmatprep.subr.mxu0 0.0
    %2999 = vmatpush1.msra.mxu0 0.0
    %3000 = vmatprep.subr.mxu0 0.0
    %3001 = vmatpush1.msra.mxu0 0.0
    %3002 = vmatprep.subr.mxu0 0.0
    %3003 = vmatpush1.msra.mxu0 0.0
    %3004 = vmatprep.subr.mxu0 0.0
    %3005 = vmatpush1.msra.mxu0 0.0
    %3006 = vmatprep.subr.mxu0 0.0
    %3007 = vmatpush1.msra.mxu0 0.0
    %3008 = vmatprep.subr.mxu0 0.0
    %3009 = vmatpush1.msra.mxu0 0.0
    %3010 = vmatprep.subr.mxu0 0.0
    %3011 = vmatpush1.msra.mxu0 0.0
    %3012 = vmatprep.subr.mxu0 0.0
    %3013 = vmatpush1.msra.mxu0 0.0
    %3014 = vmatprep.subr.mxu0 0.0
    %3015 = vmatpush1.msra.mxu0 0.0
    %3016 = vmatprep.subr.mxu0 0.0
    %3017 = vmatpush1.msra.mxu0 0.0
    %3018 = vmatprep.mubr.f32.mxu0 0.0
    %3019 = vmatmul.mubr.f32.gmra.mrb[0].mxu0 %v2750
    %v3020 = vpop.f32.mrb[0].mxu0
    %v3021 = vadd.f32 0.0, %v3020
    %v3022 = vpop.f32.mrb[0].mxu0
    %v3023 = vadd.f32 0.0, %v3022
    %3024 = vdwg.mxu0
    %3025 = vmatprep.subr.mxu0 %v476
    %3026 = vmatpush1.msra.mxu0 %v475
    %3027 = vmatprep.subr.mxu0 %v480
    %3028 = vmatpush1.msra.mxu0 %v479
    %3029 = vmatprep.subr.mxu0 %v484
    %3030 = vmatpush1.msra.mxu0 %v483
    %3031 = vmatprep.subr.mxu0 %v488
    %3032 = vmatpush1.msra.mxu0 %v487
    %3033 = vmatprep.subr.mxu0 %v492
    %3034 = vmatpush1.msra.mxu0 %v491
    %3035 = vmatprep.subr.mxu0 %v496
    %3036 = vmatpush1.msra.mxu0 %v495
    %3037 = vmatprep.subr.mxu0 %v500
    %3038 = vmatpush1.msra.mxu0 %v499
    %3039 = vmatprep.subr.mxu0 %v504
    %3040 = vmatpush1.msra.mxu0 %v503
    %3041 = vmatprep.subr.mxu0 %v508
    %3042 = vmatpush1.msra.mxu0 %v507
    %3043 = vmatprep.subr.mxu0 %v512
    %3044 = vmatpush1.msra.mxu0 %v511
    %3045 = vmatprep.subr.mxu0 %v516
    %3046 = vmatpush1.msra.mxu0 %v515
    %3047 = vmatprep.subr.mxu0 %v520
    %3048 = vmatpush1.msra.mxu0 %v519
    %3049 = vmatprep.subr.mxu0 %v524
    %3050 = vmatpush1.msra.mxu0 %v523
    %3051 = vmatprep.subr.mxu0 %v528
    %3052 = vmatpush1.msra.mxu0 %v527
    %3053 = vmatprep.subr.mxu0 %v532
    %3054 = vmatpush1.msra.mxu0 %v531
    %3055 = vmatprep.subr.mxu0 %v536
    %3056 = vmatpush1.msra.mxu0 %v535
    %3057 = vmatprep.subr.mxu0 0.0
    %3058 = vmatpush1.msra.mxu0 0.0
    %3059 = vmatprep.subr.mxu0 0.0
    %3060 = vmatpush1.msra.mxu0 0.0
    %3061 = vmatprep.subr.mxu0 0.0
    %3062 = vmatpush1.msra.mxu0 0.0
    %3063 = vmatprep.subr.mxu0 0.0
    %3064 = vmatpush1.msra.mxu0 0.0
    %3065 = vmatprep.subr.mxu0 0.0
    %3066 = vmatpush1.msra.mxu0 0.0
    %3067 = vmatprep.subr.mxu0 0.0
    %3068 = vmatpush1.msra.mxu0 0.0
    %3069 = vmatprep.subr.mxu0 0.0
    %3070 = vmatpush1.msra.mxu0 0.0
    %3071 = vmatprep.subr.mxu0 0.0
    %3072 = vmatpush1.msra.mxu0 0.0
    %3073 = vmatprep.subr.mxu0 0.0
    %3074 = vmatpush1.msra.mxu0 0.0
    %3075 = vmatprep.subr.mxu0 0.0
    %3076 = vmatpush1.msra.mxu0 0.0
    %3077 = vmatprep.subr.mxu0 0.0
    %3078 = vmatpush1.msra.mxu0 0.0
    %3079 = vmatprep.subr.mxu0 0.0
    %3080 = vmatpush1.msra.mxu0 0.0
    %3081 = vmatprep.subr.mxu0 0.0
    %3082 = vmatpush1.msra.mxu0 0.0
    %3083 = vmatprep.subr.mxu0 0.0
    %3084 = vmatpush1.msra.mxu0 0.0
    %3085 = vmatprep.subr.mxu0 0.0
    %3086 = vmatpush1.msra.mxu0 0.0
    %3087 = vmatprep.subr.mxu0 0.0
    %3088 = vmatpush1.msra.mxu0 0.0
    %3089 = vmatprep.mubr.f32.mxu0 0.0
    %3090 = vmatmul.mubr.f32.gmra.mrb[0].mxu0 %v2750
    %v3091 = vpop.f32.mrb[0].mxu0
    %v3092 = vadd.f32 0.0, %v3091
    %v3093 = vpop.f32.mrb[0].mxu0
    %v3094 = vadd.f32 0.0, %v3093
    %3095 = vdwg.mxu0
    %v3096 = vadd.f32 %v2950, %v3021
    %v3097 = vadd.f32 %v2951, %v3023
    %v3098 = vadd.f32 %v2952, %v3092
    %v3099 = vadd.f32 %v2953, %v3094
    %v3100 = vxor.u32 %v3096, 2147483648
    %v3101 = vmul.f32 %v3100, 1.442695
    %v3102 = vpow.pop %v3101
    %v3103 = vadd.f32 %v3102, 1.0
    %v3104 = vrcp.pop %v3103
    %v3105 = vmul.f32 1.0, %v3104
    %v3106 = vxor.u32 %v3097, 2147483648
    %v3107 = vmul.f32 %v3106, 1.442695
    %v3108 = vpow.pop %v3107
    %v3109 = vadd.f32 %v3108, 1.0
    %v3110 = vrcp.pop %v3109
    %v3111 = vmul.f32 1.0, %v3110
    %v3112 = vtanh.pop %v3098
    %v3113 = vxor.u32 %v3099, 2147483648
    %v3114 = vmul.f32 %v3113, 1.442695
    %v3115 = vpow.pop %v3114
    %v3116 = vadd.f32 %v3115, 1.0
    %v3117 = vrcp.pop %v3116
    %v3118 = vmul.f32 1.0, %v3117
    %v3119 = vmul.f32 %v3111, %v2748
    %v3120 = vmul.f32 %v3105, %v3112
    %v3121 = vadd.f32 %v3119, %v3120
    %v3122 = vtanh.pop %v3121
    %v3123 = vmul.f32 %v3118, %v3122
    %3124 = vmatprep.subr.mxu0 %v538
    %3125 = vmatpush1.msra.mxu0 %v537
    %3126 = vmatprep.subr.mxu0 %v542
    %3127 = vmatpush1.msra.mxu0 %v541
    %3128 = vmatprep.subr.mxu0 %v546
    %3129 = vmatpush1.msra.mxu0 %v545
    %3130 = vmatprep.subr.mxu0 %v550
    %3131 = vmatpush1.msra.mxu0 %v549
    %3132 = vmatprep.subr.mxu0 %v554
    %3133 = vmatpush1.msra.mxu0 %v553
    %3134 = vmatprep.subr.mxu0 %v558
    %3135 = vmatpush1.msra.mxu0 %v557
    %3136 = vmatprep.subr.mxu0 %v562
    %3137 = vmatpush1.msra.mxu0 %v561
    %3138 = vmatprep.subr.mxu0 %v566
    %3139 = vmatpush1.msra.mxu0 %v565
    %3140 = vmatprep.subr.mxu0 %v570
    %3141 = vmatpush1.msra.mxu0 %v569
    %3142 = vmatprep.subr.mxu0 %v574
    %3143 = vmatpush1.msra.mxu0 %v573
    %3144 = vmatprep.subr.mxu0 %v578
    %3145 = vmatpush1.msra.mxu0 %v577
    %3146 = vmatprep.subr.mxu0 %v582
    %3147 = vmatpush1.msra.mxu0 %v581
    %3148 = vmatprep.subr.mxu0 %v586
    %3149 = vmatpush1.msra.mxu0 %v585
    %3150 = vmatprep.subr.mxu0 %v590
    %3151 = vmatpush1.msra.mxu0 %v589
    %3152 = vmatprep.subr.mxu0 %v594
    %3153 = vmatpush1.msra.mxu0 %v593
    %3154 = vmatprep.subr.mxu0 %v598
    %3155 = vmatpush1.msra.mxu0 %v597
    %3156 = vmatprep.subr.mxu0 %v602
    %3157 = vmatpush1.msra.mxu0 %v601
    %3158 = vmatprep.subr.mxu0 %v606
    %3159 = vmatpush1.msra.mxu0 %v605
    %3160 = vmatprep.subr.mxu0 %v610
    %3161 = vmatpush1.msra.mxu0 %v609
    %3162 = vmatprep.subr.mxu0 %v614
    %3163 = vmatpush1.msra.mxu0 %v613
    %3164 = vmatprep.subr.mxu0 %v618
    %3165 = vmatpush1.msra.mxu0 %v617
    %3166 = vmatprep.subr.mxu0 %v622
    %3167 = vmatpush1.msra.mxu0 %v621
    %3168 = vmatprep.subr.mxu0 %v626
    %3169 = vmatpush1.msra.mxu0 %v625
    %3170 = vmatprep.subr.mxu0 %v630
    %3171 = vmatpush1.msra.mxu0 %v629
    %3172 = vmatprep.subr.mxu0 %v634
    %3173 = vmatpush1.msra.mxu0 %v633
    %3174 = vmatprep.subr.mxu0 %v638
    %3175 = vmatpush1.msra.mxu0 %v637
    %3176 = vmatprep.subr.mxu0 %v642
    %3177 = vmatpush1.msra.mxu0 %v641
    %3178 = vmatprep.subr.mxu0 %v646
    %3179 = vmatpush1.msra.mxu0 %v645
    %3180 = vmatprep.subr.mxu0 %v650
    %3181 = vmatpush1.msra.mxu0 %v649
    %3182 = vmatprep.subr.mxu0 %v654
    %3183 = vmatpush1.msra.mxu0 %v653
    %3184 = vmatprep.subr.mxu0 %v658
    %3185 = vmatpush1.msra.mxu0 %v657
    %3186 = vmatprep.subr.mxu0 %v662
    %3187 = vmatpush1.msra.mxu0 %v661
    %3188 = vmatprep.mubr.f32.mxu0 %v2916
    %3189 = vmatmul.mubr.f32.gmra.mrb[0].mxu0 %v3123
    %v3190 = vpop.f32.mrb[0].mxu0
    %v3191 = vadd.f32 %v857, %v3190
    %v3192 = vpop.f32.mrb[0].mxu0
    %v3193 = vadd.f32 %v861, %v3192
    %3194 = vdwg.mxu0
    %3195 = vmatprep.subr.mxu0 %v540
    %3196 = vmatpush1.msra.mxu0 %v539
    %3197 = vmatprep.subr.mxu0 %v544
    %3198 = vmatpush1.msra.mxu0 %v543
    %3199 = vmatprep.subr.mxu0 %v548
    %3200 = vmatpush1.msra.mxu0 %v547
    %3201 = vmatprep.subr.mxu0 %v552
    %3202 = vmatpush1.msra.mxu0 %v551
    %3203 = vmatprep.subr.mxu0 %v556
    %3204 = vmatpush1.msra.mxu0 %v555
    %3205 = vmatprep.subr.mxu0 %v560
    %3206 = vmatpush1.msra.mxu0 %v559
    %3207 = vmatprep.subr.mxu0 %v564
    %3208 = vmatpush1.msra.mxu0 %v563
    %3209 = vmatprep.subr.mxu0 %v568
    %3210 = vmatpush1.msra.mxu0 %v567
    %3211 = vmatprep.subr.mxu0 %v572
    %3212 = vmatpush1.msra.mxu0 %v571
    %3213 = vmatprep.subr.mxu0 %v576
    %3214 = vmatpush1.msra.mxu0 %v575
    %3215 = vmatprep.subr.mxu0 %v580
    %3216 = vmatpush1.msra.mxu0 %v579
    %3217 = vmatprep.subr.mxu0 %v584
    %3218 = vmatpush1.msra.mxu0 %v583
    %3219 = vmatprep.subr.mxu0 %v588
    %3220 = vmatpush1.msra.mxu0 %v587
    %3221 = vmatprep.subr.mxu0 %v592
    %3222 = vmatpush1.msra.mxu0 %v591
    %3223 = vmatprep.subr.mxu0 %v596
    %3224 = vmatpush1.msra.mxu0 %v595
    %3225 = vmatprep.subr.mxu0 %v600
    %3226 = vmatpush1.msra.mxu0 %v599
    %3227 = vmatprep.subr.mxu0 %v604
    %3228 = vmatpush1.msra.mxu0 %v603
    %3229 = vmatprep.subr.mxu0 %v608
    %3230 = vmatpush1.msra.mxu0 %v607
    %3231 = vmatprep.subr.mxu0 %v612
    %3232 = vmatpush1.msra.mxu0 %v611
    %3233 = vmatprep.subr.mxu0 %v616
    %3234 = vmatpush1.msra.mxu0 %v615
    %3235 = vmatprep.subr.mxu0 %v620
    %3236 = vmatpush1.msra.mxu0 %v619
    %3237 = vmatprep.subr.mxu0 %v624
    %3238 = vmatpush1.msra.mxu0 %v623
    %3239 = vmatprep.subr.mxu0 %v628
    %3240 = vmatpush1.msra.mxu0 %v627
    %3241 = vmatprep.subr.mxu0 %v632
    %3242 = vmatpush1.msra.mxu0 %v631
    %3243 = vmatprep.subr.mxu0 %v636
    %3244 = vmatpush1.msra.mxu0 %v635
    %3245 = vmatprep.subr.mxu0 %v640
    %3246 = vmatpush1.msra.mxu0 %v639
    %3247 = vmatprep.subr.mxu0 %v644
    %3248 = vmatpush1.msra.mxu0 %v643
    %3249 = vmatprep.subr.mxu0 %v648
    %3250 = vmatpush1.msra.mxu0 %v647
    %3251 = vmatprep.subr.mxu0 %v652
    %3252 = vmatpush1.msra.mxu0 %v651
    %3253 = vmatprep.subr.mxu0 %v656
    %3254 = vmatpush1.msra.mxu0 %v655
    %3255 = vmatprep.subr.mxu0 %v660
    %3256 = vmatpush1.msra.mxu0 %v659
    %3257 = vmatprep.subr.mxu0 %v664
    %3258 = vmatpush1.msra.mxu0 %v663
    %3259 = vmatprep.mubr.f32.mxu0 %v2916
    %3260 = vmatmul.mubr.f32.gmra.mrb[0].mxu0 %v3123
    %v3261 = vpop.f32.mrb[0].mxu0
    %v3262 = vadd.f32 %v865, %v3261
    %v3263 = vpop.f32.mrb[0].mxu0
    %v3264 = vadd.f32 %v869, %v3263
    %3265 = vdwg.mxu0
    %v3266 = vxor.u32 %v3191, 2147483648
    %v3267 = vmul.f32 %v3266, 1.442695
    %v3268 = vpow.pop %v3267
    %v3269 = vadd.f32 %v3268, 1.0
    %v3270 = vrcp.pop %v3269
    %v3271 = vmul.f32 1.0, %v3270
    %v3272 = vxor.u32 %v3193, 2147483648
    %v3273 = vmul.f32 %v3272, 1.442695
    %v3274 = vpow.pop %v3273
    %v3275 = vadd.f32 %v3274, 1.0
    %v3276 = vrcp.pop %v3275
    %v3277 = vmul.f32 1.0, %v3276
    %v3278 = vtanh.pop %v3262
    %v3279 = vxor.u32 %v3264, 2147483648
    %v3280 = vmul.f32 %v3279, 1.442695
    %v3281 = vpow.pop %v3280
    %v3282 = vadd.f32 %v3281, 1.0
    %v3283 = vrcp.pop %v3282
    %v3284 = vmul.f32 1.0, %v3283
    %v3285 = vmul.f32 %v3277, %v2914
    %v3286 = vmul.f32 %v3271, %v3278
    %v3287 = vadd.f32 %v3285, %v3286
    %v3288 = vtanh.pop %v3287
    %v3289 = vmul.f32 %v3284, %v3288
    %v3290 = vmul.f32 %v3289, %v1044
    %3291 = vadd.xlane.f32.xlu0 %v3290
    %v3292 = vpop.xlane.xlu0 %3291
    %v3293 = vadd.f32 %v3292, %v1053
    %v3294 = vmax.f32 %v2921, %v3293
    %v3295 = vsub.f32 %v2921, %v3294
    %v3296 = vmul.f32 %v3295, 1.442695
    %v3297 = vpow.pop %v3296
    %v3298 = vsub.f32 %v3293, %v3294
    %v3299 = vmul.f32 %v3298, 1.442695
    %v3300 = vpow.pop %v3299
    %v3301 = vmul.f32 %v3297, %v2929
    %v3302 = vadd.f32 %v3301, %v3300
    %3304 = vset.pattern.permute.xlu0 0
    %3305 = vperm.xlu0 %3304, %v3297
    %v3306 = vpop.permute.xlu0 %3305
    %v3308 = vmul.f32 %v3306, %v2942
    %3310 = vset.pattern.permute.xlu0 0
    %3311 = vperm.xlu0 %3310, %v3300
    %v3312 = vpop.permute.xlu0 %3311
    %v3314 = vmul.f32 %v3312, %v3289
    %v3315 = vadd.f32 %v3308, %v3314
    %vm3316 = vcmp.eq.s32.totalorder %v678, 6
    %3318 = vset.pattern.permute.xlu0 0
    %3319 = vperm.xlu0 %3318, %v3293
    %v3320 = vpop.permute.xlu0 %3319
    %v3322 = vsel %vm3316, %v3320, %v2949
    %v3323 = vld [vmem:[#allocation2 + $0xe0] sm:$0xff]
    %v3324 = vld [vmem:[#allocation2 + $0xe8] sm:$0xff]
    %v3325 = vld [vmem:[#allocation2 + $0xf0] sm:$0xff]
    %v3326 = vld [vmem:[#allocation2 + $0xf8] sm:$0xff]
    %3327 = vmatprep.subr.mxu0 %v474
    %3328 = vmatpush1.msra.mxu0 %v473
    %3329 = vmatprep.subr.mxu0 %v478
    %3330 = vmatpush1.msra.mxu0 %v477
    %3331 = vmatprep.subr.mxu0 %v482
    %3332 = vmatpush1.msra.mxu0 %v481
    %3333 = vmatprep.subr.mxu0 %v486
    %3334 = vmatpush1.msra.mxu0 %v485
    %3335 = vmatprep.subr.mxu0 %v490
    %3336 = vmatpush1.msra.mxu0 %v489
    %3337 = vmatprep.subr.mxu0 %v494
    %3338 = vmatpush1.msra.mxu0 %v493
    %3339 = vmatprep.subr.mxu0 %v498
    %3340 = vmatpush1.msra.mxu0 %v497
    %3341 = vmatprep.subr.mxu0 %v502
    %3342 = vmatpush1.msra.mxu0 %v501
    %3343 = vmatprep.subr.mxu0 %v506
    %3344 = vmatpush1.msra.mxu0 %v505
    %3345 = vmatprep.subr.mxu0 %v510
    %3346 = vmatpush1.msra.mxu0 %v509
    %3347 = vmatprep.subr.mxu0 %v514
    %3348 = vmatpush1.msra.mxu0 %v513
    %3349 = vmatprep.subr.mxu0 %v518
    %3350 = vmatpush1.msra.mxu0 %v517
    %3351 = vmatprep.subr.mxu0 %v522
    %3352 = vmatpush1.msra.mxu0 %v521
    %3353 = vmatprep.subr.mxu0 %v526
    %3354 = vmatpush1.msra.mxu0 %v525
    %3355 = vmatprep.subr.mxu0 %v530
    %3356 = vmatpush1.msra.mxu0 %v529
    %3357 = vmatprep.subr.mxu0 %v534
    %3358 = vmatpush1.msra.mxu0 %v533
    %3359 = vmatprep.subr.mxu0 0.0
    %3360 = vmatpush1.msra.mxu0 0.0
    %3361 = vmatprep.subr.mxu0 0.0
    %3362 = vmatpush1.msra.mxu0 0.0
    %3363 = vmatprep.subr.mxu0 0.0
    %3364 = vmatpush1.msra.mxu0 0.0
    %3365 = vmatprep.subr.mxu0 0.0
    %3366 = vmatpush1.msra.mxu0 0.0
    %3367 = vmatprep.subr.mxu0 0.0
    %3368 = vmatpush1.msra.mxu0 0.0
    %3369 = vmatprep.subr.mxu0 0.0
    %3370 = vmatpush1.msra.mxu0 0.0
    %3371 = vmatprep.subr.mxu0 0.0
    %3372 = vmatpush1.msra.mxu0 0.0
    %3373 = vmatprep.subr.mxu0 0.0
    %3374 = vmatpush1.msra.mxu0 0.0
    %3375 = vmatprep.subr.mxu0 0.0
    %3376 = vmatpush1.msra.mxu0 0.0
    %3377 = vmatprep.subr.mxu0 0.0
    %3378 = vmatpush1.msra.mxu0 0.0
    %3379 = vmatprep.subr.mxu0 0.0
    %3380 = vmatpush1.msra.mxu0 0.0
    %3381 = vmatprep.subr.mxu0 0.0
    %3382 = vmatpush1.msra.mxu0 0.0
    %3383 = vmatprep.subr.mxu0 0.0
    %3384 = vmatpush1.msra.mxu0 0.0
    %3385 = vmatprep.subr.mxu0 0.0
    %3386 = vmatpush1.msra.mxu0 0.0
    %3387 = vmatprep.subr.mxu0 0.0
    %3388 = vmatpush1.msra.mxu0 0.0
    %3389 = vmatprep.subr.mxu0 0.0
    %3390 = vmatpush1.msra.mxu0 0.0
    %3391 = vmatprep.mubr.f32.mxu0 0.0
    %3392 = vmatmul.mubr.f32.gmra.mrb[0].mxu0 %v3123
    %v3393 = vpop.f32.mrb[0].mxu0
    %v3394 = vadd.f32 0.0, %v3393
    %v3395 = vpop.f32.mrb[0].mxu0
    %v3396 = vadd.f32 0.0, %v3395
    %3397 = vdwg.mxu0
    %3398 = vmatprep.subr.mxu0 %v476
    %3399 = vmatpush1.msra.mxu0 %v475
    %3400 = vmatprep.subr.mxu0 %v480
    %3401 = vmatpush1.msra.mxu0 %v479
    %3402 = vmatprep.subr.mxu0 %v484
    %3403 = vmatpush1.msra.mxu0 %v483
    %3404 = vmatprep.subr.mxu0 %v488
    %3405 = vmatpush1.msra.mxu0 %v487
    %3406 = vmatprep.subr.mxu0 %v492
    %3407 = vmatpush1.msra.mxu0 %v491
    %3408 = vmatprep.subr.mxu0 %v496
    %3409 = vmatpush1.msra.mxu0 %v495
    %3410 = vmatprep.subr.mxu0 %v500
    %3411 = vmatpush1.msra.mxu0 %v499
    %3412 = vmatprep.subr.mxu0 %v504
    %3413 = vmatpush1.msra.mxu0 %v503
    %3414 = vmatprep.subr.mxu0 %v508
    %3415 = vmatpush1.msra.mxu0 %v507
    %3416 = vmatprep.subr.mxu0 %v512
    %3417 = vmatpush1.msra.mxu0 %v511
    %3418 = vmatprep.subr.mxu0 %v516
    %3419 = vmatpush1.msra.mxu0 %v515
    %3420 = vmatprep.subr.mxu0 %v520
    %3421 = vmatpush1.msra.mxu0 %v519
    %3422 = vmatprep.subr.mxu0 %v524
    %3423 = vmatpush1.msra.mxu0 %v523
    %3424 = vmatprep.subr.mxu0 %v528
    %3425 = vmatpush1.msra.mxu0 %v527
    %3426 = vmatprep.subr.mxu0 %v532
    %3427 = vmatpush1.msra.mxu0 %v531
    %3428 = vmatprep.subr.mxu0 %v536
    %3429 = vmatpush1.msra.mxu0 %v535
    %3430 = vmatprep.subr.mxu0 0.0
    %3431 = vmatpush1.msra.mxu0 0.0
    %3432 = vmatprep.subr.mxu0 0.0
    %3433 = vmatpush1.msra.mxu0 0.0
    %3434 = vmatprep.subr.mxu0 0.0
    %3435 = vmatpush1.msra.mxu0 0.0
    %3436 = vmatprep.subr.mxu0 0.0
    %3437 = vmatpush1.msra.mxu0 0.0
    %3438 = vmatprep.subr.mxu0 0.0
    %3439 = vmatpush1.msra.mxu0 0.0
    %3440 = vmatprep.subr.mxu0 0.0
    %3441 = vmatpush1.msra.mxu0 0.0
    %3442 = vmatprep.subr.mxu0 0.0
    %3443 = vmatpush1.msra.mxu0 0.0
    %3444 = vmatprep.subr.mxu0 0.0
    %3445 = vmatpush1.msra.mxu0 0.0
    %3446 = vmatprep.subr.mxu0 0.0
    %3447 = vmatpush1.msra.mxu0 0.0
    %3448 = vmatprep.subr.mxu0 0.0
    %3449 = vmatpush1.msra.mxu0 0.0
    %3450 = vmatprep.subr.mxu0 0.0
    %3451 = vmatpush1.msra.mxu0 0.0
    %3452 = vmatprep.subr.mxu0 0.0
    %3453 = vmatpush1.msra.mxu0 0.0
    %3454 = vmatprep.subr.mxu0 0.0
    %3455 = vmatpush1.msra.mxu0 0.0
    %3456 = vmatprep.subr.mxu0 0.0
    %3457 = vmatpush1.msra.mxu0 0.0
    %3458 = vmatprep.subr.mxu0 0.0
    %3459 = vmatpush1.msra.mxu0 0.0
    %3460 = vmatprep.subr.mxu0 0.0
    %3461 = vmatpush1.msra.mxu0 0.0
    %3462 = vmatprep.mubr.f32.mxu0 0.0
    %3463 = vmatmul.mubr.f32.gmra.mrb[0].mxu0 %v3123
    %v3464 = vpop.f32.mrb[0].mxu0
    %v3465 = vadd.f32 0.0, %v3464
    %v3466 = vpop.f32.mrb[0].mxu0
    %v3467 = vadd.f32 0.0, %v3466
    %3468 = vdwg.mxu0
    %v3469 = vadd.f32 %v3323, %v3394
    %v3470 = vadd.f32 %v3324, %v3396
    %v3471 = vadd.f32 %v3325, %v3465
    %v3472 = vadd.f32 %v3326, %v3467
    %v3473 = vxor.u32 %v3469, 2147483648
    %v3474 = vmul.f32 %v3473, 1.442695
    %v3475 = vpow.pop %v3474
    %v3476 = vadd.f32 %v3475, 1.0
    %v3477 = vrcp.pop %v3476
    %v3478 = vmul.f32 1.0, %v3477
    %v3479 = vxor.u32 %v3470, 2147483648
    %v3480 = vmul.f32 %v3479, 1.442695
    %v3481 = vpow.pop %v3480
    %v3482 = vadd.f32 %v3481, 1.0
    %v3483 = vrcp.pop %v3482
    %v3484 = vmul.f32 1.0, %v3483
    %v3485 = vtanh.pop %v3471
    %v3486 = vxor.u32 %v3472, 2147483648
    %v3487 = vmul.f32 %v3486, 1.442695
    %v3488 = vpow.pop %v3487
    %v3489 = vadd.f32 %v3488, 1.0
    %v3490 = vrcp.pop %v3489
    %v3491 = vmul.f32 1.0, %v3490
    %v3492 = vmul.f32 %v3484, %v3121
    %v3493 = vmul.f32 %v3478, %v3485
    %v3494 = vadd.f32 %v3492, %v3493
    %v3495 = vtanh.pop %v3494
    %v3496 = vmul.f32 %v3491, %v3495
    %3497 = vmatprep.subr.mxu0 %v538
    %3498 = vmatpush1.msra.mxu0 %v537
    %3499 = vmatprep.subr.mxu0 %v542
    %3500 = vmatpush1.msra.mxu0 %v541
    %3501 = vmatprep.subr.mxu0 %v546
    %3502 = vmatpush1.msra.mxu0 %v545
    %3503 = vmatprep.subr.mxu0 %v550
    %3504 = vmatpush1.msra.mxu0 %v549
    %3505 = vmatprep.subr.mxu0 %v554
    %3506 = vmatpush1.msra.mxu0 %v553
    %3507 = vmatprep.subr.mxu0 %v558
    %3508 = vmatpush1.msra.mxu0 %v557
    %3509 = vmatprep.subr.mxu0 %v562
    %3510 = vmatpush1.msra.mxu0 %v561
    %3511 = vmatprep.subr.mxu0 %v566
    %3512 = vmatpush1.msra.mxu0 %v565
    %3513 = vmatprep.subr.mxu0 %v570
    %3514 = vmatpush1.msra.mxu0 %v569
    %3515 = vmatprep.subr.mxu0 %v574
    %3516 = vmatpush1.msra.mxu0 %v573
    %3517 = vmatprep.subr.mxu0 %v578
    %3518 = vmatpush1.msra.mxu0 %v577
    %3519 = vmatprep.subr.mxu0 %v582
    %3520 = vmatpush1.msra.mxu0 %v581
    %3521 = vmatprep.subr.mxu0 %v586
    %3522 = vmatpush1.msra.mxu0 %v585
    %3523 = vmatprep.subr.mxu0 %v590
    %3524 = vmatpush1.msra.mxu0 %v589
    %3525 = vmatprep.subr.mxu0 %v594
    %3526 = vmatpush1.msra.mxu0 %v593
    %3527 = vmatprep.subr.mxu0 %v598
    %3528 = vmatpush1.msra.mxu0 %v597
    %3529 = vmatprep.subr.mxu0 %v602
    %3530 = vmatpush1.msra.mxu0 %v601
    %3531 = vmatprep.subr.mxu0 %v606
    %3532 = vmatpush1.msra.mxu0 %v605
    %3533 = vmatprep.subr.mxu0 %v610
    %3534 = vmatpush1.msra.mxu0 %v609
    %3535 = vmatprep.subr.mxu0 %v614
    %3536 = vmatpush1.msra.mxu0 %v613
    %3537 = vmatprep.subr.mxu0 %v618
    %3538 = vmatpush1.msra.mxu0 %v617
    %3539 = vmatprep.subr.mxu0 %v622
    %3540 = vmatpush1.msra.mxu0 %v621
    %3541 = vmatprep.subr.mxu0 %v626
    %3542 = vmatpush1.msra.mxu0 %v625
    %3543 = vmatprep.subr.mxu0 %v630
    %3544 = vmatpush1.msra.mxu0 %v629
    %3545 = vmatprep.subr.mxu0 %v634
    %3546 = vmatpush1.msra.mxu0 %v633
    %3547 = vmatprep.subr.mxu0 %v638
    %3548 = vmatpush1.msra.mxu0 %v637
    %3549 = vmatprep.subr.mxu0 %v642
    %3550 = vmatpush1.msra.mxu0 %v641
    %3551 = vmatprep.subr.mxu0 %v646
    %3552 = vmatpush1.msra.mxu0 %v645
    %3553 = vmatprep.subr.mxu0 %v650
    %3554 = vmatpush1.msra.mxu0 %v649
    %3555 = vmatprep.subr.mxu0 %v654
    %3556 = vmatpush1.msra.mxu0 %v653
    %3557 = vmatprep.subr.mxu0 %v658
    %3558 = vmatpush1.msra.mxu0 %v657
    %3559 = vmatprep.subr.mxu0 %v662
    %3560 = vmatpush1.msra.mxu0 %v661
    %3561 = vmatprep.mubr.f32.mxu0 %v3289
    %3562 = vmatmul.mubr.f32.gmra.mrb[0].mxu0 %v3496
    %v3563 = vpop.f32.mrb[0].mxu0
    %v3564 = vadd.f32 %v857, %v3563
    %v3565 = vpop.f32.mrb[0].mxu0
    %v3566 = vadd.f32 %v861, %v3565
    %3567 = vdwg.mxu0
    %3568 = vmatprep.subr.mxu0 %v540
    %3569 = vmatpush1.msra.mxu0 %v539
    %3570 = vmatprep.subr.mxu0 %v544
    %3571 = vmatpush1.msra.mxu0 %v543
    %3572 = vmatprep.subr.mxu0 %v548
    %3573 = vmatpush1.msra.mxu0 %v547
    %3574 = vmatprep.subr.mxu0 %v552
    %3575 = vmatpush1.msra.mxu0 %v551
    %3576 = vmatprep.subr.mxu0 %v556
    %3577 = vmatpush1.msra.mxu0 %v555
    %3578 = vmatprep.subr.mxu0 %v560
    %3579 = vmatpush1.msra.mxu0 %v559
    %3580 = vmatprep.subr.mxu0 %v564
    %3581 = vmatpush1.msra.mxu0 %v563
    %3582 = vmatprep.subr.mxu0 %v568
    %3583 = vmatpush1.msra.mxu0 %v567
    %3584 = vmatprep.subr.mxu0 %v572
    %3585 = vmatpush1.msra.mxu0 %v571
    %3586 = vmatprep.subr.mxu0 %v576
    %3587 = vmatpush1.msra.mxu0 %v575
    %3588 = vmatprep.subr.mxu0 %v580
    %3589 = vmatpush1.msra.mxu0 %v579
    %3590 = vmatprep.subr.mxu0 %v584
    %3591 = vmatpush1.msra.mxu0 %v583
    %3592 = vmatprep.subr.mxu0 %v588
    %3593 = vmatpush1.msra.mxu0 %v587
    %3594 = vmatprep.subr.mxu0 %v592
    %3595 = vmatpush1.msra.mxu0 %v591
    %3596 = vmatprep.subr.mxu0 %v596
    %3597 = vmatpush1.msra.mxu0 %v595
    %3598 = vmatprep.subr.mxu0 %v600
    %3599 = vmatpush1.msra.mxu0 %v599
    %3600 = vmatprep.subr.mxu0 %v604
    %3601 = vmatpush1.msra.mxu0 %v603
    %3602 = vmatprep.subr.mxu0 %v608
    %3603 = vmatpush1.msra.mxu0 %v607
    %3604 = vmatprep.subr.mxu0 %v612
    %3605 = vmatpush1.msra.mxu0 %v611
    %3606 = vmatprep.subr.mxu0 %v616
    %3607 = vmatpush1.msra.mxu0 %v615
    %3608 = vmatprep.subr.mxu0 %v620
    %3609 = vmatpush1.msra.mxu0 %v619
    %3610 = vmatprep.subr.mxu0 %v624
    %3611 = vmatpush1.msra.mxu0 %v623
    %3612 = vmatprep.subr.mxu0 %v628
    %3613 = vmatpush1.msra.mxu0 %v627
    %3614 = vmatprep.subr.mxu0 %v632
    %3615 = vmatpush1.msra.mxu0 %v631
    %3616 = vmatprep.subr.mxu0 %v636
    %3617 = vmatpush1.msra.mxu0 %v635
    %3618 = vmatprep.subr.mxu0 %v640
    %3619 = vmatpush1.msra.mxu0 %v639
    %3620 = vmatprep.subr.mxu0 %v644
    %3621 = vmatpush1.msra.mxu0 %v643
    %3622 = vmatprep.subr.mxu0 %v648
    %3623 = vmatpush1.msra.mxu0 %v647
    %3624 = vmatprep.subr.mxu0 %v652
    %3625 = vmatpush1.msra.mxu0 %v651
    %3626 = vmatprep.subr.mxu0 %v656
    %3627 = vmatpush1.msra.mxu0 %v655
    %3628 = vmatprep.subr.mxu0 %v660
    %3629 = vmatpush1.msra.mxu0 %v659
    %3630 = vmatprep.subr.mxu0 %v664
    %3631 = vmatpush1.msra.mxu0 %v663
    %3632 = vmatprep.mubr.f32.mxu0 %v3289
    %3633 = vmatmul.mubr.f32.gmra.mrb[0].mxu0 %v3496
    %v3634 = vpop.f32.mrb[0].mxu0
    %v3635 = vadd.f32 %v865, %v3634
    %v3636 = vpop.f32.mrb[0].mxu0
    %v3637 = vadd.f32 %v869, %v3636
    %3638 = vdwg.mxu0
    %v3639 = vxor.u32 %v3564, 2147483648
    %v3640 = vmul.f32 %v3639, 1.442695
    %v3641 = vpow.pop %v3640
    %v3642 = vadd.f32 %v3641, 1.0
    %v3643 = vrcp.pop %v3642
    %v3644 = vmul.f32 1.0, %v3643
    %v3645 = vxor.u32 %v3566, 2147483648
    %v3646 = vmul.f32 %v3645, 1.442695
    %v3647 = vpow.pop %v3646
    %v3648 = vadd.f32 %v3647, 1.0
    %v3649 = vrcp.pop %v3648
    %v3650 = vmul.f32 1.0, %v3649
    %v3651 = vtanh.pop %v3635
    %v3652 = vxor.u32 %v3637, 2147483648
    %v3653 = vmul.f32 %v3652, 1.442695
    %v3654 = vpow.pop %v3653
    %v3655 = vadd.f32 %v3654, 1.0
    %v3656 = vrcp.pop %v3655
    %v3657 = vmul.f32 1.0, %v3656
    %v3658 = vmul.f32 %v3650, %v3287
    %v3659 = vmul.f32 %v3644, %v3651
    %v3660 = vadd.f32 %v3658, %v3659
    %v3661 = vtanh.pop %v3660
    %v3662 = vmul.f32 %v3657, %v3661
    %v3663 = vmul.f32 %v3662, %v1044
    %3664 = vadd.xlane.f32.xlu0 %v3663
    %v3665 = vpop.xlane.xlu0 %3664
    %v3666 = vadd.f32 %v3665, %v1053
    %v3667 = vmax.f32 %v3294, %v3666
    %v3668 = vsub.f32 %v3294, %v3667
    %v3669 = vmul.f32 %v3668, 1.442695
    %v3670 = vpow.pop %v3669
    %v3671 = vsub.f32 %v3666, %v3667
    %v3672 = vmul.f32 %v3671, 1.442695
    %v3673 = vpow.pop %v3672
    %v3674 = vmul.f32 %v3670, %v3302
    %v3675 = vadd.f32 %v3674, %v3673
    %3677 = vset.pattern.permute.xlu0 0
    %3678 = vperm.xlu0 %3677, %v3670
    %v3679 = vpop.permute.xlu0 %3678
    %v3681 = vmul.f32 %v3679, %v3315
    %3683 = vset.pattern.permute.xlu0 0
    %3684 = vperm.xlu0 %3683, %v3673
    %v3685 = vpop.permute.xlu0 %3684
    %v3687 = vmul.f32 %v3685, %v3662
    %v3688 = vadd.f32 %v3681, %v3687
    %vm3689 = vcmp.eq.s32.totalorder %v678, 7
    %3691 = vset.pattern.permute.xlu0 0
    %3692 = vperm.xlu0 %3691, %v3666
    %v3693 = vpop.permute.xlu0 %3692
    %v3695 = vsel %vm3689, %v3693, %v3322
    %3696 = vst [vmem:[#allocation3] sm:$0xff] %v3496
    %3697 = vst [vmem:[#allocation4] sm:$0xff] %v3494
    %3698 = vst [vmem:[%s670] sm:$0xff] %v3662
    %3699 = vst [vmem:[%s672] sm:$0xff] %v3660
    %vm3700 = vcmask 7168
    %3701 = vst.msk [vmem:[#allocation5] sm:$0xff] %vm3700, %v3667
    %3702 = vst.msk [vmem:[#allocation6] sm:$0xff] %vm3700, %v3675
    %3703 = vst [vmem:[#allocation7] sm:$0xff] %v3688
    %s3704 = smul.u32 0, 8
    %s3705 = scalar_lea.vmem [#allocation8], %s3704
    %vm3706 = vcmask 64512
    %3707 = vst.msk [vmem:[%s3705] sm:$0xff] %vm3706, %v3695
    // Predicated region
    $region66: #{tpu_custom_call.1} parent=1 // pred_check
      %p3708 = pneg %p109
    $region67: #{tpu_custom_call.1} parent=1 // pred_check_branch
      %3710 = sbr.rel (%p3708) target = $region69
    $region68: #{tpu_custom_call.1} parent=1 // pred_region
      %v3711 = vrcp.pop %v3675
      %v3712 = vmul.f32 1.0, %v3711
      %3714 = vset.pattern.permute.xlu0 0
      %3715 = vperm.xlu0 %3714, %v3712
      %v3716 = vpop.permute.xlu0 %3715
      %v3718 = vmul.f32 %v3688, %v3716
      %v3719 = vld [vmem:[#allocation18] sm:$0xff]
      %v3720 = vld [vmem:[#allocation18 + $0x8] sm:$0xff]
      %v3721 = vld [vmem:[#allocation18 + $0x10] sm:$0xff]
      %v3722 = vld [vmem:[#allocation18 + $0x18] sm:$0xff]
      %v3723 = vld [vmem:[#allocation18 + $0x20] sm:$0xff]
      %v3724 = vld [vmem:[#allocation18 + $0x28] sm:$0xff]
      %v3725 = vld [vmem:[#allocation18 + $0x30] sm:$0xff]
      %v3726 = vld [vmem:[#allocation18 + $0x38] sm:$0xff]
      %v3727 = vld [vmem:[#allocation18 + $0x40] sm:$0xff]
      %v3728 = vld [vmem:[#allocation18 + $0x48] sm:$0xff]
      %v3729 = vld [vmem:[#allocation18 + $0x50] sm:$0xff]
      %v3730 = vld [vmem:[#allocation18 + $0x58] sm:$0xff]
      %v3731 = vld [vmem:[#allocation18 + $0x60] sm:$0xff]
      %v3732 = vld [vmem:[#allocation18 + $0x68] sm:$0xff]
      %v3733 = vld [vmem:[#allocation18 + $0x70] sm:$0xff]
      %v3734 = vld [vmem:[#allocation18 + $0x78] sm:$0xff]
      %v3735 = vld [vmem:[%s9] sm:$0x1]
      %v3737 = vlaneseq
      %v3738 = vshrl.u32 %v3737, 7
      %v3739 = vsub.s32 0, %v3738
      %v3740 = vrot.slane %v3735, %v3739
      %3742 = vmatprep.subr.mxu0 0.0
      %3743 = vmatpush1.msra.mxu0 %v3719
      %3744 = vmatprep.subr.mxu0 0.0
      %3745 = vmatpush1.msra.mxu0 %v3720
      %3746 = vmatprep.subr.mxu0 0.0
      %3747 = vmatpush1.msra.mxu0 %v3721
      %3748 = vmatprep.subr.mxu0 0.0
      %3749 = vmatpush1.msra.mxu0 %v3722
      %3750 = vmatprep.subr.mxu0 0.0
      %3751 = vmatpush1.msra.mxu0 %v3723
      %3752 = vmatprep.subr.mxu0 0.0
      %3753 = vmatpush1.msra.mxu0 %v3724
      %3754 = vmatprep.subr.mxu0 0.0
      %3755 = vmatpush1.msra.mxu0 %v3725
      %3756 = vmatprep.subr.mxu0 0.0
      %3757 = vmatpush1.msra.mxu0 %v3726
      %3758 = vmatprep.subr.mxu0 0.0
      %3759 = vmatpush1.msra.mxu0 %v3727
      %3760 = vmatprep.subr.mxu0 0.0
      %3761 = vmatpush1.msra.mxu0 %v3728
      %3762 = vmatprep.subr.mxu0 0.0
      %3763 = vmatpush1.msra.mxu0 %v3729
      %3764 = vmatprep.subr.mxu0 0.0
      %3765 = vmatpush1.msra.mxu0 %v3730
      %3766 = vmatprep.subr.mxu0 0.0
      %3767 = vmatpush1.msra.mxu0 %v3731
      %3768 = vmatprep.subr.mxu0 0.0
      %3769 = vmatpush1.msra.mxu0 %v3732
      %3770 = vmatprep.subr.mxu0 0.0
      %3771 = vmatpush1.msra.mxu0 %v3733
      %3772 = vmatprep.subr.mxu0 0.0
      %3773 = vmatpush1.msra.mxu0 %v3734
      %3774 = vmatprep.subr.mxu0 0.0
      %3775 = vmatpush1.msra.mxu0 0.0
      %3776 = vmatprep.subr.mxu0 0.0
      %3777 = vmatpush1.msra.mxu0 0.0
      %3778 = vmatprep.subr.mxu0 0.0
      %3779 = vmatpush1.msra.mxu0 0.0
      %3780 = vmatprep.subr.mxu0 0.0
      %3781 = vmatpush1.msra.mxu0 0.0
      %3782 = vmatprep.subr.mxu0 0.0
      %3783 = vmatpush1.msra.mxu0 0.0
      %3784 = vmatprep.subr.mxu0 0.0
      %3785 = vmatpush1.msra.mxu0 0.0
      %3786 = vmatprep.subr.mxu0 0.0
      %3787 = vmatpush1.msra.mxu0 0.0
      %3788 = vmatprep.subr.mxu0 0.0
      %3789 = vmatpush1.msra.mxu0 0.0
      %3790 = vmatprep.subr.mxu0 0.0
      %3791 = vmatpush1.msra.mxu0 0.0
      %3792 = vmatprep.subr.mxu0 0.0
      %3793 = vmatpush1.msra.mxu0 0.0
      %3794 = vmatprep.subr.mxu0 0.0
      %3795 = vmatpush1.msra.mxu0 0.0
      %3796 = vmatprep.subr.mxu0 0.0
      %3797 = vmatpush1.msra.mxu0 0.0
      %3798 = vmatprep.subr.mxu0 0.0
      %3799 = vmatpush1.msra.mxu0 0.0
      %3800 = vmatprep.subr.mxu0 0.0
      %3801 = vmatpush1.msra.mxu0 0.0
      %3802 = vmatprep.subr.mxu0 0.0
      %3803 = vmatpush1.msra.mxu0 0.0
      %3804 = vmatprep.subr.mxu0 0.0
      %3805 = vmatpush1.msra.mxu0 0.0
      %3806 = vmatprep.mubr.f32.mxu0 0.0
      %3807 = vmatmul.mubr.f32.gmra.mrb[0].mxu0 %v3718
      %v3808 = vpop.f32.mrb[0].mxu0
      %v3809 = vadd.f32 %v3740, %v3808
      %v3810 = vpop.f32.mrb[0].mxu0
      %3811 = vdwg.mxu0
      %3812 = vst [vmem:[#allocation19] sm:$0xff] %v3809
      %v3813 = vld [vmem:[#allocation8] sm:$0xff]
      %3815 = vset.pattern.permute.xlu0 0
      %3816 = vperm.xlu0 %3815, %v3667
      %v3817 = vpop.permute.xlu0 %3816
      %v3819 = vsub.f32 %v3813, %v3817
      %v3820 = vmul.f32 %v3819, 1.442695
      %v3821 = vpow.pop %v3820
      %v3822 = vmul.f32 %v3821, %v3716
      %3823 = vst.msk [vmem:[#allocation20] sm:$0xff] %vm3706, %v3822
    $region69: #{tpu_custom_call.1} parent=1 // pred_fallthru
      _
    // Predicated region
    $region70: #{tpu_custom_call.1} parent=1 // pred_check
      _
    $region71: #{tpu_custom_call.1} parent=1 // pred_check_branch
      %3825 = sbr.rel (0) target = $region73
    $region72: #{tpu_custom_call.1} parent=1 // pred_region
      %s3827 = ssub.s32 128, 128
      %3828 = vsyncadd [#allocation12], %s3827
      %s3830 = sshll.u32 [#allocation19], 4
      %s3831 = int_to_ptr.vmem [resolvable:$true] %s3830
      %3833 = dma.vmem_to_hbm [thread:$0]  %s3831, 128, %s10, [#allocation12]
    $region73: #{tpu_custom_call.1} parent=1 // pred_fallthru
      _
    // Predicated region
    $region74: #{tpu_custom_call.1} parent=1 // pred_check
      _
    $region75: #{tpu_custom_call.1} parent=1 // pred_check_branch
      %3835 = sbr.rel (0) target = $region77
    $region76: #{tpu_custom_call.1} parent=1 // pred_region
      %s3837 = ssub.s32 128, 128
      %3838 = vsyncadd [#allocation21], %s3837
      %s3840 = sshll.u32 [#allocation20], 4
      %s3841 = int_to_ptr.vmem [resolvable:$true] %s3840
      %3843 = dma.vmem_to_hbm [thread:$0]  %s3841, 128, %s11, [#allocation21]
    $region77: #{tpu_custom_call.1} parent=1 // pred_fallthru
      _
    // Predicated region
    $region78: #{tpu_custom_call.1} parent=1 // pred_check
      _
    $region79: #{tpu_custom_call.1} parent=1 // pred_check_branch
      %3845 = sbr.rel (0) target = $region81
    $region80: #{tpu_custom_call.1} parent=1 // pred_region
      %3846 = dma.done [#allocation12], 128
    $region81: #{tpu_custom_call.1} parent=1 // pred_fallthru
      _
    // Predicated region
    $region82: #{tpu_custom_call.1} parent=1 // pred_check
      _
    $region83: #{tpu_custom_call.1} parent=1 // pred_check_branch
      %3848 = sbr.rel (0) target = $region85
    $region84: #{tpu_custom_call.1} parent=1 // pred_region
      %3849 = dma.done [#allocation21], 128
    $region85: #{tpu_custom_call.1} parent=1 // pred_fallthru
      _
    %3850 = vsyncpa [#allocation11], 1
    %3851 = vsyncpa [#allocation14], 1
    %3852 = vsyncpa [#allocation17], 1
    %3853 = vsyncpa [#allocation12], 1
    %3854 = vsyncpa [#allocation21], 1

</llo_original>
